<compile_context>
chip_gen: v5e
topology: v5e:2x2
jax: 0.10.0
libtpu: 0.0.40
codegen_flags: <defaults>
</compile_context>

<pallas_src>
import functools
import math

import jax
import jax.numpy as jnp
from jax.experimental import pallas as pl
from jax.experimental.pallas import tpu as pltpu


def _round_up(x, m):
    return (x + m - 1) // m * m


def _vmem_limit_bytes():
    # Budget ~3/4 of physical VMEM per generation (64 MiB on v7x, 128 MiB on
    # v5e/v6e) instead of a hard-coded constant.
    try:
        cap = getattr(pltpu.get_tpu_info(), "vmem_capacity_bytes", None)
        if cap:
            return int(cap) * 3 // 4
    except Exception:
        pass
    return 48 * 1024 * 1024


_VMEM_LIMIT = _vmem_limit_bytes()


# --------------------------- generic matmul + bias -------------------------

def _matmul_bias_kernel(x_ref, w_ref, b_ref, o_ref, *, relu):
    acc = jnp.dot(x_ref[...], w_ref[...], preferred_element_type=jnp.float32)
    acc = acc + b_ref[...]
    if relu:
        acc = jnp.maximum(acc, 0.0)
    o_ref[...] = acc.astype(o_ref.dtype)


def matmul_bias(x, w, b, relu=False, out_dtype=jnp.bfloat16, tm_max=512):
    """(M,K)@(K,N)+b (optional ReLU), bf16 operands / f32 accumulation.

    M-tiled (tm up to 512) with a parallel grid so large im2col matrices
    pipeline through VMEM instead of being loaded in one shot."""
    M, K = x.shape
    N = w.shape[1]
    Mp = _round_up(M, 8)
    tm = Mp if Mp <= tm_max else tm_max
    Mp = _round_up(Mp, tm)
    xb = x.astype(jnp.bfloat16)
    if Mp != M:
        xb = jnp.pad(xb, ((0, Mp - M), (0, 0)))
    out = pl.pallas_call(
        functools.partial(_matmul_bias_kernel, relu=relu),
        out_shape=jax.ShapeDtypeStruct((Mp, N), out_dtype),
        grid=(Mp // tm,),
        in_specs=[pl.BlockSpec((tm, K), lambda i: (i, 0)),
                  pl.BlockSpec((K, N), lambda i: (0, 0)),
                  pl.BlockSpec((1, N), lambda i: (0, 0))],
        out_specs=pl.BlockSpec((tm, N), lambda i: (i, 0)),
        compiler_params=pltpu.CompilerParams(
            dimension_semantics=("parallel",),
            vmem_limit_bytes=_VMEM_LIMIT),
    )(xb, w.astype(jnp.bfloat16), b.reshape(1, N).astype(jnp.float32))
    return out[:M] if Mp != M else out


# ----------------------- fused GAP + FC (+ReLU) kernel ----------------------

def _gap_fc_kernel(x_ref, w_ref, b_ref, o_ref):
    pooled = jnp.mean(x_ref[...].astype(jnp.float32), axis=1)          # (bt, C)
    acc = jnp.dot(pooled.astype(jnp.bfloat16), w_ref[...],
                  preferred_element_type=jnp.float32) + b_ref[...]
    o_ref[...] = jnp.maximum(acc, 0.0).astype(o_ref.dtype)


def gap_fc(x_bsc, w, b):
    """x: (B, S, C) -> ReLU(mean_S(x) @ w + b), fused into one kernel.

    (B,S,C) layout: the spatial mean reduces over sublanes and C stays
    lane-dense into the FC matmul."""
    B, S, C = x_bsc.shape
    E = w.shape[1]
    bt = 8 if B % 8 == 0 else B     # out block's 2nd-minor dim: 8-aligned or full
    return pl.pallas_call(
        _gap_fc_kernel,
        out_shape=jax.ShapeDtypeStruct((B, E), jnp.bfloat16),
        grid=(B // bt,),
        in_specs=[pl.BlockSpec((bt, S, C), lambda i: (i, 0, 0)),
                  pl.BlockSpec((C, E), lambda i: (0, 0)),
                  pl.BlockSpec((1, E), lambda i: (0, 0))],
        out_specs=pl.BlockSpec((bt, E), lambda i: (i, 0)),
        compiler_params=pltpu.CompilerParams(
            dimension_semantics=("parallel",),
            vmem_limit_bytes=_VMEM_LIMIT),
    )(x_bsc.astype(jnp.bfloat16), w.astype(jnp.bfloat16),
      b.reshape(1, E).astype(jnp.float32))


# ------------- fully fused temporal decoder stack (one pallas_call) ---------

def _decoder_stack_kernel(xf_ref, t_ref, tfw_ref, tfb_ref,
                          wq_ref, bq_ref, wk_ref, bk_ref, wv_ref, bv_ref,
                          wo_ref, bo_ref, ln1g_ref, ln1b_ref,
                          w1_ref, b1_ref, w2_ref, b2_ref,
                          ln2g_ref, ln2b_ref, hw_ref, hb_ref,
                          y_ref, carry, *, nhead, eps):
    l = pl.program_id(1)
    Bt, T, D = carry.shape
    M = Bt * T
    E = xf_ref.shape[-1]
    dh = D // nhead
    bf16, f32 = jnp.bfloat16, jnp.float32

    # --- layer 0: build decoder input in VMEM (fused temporal_fc + expand +
    #     concat); single full-block store, no partial-lane writes.
    @pl.when(l == 0)
    def _():
        xf = jnp.broadcast_to(xf_ref[...].astype(f32), (Bt, T, E))
        tt = jnp.broadcast_to(t_ref[...].astype(f32), (Bt, T, E))
        tw = jnp.broadcast_to(tfw_ref[...].astype(f32).reshape(1, 1, E), (Bt, T, E))
        tb = jnp.broadcast_to(tfb_ref[...].astype(f32).reshape(1, 1, E), (Bt, T, E))
        tf = jnp.maximum(tt * tw + tb, 0.0)                 # Linear(1,E)+ReLU
        carry[...] = jnp.concatenate([xf, tf], axis=-1)     # (Bt, T, 2E) f32

    x = carry[...].reshape(M, D)          # f32 residual stream, batch-flattened
    xb = x.astype(bf16)

    # batch-flattened Q/K/V projections (M = Bt*T rows per MXU pass); each
    # uses its own lane-aligned weight slab; 1/sqrt(dh) is folded into wq/bq.
    q = jnp.dot(xb, wq_ref[0], preferred_element_type=f32) + bq_ref[0]
    k = jnp.dot(xb, wk_ref[0], preferred_element_type=f32) + bk_ref[0]
    v = jnp.dot(xb, wv_ref[0], preferred_element_type=f32) + bv_ref[0]

    q3 = q.reshape(Bt, T, D).astype(bf16)
    k3 = k.reshape(Bt, T, D).astype(bf16)
    v3 = v.reshape(Bt, T, D).astype(bf16)

    # Per-head scores / PV, batched over the batch tile with 3-D dot_generals
    # (leading batch dim); head outputs are concatenated and a SINGLE
    # (M,D)@(D,D) output projection is applied.
    # TODO(synk): no causal/target mask, cross-attention or dropout — the
    # reference TransformerDecoder internals are not in the provided source.
    heads = []
    for h in range(nhead):
        sl = slice(h * dh, (h + 1) * dh)
        s = jax.lax.dot_general(q3[..., sl], k3[..., sl],
                                (((2,), (2,)), ((0,), (0,))),
                                preferred_element_type=f32)          # (Bt,T,T)
        s = s - jnp.max(s, axis=-1, keepdims=True)
        p = jnp.exp(s)
        p = p * pl.reciprocal(jnp.sum(p, axis=-1, keepdims=True), approx=True)
        heads.append(jax.lax.dot_general(p.astype(bf16), v3[..., sl],
                                         (((2,), (1,)), ((0,), (0,))),
                                         preferred_element_type=f32))  # (Bt,T,dh)
    attn = jnp.concatenate(heads, axis=-1).reshape(M, D)
    attn = jnp.dot(attn.astype(bf16), wo_ref[0],
                   preferred_element_type=f32) + bo_ref[0]

    # residual + LayerNorm 1 (post-LN)
    h1 = x + attn
    mu1 = jnp.mean(h1, axis=-1, keepdims=True)
    v1 = jnp.mean((h1 - mu1) ** 2, axis=-1, keepdims=True)
    x1 = (h1 - mu1) * jax.lax.rsqrt(v1 + eps) * ln1g_ref[0] + ln1b_ref[0]

    # FFN (Linear -> ReLU -> Linear) + residual + LayerNorm 2
    f = jnp.dot(x1.astype(bf16), w1_ref[0], preferred_element_type=f32) + b1_ref[0]
    f = jnp.maximum(f, 0.0)
    f = jnp.dot(f.astype(bf16), w2_ref[0], preferred_element_type=f32) + b2_ref[0]
    h2 = x1 + f
    mu2 = jnp.mean(h2, axis=-1, keepdims=True)
    v2 = jnp.mean((h2 - mu2) ** 2, axis=-1, keepdims=True)
    x2 = (h2 - mu2) * jax.lax.rsqrt(v2 + eps) * ln2g_ref[0] + ln2b_ref[0]

    carry[...] = x2.reshape(Bt, T, D)      # feed next layer (stays in VMEM)

    # last layer: fused Linear(D, 1) regression head; only the tiny (Bt,T,1)
    # result is ever written to HBM.
    @pl.when(l == pl.num_programs(1) - 1)
    def _():
        y = jnp.dot(x2.astype(bf16), hw_ref[...],
                    preferred_element_type=f32) + hb_ref[...]
        y_ref[...] = y.reshape(Bt, T, 1)


def decoder_stack(x_feat, t_seq, dec, *, nhead, eps=1e-5):
    """temporal_fc + expand/concat + all decoder layers + head, one call."""
    B, T, _ = t_seq.shape
    E = x_feat.shape[-1]
    D = 2 * E
    L = dec['wq'].shape[0]
    F = dec['w1'].shape[-1]
    dh = D // nhead
    scale = 1.0 / math.sqrt(dh)
    bf, f32 = jnp.bfloat16, jnp.float32

    # Batch tile: flatten M = bt*T rows per MXU pass (target ~256 rows).  At
    # real batch sizes this still yields >=2 parallel grid steps for the two
    # v7x TensorCores; at the demo size the whole batch is one tile.
    bt = max(1, min(B, -(-256 // T)))
    Bp = _round_up(B, bt)
    nb = Bp // bt

    xf = x_feat.reshape(B, 1, E).astype(bf)
    ts = t_seq.astype(f32)
    if Bp != B:
        xf = jnp.pad(xf, ((0, Bp - B), (0, 0), (0, 0)))
        ts = jnp.pad(ts, ((0, Bp - B), (0, 0), (0, 0)))

    per_layer = lambda blk: pl.BlockSpec(blk, lambda b, l: (l, 0, 0))
    const3 = lambda blk: pl.BlockSpec(blk, lambda b, l: (0, 0, 0))
    const2 = lambda blk: pl.BlockSpec(blk, lambda b, l: (0, 0))

    in_specs = [
        pl.BlockSpec((bt, 1, E), lambda b, l: (b, 0, 0)),   # x_feat
        pl.BlockSpec((bt, T, 1), lambda b, l: (b, 0, 0)),   # t_seq
        const2((1, E)), const2((1, E)),                     # tfc_w, tfc_b
        per_layer((1, D, D)), per_layer((1, 1, D)),         # wq, bq
        per_layer((1, D, D)), per_layer((1, 1, D)),         # wk, bk
        per_layer((1, D, D)), per_layer((1, 1, D)),         # wv, bv
        per_layer((1, D, D)), per_layer((1, 1, D)),         # wo, bo
        per_layer((1, 1, D)), per_layer((1, 1, D)),         # ln1 g/b
        per_layer((1, D, F)), per_layer((1, 1, F)),         # w1, b1
        per_layer((1, F, D)), per_layer((1, 1, D)),         # w2, b2
        per_layer((1, 1, D)), per_layer((1, 1, D)),         # ln2 g/b
        const2((D, 1)), const2((1, 1)),                     # head_w, head_b
    ]
    del const3  # (unused helper)

    y = pl.pallas_call(
        functools.partial(_decoder_stack_kernel, nhead=nhead, eps=eps),
        out_shape=jax.ShapeDtypeStruct((Bp, T, 1), f32),
        grid=(nb, L),
        in_specs=in_specs,
        out_specs=pl.BlockSpec((bt, T, 1), lambda b, l: (b, 0, 0)),
        scratch_shapes=[pltpu.VMEM((bt, T, D), f32)],       # layer-to-layer carry
        compiler_params=pltpu.CompilerParams(
            dimension_semantics=("parallel", "arbitrary"),
            vmem_limit_bytes=_VMEM_LIMIT),
    )(xf, ts,
      dec['tfc_w'].reshape(1, E).astype(f32), dec['tfc_b'].reshape(1, E).astype(f32),
      (dec['wq'] * scale).astype(bf), (dec['bq'] * scale).astype(f32),
      dec['wk'].astype(bf), dec['bk'].astype(f32),
      dec['wv'].astype(bf), dec['bv'].astype(f32),
      dec['wo'].astype(bf), dec['bo'].astype(f32),
      dec['ln1g'].astype(f32), dec['ln1b'].astype(f32),
      dec['w1'].astype(bf), dec['b1'].astype(f32),
      dec['w2'].astype(bf), dec['b2'].astype(f32),
      dec['ln2g'].astype(f32), dec['ln2b'].astype(f32),
      dec['head_w'].astype(bf), dec['head_b'].reshape(1, 1).astype(f32))
    return y[:B] if Bp != B else y


# ------------------------------- JAX glue -----------------------------------

def im2col_nhwc(x, kh, kw, stride, pad):
    """x: (B, H, W, C) -> (B*Ho*Wo, kh*kw*C) bf16 patch matrix (kpos-major)."""
    B, H, W, C = x.shape
    xp = jnp.pad(x, ((0, 0), (pad, pad), (pad, pad), (0, 0)))
    Ho = (H + 2 * pad - kh) // stride + 1
    Wo = (W + 2 * pad - kw) // stride + 1
    cols = []
    for i in range(kh):
        for j in range(kw):
            cols.append(xp[:, i:i + stride * Ho:stride, j:j + stride * Wo:stride, :])
    cols = jnp.concatenate(cols, axis=-1)                     # (B, Ho, Wo, kh*kw*C)
    return cols.reshape(B * Ho * Wo, kh * kw * C), Ho, Wo


def forward(params, x0, t_seq, *, nhead):
    B = x0.shape[0]

    # --- GenericCNNEncoder (assumed): conv3x3/s2+ReLU, conv3x3/s2+ReLU, GAP, FC+ReLU
    # TODO(synk): JAX-side im2col causes a 9x HBM blow-up of the patch matrix;
    # folding patch extraction into the Pallas matmul (Element-window
    # index_map) would remove it — matters most on v5e's HBM bandwidth.
    x_nhwc = jnp.transpose(x0, (0, 2, 3, 1)).astype(jnp.bfloat16)
    cols1, Ho1, Wo1 = im2col_nhwc(x_nhwc, 3, 3, 2, 1)
    C1 = params['conv1_w'].shape[1]
    h1 = matmul_bias(cols1, params['conv1_w'], params['conv1_b'], relu=True)
    h1 = h1.reshape(B, Ho1, Wo1, C1)
    cols2, Ho2, Wo2 = im2col_nhwc(h1, 3, 3, 2, 1)
    C2 = params['conv2_w'].shape[1]
    h2 = matmul_bias(cols2, params['conv2_w'], params['conv2_b'], relu=True)
    h2 = h2.reshape(B, Ho2 * Wo2, C2)                         # (B, S, C)
    x_feat = gap_fc(h2, params['enc_fc_w'], params['enc_fc_b'])   # (B, E)

    # --- temporal_fc + expand + concat + TransformerDecoder stack + Linear(D,1),
    #     all in one fused pallas_call.
    return decoder_stack(x_feat, t_seq, params['dec'], nhead=nhead)   # (B, T, 1)


def init_params(key, C_in, E, D, num_layers):
    keys = jax.random.split(key, 32)
    it = iter(keys)

    def nrm(shape, scale=0.02):
        return jax.random.normal(next(it), shape, jnp.float32) * scale

    F = 4 * D
    L = num_layers
    dec = {
        'tfc_w': nrm((1, E)), 'tfc_b': nrm((E,)),
        'wq': nrm((L, D, D)), 'bq': nrm((L, 1, D)),
        'wk': nrm((L, D, D)), 'bk': nrm((L, 1, D)),
        'wv': nrm((L, D, D)), 'bv': nrm((L, 1, D)),
        'wo': nrm((L, D, D)), 'bo': nrm((L, 1, D)),
        'ln1g': jnp.ones((L, 1, D), jnp.float32),
        'ln1b': jnp.zeros((L, 1, D), jnp.float32),
        'w1': nrm((L, D, F)), 'b1': nrm((L, 1, F)),
        'w2': nrm((L, F, D)), 'b2': nrm((L, 1, D)),
        'ln2g': jnp.ones((L, 1, D), jnp.float32),
        'ln2b': jnp.zeros((L, 1, D), jnp.float32),
        'head_w': nrm((D, 1)), 'head_b': nrm((1,)),
    }
    return {
        'conv1_w': nrm((C_in * 9, 16)), 'conv1_b': nrm((16,)),
        'conv2_w': nrm((16 * 9, 32)),   'conv2_b': nrm((32,)),
        'enc_fc_w': nrm((32, E)),       'enc_fc_b': nrm((E,)),
        'dec': dec,
    }


if __name__ == "__main__":
    # Small, self-consistent shapes: embedding_dim=32 -> decoder model dim 64.
    B, C_in, H, W = 2, 3, 16, 16
    T = 8
    E = 32
    nhead = 4
    num_layers = 2
    D = 2 * E

    key = jax.random.PRNGKey(0)
    kx, kt, kp = jax.random.split(key, 3)
    x0 = jax.random.normal(kx, (B, C_in, H, W), jnp.float32)
    t_seq = jax.random.normal(kt, (B, T, 1), jnp.float32)
    params = init_params(kp, C_in, E, D, num_layers)

    fwd = jax.jit(functools.partial(forward, nhead=nhead))
    y_seq = fwd(params, x0, t_seq)
    jax.block_until_ready(y_seq)
    assert y_seq.shape == (B, T, 1)
    assert bool(jnp.all(jnp.isfinite(y_seq)))
    print("KERNEL_OK")
</pallas_src>

<mosaic_0001>
module attributes {stable_mosaic.version = 11 : i64} {
  func.func @_matmul_bias_kernel(%arg0: i32, %arg1: memref<128x27xbf16, #tpu.memory_space<vmem>>, %arg2: memref<27x16xbf16, #tpu.memory_space<vmem>>, %arg3: memref<1x16xf32, #tpu.memory_space<vmem>>, %arg4: memref<128x16xbf16, #tpu.memory_space<vmem>>) attributes {dimension_semantics = [#tpu.dimension_semantics<parallel>], iteration_bounds = array<i64: 1>, scalar_prefetch = 0 : i64, scratch_operands = 0 : i64, tpu.core_type = #tpu.core_type<tc>, window_params = [{transform_indices = @transform_0, window_bounds = array<i64: 128, 27>}, {pipeline_mode = #tpu.pipeline_mode<synchronous>, transform_indices = @transform_1, window_bounds = array<i64: 27, 16>}, {pipeline_mode = #tpu.pipeline_mode<synchronous>, transform_indices = @transform_2, window_bounds = array<i64: 1, 16>}, {transform_indices = @transform_3, window_bounds = array<i64: 128, 16>}]} {
    %c0 = arith.constant 0 : index
    %c0_0 = arith.constant 0 : index
    %0 = vector.load %arg1[%c0, %c0_0] : memref<128x27xbf16, #tpu.memory_space<vmem>>, vector<128x27xbf16>
    %c0_1 = arith.constant 0 : index
    %c0_2 = arith.constant 0 : index
    %1 = vector.load %arg2[%c0_1, %c0_2] : memref<27x16xbf16, #tpu.memory_space<vmem>>, vector<27x16xbf16>
    %cst = arith.constant dense<0.000000e+00> : vector<128x16xf32>
    %2 = tpu.matmul %0, %1, %cst {dimension_numbers = #tpu.dot_dimension_numbers<[1], [0], [0], [1], [0, 0, 1, 1], [], []>} : vector<128x27xbf16>, vector<27x16xbf16>, vector<128x16xf32> -> vector<128x16xf32>
    %c0_3 = arith.constant 0 : index
    %c0_4 = arith.constant 0 : index
    %3 = vector.load %arg3[%c0_3, %c0_4] : memref<1x16xf32, #tpu.memory_space<vmem>>, vector<1x16xf32>
    %4 = vector.broadcast %3 : vector<1x16xf32> to vector<128x16xf32>
    %5 = arith.addf %2, %4 : vector<128x16xf32>
    %cst_5 = arith.constant 0.000000e+00 : f32
    %6 = vector.broadcast %cst_5 : f32 to vector<128x16xf32>
    %7 = arith.maximumf %5, %6 : vector<128x16xf32>
    %8 = arith.truncf %7 : vector<128x16xf32> to vector<128x16xbf16>
    %c0_6 = arith.constant 0 : index
    %c0_7 = arith.constant 0 : index
    %9 = vector.load %arg4[%c0_6, %c0_7] : memref<128x16xbf16, #tpu.memory_space<vmem>>, vector<128x16xbf16>
    tpu.vector_store %arg4[%c0_6, %c0_7], %8 {strides = array<i32>} : memref<128x16xbf16, #tpu.memory_space<vmem>>, vector<128x16xbf16>,
    return
  }
  func.func @transform_0(%arg0: i32) -> (i32, i32) {
    %c0_i32 = arith.constant 0 : i32
    %c0_i32_0 = arith.constant 0 : i32
    return %arg0, %c0_i32 : i32, i32
  }
  func.func @transform_1(%arg0: i32) -> (i32, i32) {
    %c0_i32 = arith.constant 0 : i32
    %c0_i32_0 = arith.constant 0 : i32
    %c0_i32_1 = arith.constant 0 : i32
    return %c0_i32, %c0_i32_0 : i32, i32
  }
  func.func @transform_2(%arg0: i32) -> (i32, i32) {
    %c0_i32 = arith.constant 0 : i32
    %c0_i32_0 = arith.constant 0 : i32
    %c0_i32_1 = arith.constant 0 : i32
    return %c0_i32, %c0_i32_0 : i32, i32
  }
  func.func @transform_3(%arg0: i32) -> (i32, i32) {
    %c0_i32 = arith.constant 0 : i32
    %c0_i32_0 = arith.constant 0 : i32
    return %arg0, %c0_i32 : i32, i32
  }
}

module attributes {stable_mosaic.version = 11 : i64} {
  func.func @_matmul_bias_kernel(%arg0: i32, %arg1: memref<32x144xbf16, #tpu.memory_space<vmem>>, %arg2: memref<144x32xbf16, #tpu.memory_space<vmem>>, %arg3: memref<1x32xf32, #tpu.memory_space<vmem>>, %arg4: memref<32x32xbf16, #tpu.memory_space<vmem>>) attributes {dimension_semantics = [#tpu.dimension_semantics<parallel>], iteration_bounds = array<i64: 1>, scalar_prefetch = 0 : i64, scratch_operands = 0 : i64, tpu.core_type = #tpu.core_type<tc>, window_params = [{transform_indices = @transform_0, window_bounds = array<i64: 32, 144>}, {pipeline_mode = #tpu.pipeline_mode<synchronous>, transform_indices = @transform_1, window_bounds = array<i64: 144, 32>}, {pipeline_mode = #tpu.pipeline_mode<synchronous>, transform_indices = @transform_2, window_bounds = array<i64: 1, 32>}, {transform_indices = @transform_3, window_bounds = array<i64: 32, 32>}]} {
    %c0 = arith.constant 0 : index
    %c0_0 = arith.constant 0 : index
    %0 = vector.load %arg1[%c0, %c0_0] : memref<32x144xbf16, #tpu.memory_space<vmem>>, vector<32x144xbf16>
    %c0_1 = arith.constant 0 : index
    %c0_2 = arith.constant 0 : index
    %1 = vector.load %arg2[%c0_1, %c0_2] : memref<144x32xbf16, #tpu.memory_space<vmem>>, vector<144x32xbf16>
    %cst = arith.constant dense<0.000000e+00> : vector<32x32xf32>
    %2 = tpu.matmul %0, %1, %cst {dimension_numbers = #tpu.dot_dimension_numbers<[1], [0], [0], [1], [0, 0, 1, 1], [], []>} : vector<32x144xbf16>, vector<144x32xbf16>, vector<32x32xf32> -> vector<32x32xf32>
    %c0_3 = arith.constant 0 : index
    %c0_4 = arith.constant 0 : index
    %3 = vector.load %arg3[%c0_3, %c0_4] : memref<1x32xf32, #tpu.memory_space<vmem>>, vector<1x32xf32>
    %4 = vector.broadcast %3 : vector<1x32xf32> to vector<32x32xf32>
    %5 = arith.addf %2, %4 : vector<32x32xf32>
    %cst_5 = arith.constant 0.000000e+00 : f32
    %6 = vector.broadcast %cst_5 : f32 to vector<32x32xf32>
    %7 = arith.maximumf %5, %6 : vector<32x32xf32>
    %8 = arith.truncf %7 : vector<32x32xf32> to vector<32x32xbf16>
    %c0_6 = arith.constant 0 : index
    %c0_7 = arith.constant 0 : index
    %9 = vector.load %arg4[%c0_6, %c0_7] : memref<32x32xbf16, #tpu.memory_space<vmem>>, vector<32x32xbf16>
    tpu.vector_store %arg4[%c0_6, %c0_7], %8 {strides = array<i32>} : memref<32x32xbf16, #tpu.memory_space<vmem>>, vector<32x32xbf16>,
    return
  }
  func.func @transform_0(%arg0: i32) -> (i32, i32) {
    %c0_i32 = arith.constant 0 : i32
    %c0_i32_0 = arith.constant 0 : i32
    return %arg0, %c0_i32 : i32, i32
  }
  func.func @transform_1(%arg0: i32) -> (i32, i32) {
    %c0_i32 = arith.constant 0 : i32
    %c0_i32_0 = arith.constant 0 : i32
    %c0_i32_1 = arith.constant 0 : i32
    return %c0_i32, %c0_i32_0 : i32, i32
  }
  func.func @transform_2(%arg0: i32) -> (i32, i32) {
    %c0_i32 = arith.constant 0 : i32
    %c0_i32_0 = arith.constant 0 : i32
    %c0_i32_1 = arith.constant 0 : i32
    return %c0_i32, %c0_i32_0 : i32, i32
  }
  func.func @transform_3(%arg0: i32) -> (i32, i32) {
    %c0_i32 = arith.constant 0 : i32
    %c0_i32_0 = arith.constant 0 : i32
    return %arg0, %c0_i32 : i32, i32
  }
}

module attributes {stable_mosaic.version = 11 : i64} {
  func.func @_gap_fc_kernel(%arg0: i32, %arg1: memref<2x16x32xbf16, #tpu.memory_space<vmem>>, %arg2: memref<32x32xbf16, #tpu.memory_space<vmem>>, %arg3: memref<1x32xf32, #tpu.memory_space<vmem>>, %arg4: memref<2x32xbf16, #tpu.memory_space<vmem>>) attributes {dimension_semantics = [#tpu.dimension_semantics<parallel>], iteration_bounds = array<i64: 1>, scalar_prefetch = 0 : i64, scratch_operands = 0 : i64, tpu.core_type = #tpu.core_type<tc>, window_params = [{transform_indices = @transform_0, window_bounds = array<i64: 2, 16, 32>}, {pipeline_mode = #tpu.pipeline_mode<synchronous>, transform_indices = @transform_1, window_bounds = array<i64: 32, 32>}, {pipeline_mode = #tpu.pipeline_mode<synchronous>, transform_indices = @transform_2, window_bounds = array<i64: 1, 32>}, {transform_indices = @transform_3, window_bounds = array<i64: 2, 32>}]} {
    %c0 = arith.constant 0 : index
    %c0_0 = arith.constant 0 : index
    %c0_1 = arith.constant 0 : index
    %0 = vector.load %arg1[%c0, %c0_0, %c0_1] : memref<2x16x32xbf16, #tpu.memory_space<vmem>>, vector<2x16x32xbf16>
    %1 = arith.extf %0 : vector<2x16x32xbf16> to vector<2x16x32xf32>
    %cst = arith.constant dense<0.000000e+00> : vector<2x32xf32>
    %2 = vector.multi_reduction <add>, %1, %cst [1] : vector<2x16x32xf32> to vector<2x32xf32>
    %cst_2 = arith.constant 1.600000e+01 : f32
    %3 = vector.broadcast %cst_2 : f32 to vector<2x32xf32>
    %4 = arith.divf %2, %3 : vector<2x32xf32>
    %5 = arith.truncf %4 : vector<2x32xf32> to vector<2x32xbf16>
    %c0_3 = arith.constant 0 : index
    %c0_4 = arith.constant 0 : index
    %6 = vector.load %arg2[%c0_3, %c0_4] : memref<32x32xbf16, #tpu.memory_space<vmem>>, vector<32x32xbf16>
    %cst_5 = arith.constant dense<0.000000e+00> : vector<2x32xf32>
    %7 = tpu.matmul %5, %6, %cst_5 {dimension_numbers = #tpu.dot_dimension_numbers<[1], [0], [0], [1], [0, 0, 1, 1], [], []>} : vector<2x32xbf16>, vector<32x32xbf16>, vector<2x32xf32> -> vector<2x32xf32>
    %c0_6 = arith.constant 0 : index
    %c0_7 = arith.constant 0 : index
    %8 = vector.load %arg3[%c0_6, %c0_7] : memref<1x32xf32, #tpu.memory_space<vmem>>, vector<1x32xf32>
    %9 = vector.broadcast %8 : vector<1x32xf32> to vector<2x32xf32>
    %10 = arith.addf %7, %9 : vector<2x32xf32>
    %cst_8 = arith.constant 0.000000e+00 : f32
    %11 = vector.broadcast %cst_8 : f32 to vector<2x32xf32>
    %12 = arith.maximumf %10, %11 : vector<2x32xf32>
    %13 = arith.truncf %12 : vector<2x32xf32> to vector<2x32xbf16>
    %c0_9 = arith.constant 0 : index
    %c0_10 = arith.constant 0 : index
    %14 = vector.load %arg4[%c0_9, %c0_10] : memref<2x32xbf16, #tpu.memory_space<vmem>>, vector<2x32xbf16>
    tpu.vector_store %arg4[%c0_9, %c0_10], %13 {strides = array<i32>} : memref<2x32xbf16, #tpu.memory_space<vmem>>, vector<2x32xbf16>,
    return
  }
  func.func @transform_0(%arg0: i32) -> (i32, i32, i32) {
    %c0_i32 = arith.constant 0 : i32
    %c0_i32_0 = arith.constant 0 : i32
    %c0_i32_1 = arith.constant 0 : i32
    return %arg0, %c0_i32, %c0_i32_0 : i32, i32, i32
  }
  func.func @transform_1(%arg0: i32) -> (i32, i32) {
    %c0_i32 = arith.constant 0 : i32
    %c0_i32_0 = arith.constant 0 : i32
    %c0_i32_1 = arith.constant 0 : i32
    return %c0_i32, %c0_i32_0 : i32, i32
  }
  func.func @transform_2(%arg0: i32) -> (i32, i32) {
    %c0_i32 = arith.constant 0 : i32
    %c0_i32_0 = arith.constant 0 : i32
    %c0_i32_1 = arith.constant 0 : i32
    return %c0_i32, %c0_i32_0 : i32, i32
  }
  func.func @transform_3(%arg0: i32) -> (i32, i32) {
    %c0_i32 = arith.constant 0 : i32
    %c0_i32_0 = arith.constant 0 : i32
    return %arg0, %c0_i32 : i32, i32
  }
}

module attributes {stable_mosaic.version = 11 : i64} {
  func.func @_decoder_stack_kernel(%arg0: i32, %arg1: i32, %arg2: memref<2x1x32xbf16, #tpu.memory_space<vmem>>, %arg3: memref<2x8x1xf32, #tpu.memory_space<vmem>>, %arg4: memref<1x32xf32, #tpu.memory_space<vmem>>, %arg5: memref<1x32xf32, #tpu.memory_space<vmem>>, %arg6: memref<1x64x64xbf16, #tpu.memory_space<vmem>>, %arg7: memref<1x1x64xf32, #tpu.memory_space<vmem>>, %arg8: memref<1x64x64xbf16, #tpu.memory_space<vmem>>, %arg9: memref<1x1x64xf32, #tpu.memory_space<vmem>>, %arg10: memref<1x64x64xbf16, #tpu.memory_space<vmem>>, %arg11: memref<1x1x64xf32, #tpu.memory_space<vmem>>, %arg12: memref<1x64x64xbf16, #tpu.memory_space<vmem>>, %arg13: memref<1x1x64xf32, #tpu.memory_space<vmem>>, %arg14: memref<1x1x64xf32, #tpu.memory_space<vmem>>, %arg15: memref<1x1x64xf32, #tpu.memory_space<vmem>>, %arg16: memref<1x64x256xbf16, #tpu.memory_space<vmem>>, %arg17: memref<1x1x256xf32, #tpu.memory_space<vmem>>, %arg18: memref<1x256x64xbf16, #tpu.memory_space<vmem>>, %arg19: memref<1x1x64xf32, #tpu.memory_space<vmem>>, %arg20: memref<1x1x64xf32, #tpu.memory_space<vmem>>, %arg21: memref<1x1x64xf32, #tpu.memory_space<vmem>>, %arg22: memref<64x1xbf16, #tpu.memory_space<vmem>>, %arg23: memref<1x1xf32, #tpu.memory_space<vmem>>, %arg24: memref<2x8x1xf32, #tpu.memory_space<vmem>>, %arg25: memref<2x8x64xf32, #tpu.memory_space<vmem>>) attributes {dimension_semantics = [#tpu.dimension_semantics<parallel>, #tpu.dimension_semantics<arbitrary>], iteration_bounds = array<i64: 1, 2>, scalar_prefetch = 0 : i64, scratch_operands = 1 : i64, tpu.core_type = #tpu.core_type<tc>, window_params = [{transform_indices = @transform_0, window_bounds = array<i64: 2, 1, 32>}, {transform_indices = @transform_1, window_bounds = array<i64: 2, 8, 1>}, {pipeline_mode = #tpu.pipeline_mode<synchronous>, transform_indices = @transform_2, window_bounds = array<i64: 1, 32>}, {pipeline_mode = #tpu.pipeline_mode<synchronous>, transform_indices = @transform_3, window_bounds = array<i64: 1, 32>}, {transform_indices = @transform_4, window_bounds = array<i64: 1, 64, 64>}, {transform_indices = @transform_5, window_bounds = array<i64: 1, 1, 64>}, {transform_indices = @transform_6, window_bounds = array<i64: 1, 64, 64>}, {transform_indices = @transform_7, window_bounds = array<i64: 1, 1, 64>}, {transform_indices = @transform_8, window_bounds = array<i64: 1, 64, 64>}, {transform_indices = @transform_9, window_bounds = array<i64: 1, 1, 64>}, {transform_indices = @transform_10, window_bounds = array<i64: 1, 64, 64>}, {transform_indices = @transform_11, window_bounds = array<i64: 1, 1, 64>}, {transform_indices = @transform_12, window_bounds = array<i64: 1, 1, 64>}, {transform_indices = @transform_13, window_bounds = array<i64: 1, 1, 64>}, {transform_indices = @transform_14, window_bounds = array<i64: 1, 64, 256>}, {transform_indices = @transform_15, window_bounds = array<i64: 1, 1, 256>}, {transform_indices = @transform_16, window_bounds = array<i64: 1, 256, 64>}, {transform_indices = @transform_17, window_bounds = array<i64: 1, 1, 64>}, {transform_indices = @transform_18, window_bounds = array<i64: 1, 1, 64>}, {transform_indices = @transform_19, window_bounds = array<i64: 1, 1, 64>}, {pipeline_mode = #tpu.pipeline_mode<synchronous>, transform_indices = @transform_20, window_bounds = array<i64: 64, 1>}, {pipeline_mode = #tpu.pipeline_mode<synchronous>, transform_indices = @transform_21, window_bounds = array<i64: 1, 1>}, {transform_indices = @transform_22, window_bounds = array<i64: 2, 8, 1>}]} {
    %c0_i32 = arith.constant 0 : i32
    %0 = arith.cmpi eq, %arg1, %c0_i32 : i32
    %1 = arith.extui %0 : i1 to i32
    %c0_i32_0 = arith.constant 0 : i32
    %2 = arith.cmpi ne, %1, %c0_i32_0 : i32
    scf.if %2 {
      %c0_87 = arith.constant 0 : index
      %c0_88 = arith.constant 0 : index
      %c0_89 = arith.constant 0 : index
      %184 = vector.load %arg2[%c0_87, %c0_88, %c0_89] : memref<2x1x32xbf16, #tpu.memory_space<vmem>>, vector<2x1x32xbf16>
      %185 = arith.extf %184 : vector<2x1x32xbf16> to vector<2x1x32xf32>
      %186 = vector.shape_cast %185 : vector<2x1x32xf32> to vector<2x1x32xf32>
      %187 = vector.broadcast %186 : vector<2x1x32xf32> to vector<2x8x32xf32>
      %c0_90 = arith.constant 0 : index
      %c0_91 = arith.constant 0 : index
      %c0_92 = arith.constant 0 : index
      %188 = vector.load %arg3[%c0_90, %c0_91, %c0_92] : memref<2x8x1xf32, #tpu.memory_space<vmem>>, vector<2x8x1xf32>
      %189 = vector.shape_cast %188 : vector<2x8x1xf32> to vector<2x8x1xf32>
      %190 = vector.broadcast %189 : vector<2x8x1xf32> to vector<2x8x32xf32>
      %c0_93 = arith.constant 0 : index
      %c0_94 = arith.constant 0 : index
      %191 = vector.load %arg4[%c0_93, %c0_94] : memref<1x32xf32, #tpu.memory_space<vmem>>, vector<1x32xf32>
      %192 = vector.shape_cast %191 : vector<1x32xf32> to vector<1x1x32xf32>
      %193 = vector.shape_cast %192 : vector<1x1x32xf32> to vector<1x1x32xf32>
      %194 = vector.broadcast %193 : vector<1x1x32xf32> to vector<2x8x32xf32>
      %c0_95 = arith.constant 0 : index
      %c0_96 = arith.constant 0 : index
      %195 = vector.load %arg5[%c0_95, %c0_96] : memref<1x32xf32, #tpu.memory_space<vmem>>, vector<1x32xf32>
      %196 = vector.shape_cast %195 : vector<1x32xf32> to vector<1x1x32xf32>
      %197 = vector.shape_cast %196 : vector<1x1x32xf32> to vector<1x1x32xf32>
      %198 = vector.broadcast %197 : vector<1x1x32xf32> to vector<2x8x32xf32>
      %199 = arith.mulf %190, %194 : vector<2x8x32xf32>
      %200 = arith.addf %199, %198 : vector<2x8x32xf32>
      %cst_97 = arith.constant 0.000000e+00 : f32
      %201 = vector.broadcast %cst_97 : f32 to vector<2x8x32xf32>
      %202 = arith.maximumf %200, %201 : vector<2x8x32xf32>
      %203 = tpu.concatenate %187, %202 in 2 : vector<2x8x32xf32>, vector<2x8x32xf32> -> vector<2x8x64xf32>
      %c0_98 = arith.constant 0 : index
      %c0_99 = arith.constant 0 : index
      %c0_100 = arith.constant 0 : index
      %204 = vector.load %arg25[%c0_98, %c0_99, %c0_100] : memref<2x8x64xf32, #tpu.memory_space<vmem>>, vector<2x8x64xf32>
      tpu.vector_store %arg25[%c0_98, %c0_99, %c0_100], %203 {strides = array<i32>} : memref<2x8x64xf32, #tpu.memory_space<vmem>>, vector<2x8x64xf32>,
    } else {
    }
    %c0 = arith.constant 0 : index
    %c0_1 = arith.constant 0 : index
    %c0_2 = arith.constant 0 : index
    %3 = vector.load %arg25[%c0, %c0_1, %c0_2] : memref<2x8x64xf32, #tpu.memory_space<vmem>>, vector<2x8x64xf32>
    %4 = vector.shape_cast %3 : vector<2x8x64xf32> to vector<16x64xf32>
    %5 = arith.truncf %4 : vector<16x64xf32> to vector<16x64xbf16>
    %c0_3 = arith.constant 0 : index
    %c0_4 = arith.constant 0 : index
    %c0_5 = arith.constant 0 : index
    %6 = vector.load %arg6[%c0_3, %c0_4, %c0_5] : memref<1x64x64xbf16, #tpu.memory_space<vmem>>, vector<1x64x64xbf16>
    %7 = vector.shape_cast %6 : vector<1x64x64xbf16> to vector<64x64xbf16>
    %cst = arith.constant dense<0.000000e+00> : vector<16x64xf32>
    %8 = tpu.matmul %5, %7, %cst {dimension_numbers = #tpu.dot_dimension_numbers<[1], [0], [0], [1], [0, 0, 1, 1], [], []>} : vector<16x64xbf16>, vector<64x64xbf16>, vector<16x64xf32> -> vector<16x64xf32>
    %c0_6 = arith.constant 0 : index
    %c0_7 = arith.constant 0 : index
    %c0_8 = arith.constant 0 : index
    %9 = vector.load %arg7[%c0_6, %c0_7, %c0_8] : memref<1x1x64xf32, #tpu.memory_space<vmem>>, vector<1x1x64xf32>
    %10 = vector.shape_cast %9 : vector<1x1x64xf32> to vector<1x64xf32>
    %11 = vector.broadcast %10 : vector<1x64xf32> to vector<16x64xf32>
    %12 = arith.addf %8, %11 : vector<16x64xf32>
    %c0_9 = arith.constant 0 : index
    %c0_10 = arith.constant 0 : index
    %c0_11 = arith.constant 0 : index
    %13 = vector.load %arg8[%c0_9, %c0_10, %c0_11] : memref<1x64x64xbf16, #tpu.memory_space<vmem>>, vector<1x64x64xbf16>
    %14 = vector.shape_cast %13 : vector<1x64x64xbf16> to vector<64x64xbf16>
    %cst_12 = arith.constant dense<0.000000e+00> : vector<16x64xf32>
    %15 = tpu.matmul %5, %14, %cst_12 {dimension_numbers = #tpu.dot_dimension_numbers<[1], [0], [0], [1], [0, 0, 1, 1], [], []>} : vector<16x64xbf16>, vector<64x64xbf16>, vector<16x64xf32> -> vector<16x64xf32>
    %c0_13 = arith.constant 0 : index
    %c0_14 = arith.constant 0 : index
    %c0_15 = arith.constant 0 : index
    %16 = vector.load %arg9[%c0_13, %c0_14, %c0_15] : memref<1x1x64xf32, #tpu.memory_space<vmem>>, vector<1x1x64xf32>
    %17 = vector.shape_cast %16 : vector<1x1x64xf32> to vector<1x64xf32>
    %18 = vector.broadcast %17 : vector<1x64xf32> to vector<16x64xf32>
    %19 = arith.addf %15, %18 : vector<16x64xf32>
    %c0_16 = arith.constant 0 : index
    %c0_17 = arith.constant 0 : index
    %c0_18 = arith.constant 0 : index
    %20 = vector.load %arg10[%c0_16, %c0_17, %c0_18] : memref<1x64x64xbf16, #tpu.memory_space<vmem>>, vector<1x64x64xbf16>
    %21 = vector.shape_cast %20 : vector<1x64x64xbf16> to vector<64x64xbf16>
    %cst_19 = arith.constant dense<0.000000e+00> : vector<16x64xf32>
    %22 = tpu.matmul %5, %21, %cst_19 {dimension_numbers = #tpu.dot_dimension_numbers<[1], [0], [0], [1], [0, 0, 1, 1], [], []>} : vector<16x64xbf16>, vector<64x64xbf16>, vector<16x64xf32> -> vector<16x64xf32>
    %c0_20 = arith.constant 0 : index
    %c0_21 = arith.constant 0 : index
    %c0_22 = arith.constant 0 : index
    %23 = vector.load %arg11[%c0_20, %c0_21, %c0_22] : memref<1x1x64xf32, #tpu.memory_space<vmem>>, vector<1x1x64xf32>
    %24 = vector.shape_cast %23 : vector<1x1x64xf32> to vector<1x64xf32>
    %25 = vector.broadcast %24 : vector<1x64xf32> to vector<16x64xf32>
    %26 = arith.addf %22, %25 : vector<16x64xf32>
    %27 = vector.shape_cast %12 : vector<16x64xf32> to vector<2x8x64xf32>
    %28 = arith.truncf %27 : vector<2x8x64xf32> to vector<2x8x64xbf16>
    %29 = vector.shape_cast %19 : vector<16x64xf32> to vector<2x8x64xf32>
    %30 = arith.truncf %29 : vector<2x8x64xf32> to vector<2x8x64xbf16>
    %31 = vector.shape_cast %26 : vector<16x64xf32> to vector<2x8x64xf32>
    %32 = arith.truncf %31 : vector<2x8x64xf32> to vector<2x8x64xbf16>
    %33 = vector.extract_strided_slice %28 {offsets = [0, 0, 0], sizes = [2, 8, 16], strides = [1, 1, 1]} : vector<2x8x64xbf16> to vector<2x8x16xbf16>
    %34 = vector.extract_strided_slice %30 {offsets = [0, 0, 0], sizes = [2, 8, 16], strides = [1, 1, 1]} : vector<2x8x64xbf16> to vector<2x8x16xbf16>
    %cst_23 = arith.constant dense<0.000000e+00> : vector<2x8x8xf32>
    %35 = tpu.matmul %33, %34, %cst_23 {dimension_numbers = #tpu.dot_dimension_numbers<[2], [2], [1], [1], [0, 0, 0, 1, 1, 1], [0], [0]>} : vector<2x8x16xbf16>, vector<2x8x16xbf16>, vector<2x8x8xf32> -> vector<2x8x8xf32>
    %cst_24 = arith.constant dense<0xFF800000> : vector<2x8xf32>
    %36 = vector.multi_reduction <maximumf>, %35, %cst_24 [2] : vector<2x8x8xf32> to vector<2x8xf32>
    %37 = vector.shape_cast %36 : vector<2x8xf32> to vector<2x8x1xf32>
    %38 = vector.broadcast %37 : vector<2x8x1xf32> to vector<2x8x8xf32>
    %39 = arith.subf %35, %38 : vector<2x8x8xf32>
    %40 = math.exp %39 : vector<2x8x8xf32>
    %cst_25 = arith.constant dense<0.000000e+00> : vector<2x8xf32>
    %41 = vector.multi_reduction <add>, %40, %cst_25 [2] : vector<2x8x8xf32> to vector<2x8xf32>
    %42 = vector.shape_cast %41 : vector<2x8xf32> to vector<2x8x1xf32>
    %43 = tpu.reciprocal %42 {approx = true} : vector<2x8x1xf32> -> vector<2x8x1xf32>
    %44 = vector.broadcast %43 : vector<2x8x1xf32> to vector<2x8x8xf32>
    %45 = arith.mulf %40, %44 : vector<2x8x8xf32>
    %46 = arith.truncf %45 : vector<2x8x8xf32> to vector<2x8x8xbf16>
    %47 = vector.extract_strided_slice %32 {offsets = [0, 0, 0], sizes = [2, 8, 16], strides = [1, 1, 1]} : vector<2x8x64xbf16> to vector<2x8x16xbf16>
    %cst_26 = arith.constant dense<0.000000e+00> : vector<2x8x16xf32>
    %48 = tpu.matmul %46, %47, %cst_26 {dimension_numbers = #tpu.dot_dimension_numbers<[2], [1], [1], [2], [0, 0, 0, 1, 1, 2], [0], [0]>} : vector<2x8x8xbf16>, vector<2x8x16xbf16>, vector<2x8x16xf32> -> vector<2x8x16xf32>
    %49 = vector.extract_strided_slice %28 {offsets = [0, 0, 16], sizes = [2, 8, 16], strides = [1, 1, 1]} : vector<2x8x64xbf16> to vector<2x8x16xbf16>
    %50 = vector.extract_strided_slice %30 {offsets = [0, 0, 16], sizes = [2, 8, 16], strides = [1, 1, 1]} : vector<2x8x64xbf16> to vector<2x8x16xbf16>
    %cst_27 = arith.constant dense<0.000000e+00> : vector<2x8x8xf32>
    %51 = tpu.matmul %49, %50, %cst_27 {dimension_numbers = #tpu.dot_dimension_numbers<[2], [2], [1], [1], [0, 0, 0, 1, 1, 1], [0], [0]>} : vector<2x8x16xbf16>, vector<2x8x16xbf16>, vector<2x8x8xf32> -> vector<2x8x8xf32>
    %cst_28 = arith.constant dense<0xFF800000> : vector<2x8xf32>
    %52 = vector.multi_reduction <maximumf>, %51, %cst_28 [2] : vector<2x8x8xf32> to vector<2x8xf32>
    %53 = vector.shape_cast %52 : vector<2x8xf32> to vector<2x8x1xf32>
    %54 = vector.broadcast %53 : vector<2x8x1xf32> to vector<2x8x8xf32>
    %55 = arith.subf %51, %54 : vector<2x8x8xf32>
    %56 = math.exp %55 : vector<2x8x8xf32>
    %cst_29 = arith.constant dense<0.000000e+00> : vector<2x8xf32>
    %57 = vector.multi_reduction <add>, %56, %cst_29 [2] : vector<2x8x8xf32> to vector<2x8xf32>
    %58 = vector.shape_cast %57 : vector<2x8xf32> to vector<2x8x1xf32>
    %59 = tpu.reciprocal %58 {approx = true} : vector<2x8x1xf32> -> vector<2x8x1xf32>
    %60 = vector.broadcast %59 : vector<2x8x1xf32> to vector<2x8x8xf32>
    %61 = arith.mulf %56, %60 : vector<2x8x8xf32>
    %62 = arith.truncf %61 : vector<2x8x8xf32> to vector<2x8x8xbf16>
    %63 = vector.extract_strided_slice %32 {offsets = [0, 0, 16], sizes = [2, 8, 16], strides = [1, 1, 1]} : vector<2x8x64xbf16> to vector<2x8x16xbf16>
    %cst_30 = arith.constant dense<0.000000e+00> : vector<2x8x16xf32>
    %64 = tpu.matmul %62, %63, %cst_30 {dimension_numbers = #tpu.dot_dimension_numbers<[2], [1], [1], [2], [0, 0, 0, 1, 1, 2], [0], [0]>} : vector<2x8x8xbf16>, vector<2x8x16xbf16>, vector<2x8x16xf32> -> vector<2x8x16xf32>
    %65 = vector.extract_strided_slice %28 {offsets = [0, 0, 32], sizes = [2, 8, 16], strides = [1, 1, 1]} : vector<2x8x64xbf16> to vector<2x8x16xbf16>
    %66 = vector.extract_strided_slice %30 {offsets = [0, 0, 32], sizes = [2, 8, 16], strides = [1, 1, 1]} : vector<2x8x64xbf16> to vector<2x8x16xbf16>
    %cst_31 = arith.constant dense<0.000000e+00> : vector<2x8x8xf32>
    %67 = tpu.matmul %65, %66, %cst_31 {dimension_numbers = #tpu.dot_dimension_numbers<[2], [2], [1], [1], [0, 0, 0, 1, 1, 1], [0], [0]>} : vector<2x8x16xbf16>, vector<2x8x16xbf16>, vector<2x8x8xf32> -> vector<2x8x8xf32>
    %cst_32 = arith.constant dense<0xFF800000> : vector<2x8xf32>
    %68 = vector.multi_reduction <maximumf>, %67, %cst_32 [2] : vector<2x8x8xf32> to vector<2x8xf32>
    %69 = vector.shape_cast %68 : vector<2x8xf32> to vector<2x8x1xf32>
    %70 = vector.broadcast %69 : vector<2x8x1xf32> to vector<2x8x8xf32>
    %71 = arith.subf %67, %70 : vector<2x8x8xf32>
    %72 = math.exp %71 : vector<2x8x8xf32>
    %cst_33 = arith.constant dense<0.000000e+00> : vector<2x8xf32>
    %73 = vector.multi_reduction <add>, %72, %cst_33 [2] : vector<2x8x8xf32> to vector<2x8xf32>
    %74 = vector.shape_cast %73 : vector<2x8xf32> to vector<2x8x1xf32>
    %75 = tpu.reciprocal %74 {approx = true} : vector<2x8x1xf32> -> vector<2x8x1xf32>
    %76 = vector.broadcast %75 : vector<2x8x1xf32> to vector<2x8x8xf32>
    %77 = arith.mulf %72, %76 : vector<2x8x8xf32>
    %78 = arith.truncf %77 : vector<2x8x8xf32> to vector<2x8x8xbf16>
    %79 = vector.extract_strided_slice %32 {offsets = [0, 0, 32], sizes = [2, 8, 16], strides = [1, 1, 1]} : vector<2x8x64xbf16> to vector<2x8x16xbf16>
    %cst_34 = arith.constant dense<0.000000e+00> : vector<2x8x16xf32>
    %80 = tpu.matmul %78, %79, %cst_34 {dimension_numbers = #tpu.dot_dimension_numbers<[2], [1], [1], [2], [0, 0, 0, 1, 1, 2], [0], [0]>} : vector<2x8x8xbf16>, vector<2x8x16xbf16>, vector<2x8x16xf32> -> vector<2x8x16xf32>
    %81 = vector.extract_strided_slice %28 {offsets = [0, 0, 48], sizes = [2, 8, 16], strides = [1, 1, 1]} : vector<2x8x64xbf16> to vector<2x8x16xbf16>
    %82 = vector.extract_strided_slice %30 {offsets = [0, 0, 48], sizes = [2, 8, 16], strides = [1, 1, 1]} : vector<2x8x64xbf16> to vector<2x8x16xbf16>
    %cst_35 = arith.constant dense<0.000000e+00> : vector<2x8x8xf32>
    %83 = tpu.matmul %81, %82, %cst_35 {dimension_numbers = #tpu.dot_dimension_numbers<[2], [2], [1], [1], [0, 0, 0, 1, 1, 1], [0], [0]>} : vector<2x8x16xbf16>, vector<2x8x16xbf16>, vector<2x8x8xf32> -> vector<2x8x8xf32>
    %cst_36 = arith.constant dense<0xFF800000> : vector<2x8xf32>
    %84 = vector.multi_reduction <maximumf>, %83, %cst_36 [2] : vector<2x8x8xf32> to vector<2x8xf32>
    %85 = vector.shape_cast %84 : vector<2x8xf32> to vector<2x8x1xf32>
    %86 = vector.broadcast %85 : vector<2x8x1xf32> to vector<2x8x8xf32>
    %87 = arith.subf %83, %86 : vector<2x8x8xf32>
    %88 = math.exp %87 : vector<2x8x8xf32>
    %cst_37 = arith.constant dense<0.000000e+00> : vector<2x8xf32>
    %89 = vector.multi_reduction <add>, %88, %cst_37 [2] : vector<2x8x8xf32> to vector<2x8xf32>
    %90 = vector.shape_cast %89 : vector<2x8xf32> to vector<2x8x1xf32>
    %91 = tpu.reciprocal %90 {approx = true} : vector<2x8x1xf32> -> vector<2x8x1xf32>
    %92 = vector.broadcast %91 : vector<2x8x1xf32> to vector<2x8x8xf32>
    %93 = arith.mulf %88, %92 : vector<2x8x8xf32>
    %94 = arith.truncf %93 : vector<2x8x8xf32> to vector<2x8x8xbf16>
    %95 = vector.extract_strided_slice %32 {offsets = [0, 0, 48], sizes = [2, 8, 16], strides = [1, 1, 1]} : vector<2x8x64xbf16> to vector<2x8x16xbf16>
    %cst_38 = arith.constant dense<0.000000e+00> : vector<2x8x16xf32>
    %96 = tpu.matmul %94, %95, %cst_38 {dimension_numbers = #tpu.dot_dimension_numbers<[2], [1], [1], [2], [0, 0, 0, 1, 1, 2], [0], [0]>} : vector<2x8x8xbf16>, vector<2x8x16xbf16>, vector<2x8x16xf32> -> vector<2x8x16xf32>
    %97 = tpu.concatenate %48, %64, %80, %96 in 2 : vector<2x8x16xf32>, vector<2x8x16xf32>, vector<2x8x16xf32>, vector<2x8x16xf32> -> vector<2x8x64xf32>
    %98 = vector.shape_cast %97 : vector<2x8x64xf32> to vector<16x64xf32>
    %99 = arith.truncf %98 : vector<16x64xf32> to vector<16x64xbf16>
    %c0_39 = arith.constant 0 : index
    %c0_40 = arith.constant 0 : index
    %c0_41 = arith.constant 0 : index
    %100 = vector.load %arg12[%c0_39, %c0_40, %c0_41] : memref<1x64x64xbf16, #tpu.memory_space<vmem>>, vector<1x64x64xbf16>
    %101 = vector.shape_cast %100 : vector<1x64x64xbf16> to vector<64x64xbf16>
    %cst_42 = arith.constant dense<0.000000e+00> : vector<16x64xf32>
    %102 = tpu.matmul %99, %101, %cst_42 {dimension_numbers = #tpu.dot_dimension_numbers<[1], [0], [0], [1], [0, 0, 1, 1], [], []>} : vector<16x64xbf16>, vector<64x64xbf16>, vector<16x64xf32> -> vector<16x64xf32>
    %c0_43 = arith.constant 0 : index
    %c0_44 = arith.constant 0 : index
    %c0_45 = arith.constant 0 : index
    %103 = vector.load %arg13[%c0_43, %c0_44, %c0_45] : memref<1x1x64xf32, #tpu.memory_space<vmem>>, vector<1x1x64xf32>
    %104 = vector.shape_cast %103 : vector<1x1x64xf32> to vector<1x64xf32>
    %105 = vector.broadcast %104 : vector<1x64xf32> to vector<16x64xf32>
    %106 = arith.addf %102, %105 : vector<16x64xf32>
    %107 = arith.addf %4, %106 : vector<16x64xf32>
    %cst_46 = arith.constant dense<0.000000e+00> : vector<16xf32>
    %108 = vector.multi_reduction <add>, %107, %cst_46 [1] : vector<16x64xf32> to vector<16xf32>
    %109 = vector.shape_cast %108 : vector<16xf32> to vector<16x1xf32>
    %cst_47 = arith.constant 6.400000e+01 : f32
    %110 = vector.broadcast %cst_47 : f32 to vector<16x1xf32>
    %111 = arith.divf %109, %110 : vector<16x1xf32>
    %112 = vector.broadcast %111 : vector<16x1xf32> to vector<16x64xf32>
    %113 = arith.subf %107, %112 : vector<16x64xf32>
    %114 = arith.mulf %113, %113 : vector<16x64xf32>
    %cst_48 = arith.constant dense<0.000000e+00> : vector<16xf32>
    %115 = vector.multi_reduction <add>, %114, %cst_48 [1] : vector<16x64xf32> to vector<16xf32>
    %116 = vector.shape_cast %115 : vector<16xf32> to vector<16x1xf32>
    %cst_49 = arith.constant 6.400000e+01 : f32
    %117 = vector.broadcast %cst_49 : f32 to vector<16x1xf32>
    %118 = arith.divf %116, %117 : vector<16x1xf32>
    %119 = vector.broadcast %111 : vector<16x1xf32> to vector<16x64xf32>
    %120 = arith.subf %107, %119 : vector<16x64xf32>
    %cst_50 = arith.constant 9.99999974E-6 : f32
    %121 = vector.broadcast %cst_50 : f32 to vector<16x1xf32>
    %122 = arith.addf %118, %121 : vector<16x1xf32>
    %123 = math.rsqrt %122 : vector<16x1xf32>
    %124 = vector.broadcast %123 : vector<16x1xf32> to vector<16x64xf32>
    %125 = arith.mulf %120, %124 : vector<16x64xf32>
    %c0_51 = arith.constant 0 : index
    %c0_52 = arith.constant 0 : index
    %c0_53 = arith.constant 0 : index
    %126 = vector.load %arg14[%c0_51, %c0_52, %c0_53] : memref<1x1x64xf32, #tpu.memory_space<vmem>>, vector<1x1x64xf32>
    %127 = vector.shape_cast %126 : vector<1x1x64xf32> to vector<1x64xf32>
    %128 = vector.broadcast %127 : vector<1x64xf32> to vector<16x64xf32>
    %129 = arith.mulf %125, %128 : vector<16x64xf32>
    %c0_54 = arith.constant 0 : index
    %c0_55 = arith.constant 0 : index
    %c0_56 = arith.constant 0 : index
    %130 = vector.load %arg15[%c0_54, %c0_55, %c0_56] : memref<1x1x64xf32, #tpu.memory_space<vmem>>, vector<1x1x64xf32>
    %131 = vector.shape_cast %130 : vector<1x1x64xf32> to vector<1x64xf32>
    %132 = vector.broadcast %131 : vector<1x64xf32> to vector<16x64xf32>
    %133 = arith.addf %129, %132 : vector<16x64xf32>
    %134 = arith.truncf %133 : vector<16x64xf32> to vector<16x64xbf16>
    %c0_57 = arith.constant 0 : index
    %c0_58 = arith.constant 0 : index
    %c0_59 = arith.constant 0 : index
    %135 = vector.load %arg16[%c0_57, %c0_58, %c0_59] : memref<1x64x256xbf16, #tpu.memory_space<vmem>>, vector<1x64x256xbf16>
    %136 = vector.shape_cast %135 : vector<1x64x256xbf16> to vector<64x256xbf16>
    %cst_60 = arith.constant dense<0.000000e+00> : vector<16x256xf32>
    %137 = tpu.matmul %134, %136, %cst_60 {dimension_numbers = #tpu.dot_dimension_numbers<[1], [0], [0], [1], [0, 0, 1, 1], [], []>} : vector<16x64xbf16>, vector<64x256xbf16>, vector<16x256xf32> -> vector<16x256xf32>
    %c0_61 = arith.constant 0 : index
    %c0_62 = arith.constant 0 : index
    %c0_63 = arith.constant 0 : index
    %138 = vector.load %arg17[%c0_61, %c0_62, %c0_63] : memref<1x1x256xf32, #tpu.memory_space<vmem>>, vector<1x1x256xf32>
    %139 = vector.shape_cast %138 : vector<1x1x256xf32> to vector<1x256xf32>
    %140 = vector.broadcast %139 : vector<1x256xf32> to vector<16x256xf32>
    %141 = arith.addf %137, %140 : vector<16x256xf32>
    %cst_64 = arith.constant 0.000000e+00 : f32
    %142 = vector.broadcast %cst_64 : f32 to vector<16x256xf32>
    %143 = arith.maximumf %141, %142 : vector<16x256xf32>
    %144 = arith.truncf %143 : vector<16x256xf32> to vector<16x256xbf16>
    %c0_65 = arith.constant 0 : index
    %c0_66 = arith.constant 0 : index
    %c0_67 = arith.constant 0 : index
    %145 = vector.load %arg18[%c0_65, %c0_66, %c0_67] : memref<1x256x64xbf16, #tpu.memory_space<vmem>>, vector<1x256x64xbf16>
    %146 = vector.shape_cast %145 : vector<1x256x64xbf16> to vector<256x64xbf16>
    %cst_68 = arith.constant dense<0.000000e+00> : vector<16x64xf32>
    %147 = tpu.matmul %144, %146, %cst_68 {dimension_numbers = #tpu.dot_dimension_numbers<[1], [0], [0], [1], [0, 0, 1, 1], [], []>} : vector<16x256xbf16>, vector<256x64xbf16>, vector<16x64xf32> -> vector<16x64xf32>
    %c0_69 = arith.constant 0 : index
    %c0_70 = arith.constant 0 : index
    %c0_71 = arith.constant 0 : index
    %148 = vector.load %arg19[%c0_69, %c0_70, %c0_71] : memref<1x1x64xf32, #tpu.memory_space<vmem>>, vector<1x1x64xf32>
    %149 = vector.shape_cast %148 : vector<1x1x64xf32> to vector<1x64xf32>
    %150 = vector.broadcast %149 : vector<1x64xf32> to vector<16x64xf32>
    %151 = arith.addf %147, %150 : vector<16x64xf32>
    %152 = arith.addf %133, %151 : vector<16x64xf32>
    %cst_72 = arith.constant dense<0.000000e+00> : vector<16xf32>
    %153 = vector.multi_reduction <add>, %152, %cst_72 [1] : vector<16x64xf32> to vector<16xf32>
    %154 = vector.shape_cast %153 : vector<16xf32> to vector<16x1xf32>
    %cst_73 = arith.constant 6.400000e+01 : f32
    %155 = vector.broadcast %cst_73 : f32 to vector<16x1xf32>
    %156 = arith.divf %154, %155 : vector<16x1xf32>
    %157 = vector.broadcast %156 : vector<16x1xf32> to vector<16x64xf32>
    %158 = arith.subf %152, %157 : vector<16x64xf32>
    %159 = arith.mulf %158, %158 : vector<16x64xf32>
    %cst_74 = arith.constant dense<0.000000e+00> : vector<16xf32>
    %160 = vector.multi_reduction <add>, %159, %cst_74 [1] : vector<16x64xf32> to vector<16xf32>
    %161 = vector.shape_cast %160 : vector<16xf32> to vector<16x1xf32>
    %cst_75 = arith.constant 6.400000e+01 : f32
    %162 = vector.broadcast %cst_75 : f32 to vector<16x1xf32>
    %163 = arith.divf %161, %162 : vector<16x1xf32>
    %164 = vector.broadcast %156 : vector<16x1xf32> to vector<16x64xf32>
    %165 = arith.subf %152, %164 : vector<16x64xf32>
    %cst_76 = arith.constant 9.99999974E-6 : f32
    %166 = vector.broadcast %cst_76 : f32 to vector<16x1xf32>
    %167 = arith.addf %163, %166 : vector<16x1xf32>
    %168 = math.rsqrt %167 : vector<16x1xf32>
    %169 = vector.broadcast %168 : vector<16x1xf32> to vector<16x64xf32>
    %170 = arith.mulf %165, %169 : vector<16x64xf32>
    %c0_77 = arith.constant 0 : index
    %c0_78 = arith.constant 0 : index
    %c0_79 = arith.constant 0 : index
    %171 = vector.load %arg20[%c0_77, %c0_78, %c0_79] : memref<1x1x64xf32, #tpu.memory_space<vmem>>, vector<1x1x64xf32>
    %172 = vector.shape_cast %171 : vector<1x1x64xf32> to vector<1x64xf32>
    %173 = vector.broadcast %172 : vector<1x64xf32> to vector<16x64xf32>
    %174 = arith.mulf %170, %173 : vector<16x64xf32>
    %c0_80 = arith.constant 0 : index
    %c0_81 = arith.constant 0 : index
    %c0_82 = arith.constant 0 : index
    %175 = vector.load %arg21[%c0_80, %c0_81, %c0_82] : memref<1x1x64xf32, #tpu.memory_space<vmem>>, vector<1x1x64xf32>
    %176 = vector.shape_cast %175 : vector<1x1x64xf32> to vector<1x64xf32>
    %177 = vector.broadcast %176 : vector<1x64xf32> to vector<16x64xf32>
    %178 = arith.addf %174, %177 : vector<16x64xf32>
    %179 = vector.shape_cast %178 : vector<16x64xf32> to vector<2x8x64xf32>
    %c0_83 = arith.constant 0 : index
    %c0_84 = arith.constant 0 : index
    %c0_85 = arith.constant 0 : index
    %180 = vector.load %arg25[%c0_83, %c0_84, %c0_85] : memref<2x8x64xf32, #tpu.memory_space<vmem>>, vector<2x8x64xf32>
    tpu.vector_store %arg25[%c0_83, %c0_84, %c0_85], %179 {strides = array<i32>} : memref<2x8x64xf32, #tpu.memory_space<vmem>>, vector<2x8x64xf32>,
    %c1_i32 = arith.constant 1 : i32
    %181 = arith.cmpi eq, %arg1, %c1_i32 : i32
    %182 = arith.extui %181 : i1 to i32
    %c0_i32_86 = arith.constant 0 : i32
    %183 = arith.cmpi ne, %182, %c0_i32_86 : i32
    scf.if %183 {
      %184 = arith.truncf %178 : vector<16x64xf32> to vector<16x64xbf16>
      %c0_87 = arith.constant 0 : index
      %c0_88 = arith.constant 0 : index
      %185 = vector.load %arg22[%c0_87, %c0_88] : memref<64x1xbf16, #tpu.memory_space<vmem>>, vector<64x1xbf16>
      %cst_89 = arith.constant dense<0.000000e+00> : vector<16x1xf32>
      %186 = tpu.matmul %184, %185, %cst_89 {dimension_numbers = #tpu.dot_dimension_numbers<[1], [0], [0], [1], [0, 0, 1, 1], [], []>} : vector<16x64xbf16>, vector<64x1xbf16>, vector<16x1xf32> -> vector<16x1xf32>
      %c0_90 = arith.constant 0 : index
      %c0_91 = arith.constant 0 : index
      %187 = vector.load %arg23[%c0_90, %c0_91] : memref<1x1xf32, #tpu.memory_space<vmem>>, vector<1x1xf32>
      %188 = vector.broadcast %187 : vector<1x1xf32> to vector<16x1xf32>
      %189 = arith.addf %186, %188 : vector<16x1xf32>
      %190 = vector.shape_cast %189 : vector<16x1xf32> to vector<2x8x1xf32>
      %c0_92 = arith.constant 0 : index
      %c0_93 = arith.constant 0 : index
      %c0_94 = arith.constant 0 : index
      %191 = vector.load %arg24[%c0_92, %c0_93, %c0_94] : memref<2x8x1xf32, #tpu.memory_space<vmem>>, vector<2x8x1xf32>
      tpu.vector_store %arg24[%c0_92, %c0_93, %c0_94], %190 {strides = array<i32>} : memref<2x8x1xf32, #tpu.memory_space<vmem>>, vector<2x8x1xf32>,
    } else {
    }
    return
  }
  func.func @transform_0(%arg0: i32, %arg1: i32) -> (i32, i32, i32) {
    %c0_i32 = arith.constant 0 : i32
    %c0_i32_0 = arith.constant 0 : i32
    %c0_i32_1 = arith.constant 0 : i32
    return %arg0, %c0_i32, %c0_i32_0 : i32, i32, i32
  }
  func.func @transform_1(%arg0: i32, %arg1: i32) -> (i32, i32, i32) {
    %c0_i32 = arith.constant 0 : i32
    %c0_i32_0 = arith.constant 0 : i32
    %c0_i32_1 = arith.constant 0 : i32
    return %arg0, %c0_i32, %c0_i32_0 : i32, i32, i32
  }
  func.func @transform_2(%arg0: i32, %arg1: i32) -> (i32, i32) {
    %c0_i32 = arith.constant 0 : i32
    %c0_i32_0 = arith.constant 0 : i32
    %c0_i32_1 = arith.constant 0 : i32
    return %c0_i32, %c0_i32_0 : i32, i32
  }
  func.func @transform_3(%arg0: i32, %arg1: i32) -> (i32, i32) {
    %c0_i32 = arith.constant 0 : i32
    %c0_i32_0 = arith.constant 0 : i32
    %c0_i32_1 = arith.constant 0 : i32
    return %c0_i32, %c0_i32_0 : i32, i32
  }
  func.func @transform_4(%arg0: i32, %arg1: i32) -> (i32, i32, i32) {
    %c0_i32 = arith.constant 0 : i32
    %c0_i32_0 = arith.constant 0 : i32
    %c0_i32_1 = arith.constant 0 : i32
    return %arg1, %c0_i32, %c0_i32_0 : i32, i32, i32
  }
  func.func @transform_5(%arg0: i32, %arg1: i32) -> (i32, i32, i32) {
    %c0_i32 = arith.constant 0 : i32
    %c0_i32_0 = arith.constant 0 : i32
    %c0_i32_1 = arith.constant 0 : i32
    return %arg1, %c0_i32, %c0_i32_0 : i32, i32, i32
  }
  func.func @transform_6(%arg0: i32, %arg1: i32) -> (i32, i32, i32) {
    %c0_i32 = arith.constant 0 : i32
    %c0_i32_0 = arith.constant 0 : i32
    %c0_i32_1 = arith.constant 0 : i32
    return %arg1, %c0_i32, %c0_i32_0 : i32, i32, i32
  }
  func.func @transform_7(%arg0: i32, %arg1: i32) -> (i32, i32, i32) {
    %c0_i32 = arith.constant 0 : i32
    %c0_i32_0 = arith.constant 0 : i32
    %c0_i32_1 = arith.constant 0 : i32
    return %arg1, %c0_i32, %c0_i32_0 : i32, i32, i32
  }
  func.func @transform_8(%arg0: i32, %arg1: i32) -> (i32, i32, i32) {
    %c0_i32 = arith.constant 0 : i32
    %c0_i32_0 = arith.constant 0 : i32
    %c0_i32_1 = arith.constant 0 : i32
    return %arg1, %c0_i32, %c0_i32_0 : i32, i32, i32
  }
  func.func @transform_9(%arg0: i32, %arg1: i32) -> (i32, i32, i32) {
    %c0_i32 = arith.constant 0 : i32
    %c0_i32_0 = arith.constant 0 : i32
    %c0_i32_1 = arith.constant 0 : i32
    return %arg1, %c0_i32, %c0_i32_0 : i32, i32, i32
  }
  func.func @transform_10(%arg0: i32, %arg1: i32) -> (i32, i32, i32) {
    %c0_i32 = arith.constant 0 : i32
    %c0_i32_0 = arith.constant 0 : i32
    %c0_i32_1 = arith.constant 0 : i32
    return %arg1, %c0_i32, %c0_i32_0 : i32, i32, i32
  }
  func.func @transform_11(%arg0: i32, %arg1: i32) -> (i32, i32, i32) {
    %c0_i32 = arith.constant 0 : i32
    %c0_i32_0 = arith.constant 0 : i32
    %c0_i32_1 = arith.constant 0 : i32
    return %arg1, %c0_i32, %c0_i32_0 : i32, i32, i32
  }
  func.func @transform_12(%arg0: i32, %arg1: i32) -> (i32, i32, i32) {
    %c0_i32 = arith.constant 0 : i32
    %c0_i32_0 = arith.constant 0 : i32
    %c0_i32_1 = arith.constant 0 : i32
    return %arg1, %c0_i32, %c0_i32_0 : i32, i32, i32
  }
  func.func @transform_13(%arg0: i32, %arg1: i32) -> (i32, i32, i32) {
    %c0_i32 = arith.constant 0 : i32
    %c0_i32_0 = arith.constant 0 : i32
    %c0_i32_1 = arith.constant 0 : i32
    return %arg1, %c0_i32, %c0_i32_0 : i32, i32, i32
  }
  func.func @transform_14(%arg0: i32, %arg1: i32) -> (i32, i32, i32) {
    %c0_i32 = arith.constant 0 : i32
    %c0_i32_0 = arith.constant 0 : i32
    %c0_i32_1 = arith.constant 0 : i32
    return %arg1, %c0_i32, %c0_i32_0 : i32, i32, i32
  }
  func.func @transform_15(%arg0: i32, %arg1: i32) -> (i32, i32, i32) {
    %c0_i32 = arith.constant 0 : i32
    %c0_i32_0 = arith.constant 0 : i32
    %c0_i32_1 = arith.constant 0 : i32
    return %arg1, %c0_i32, %c0_i32_0 : i32, i32, i32
  }
  func.func @transform_16(%arg0: i32, %arg1: i32) -> (i32, i32, i32) {
    %c0_i32 = arith.constant 0 : i32
    %c0_i32_0 = arith.constant 0 : i32
    %c0_i32_1 = arith.constant 0 : i32
    return %arg1, %c0_i32, %c0_i32_0 : i32, i32, i32
  }
  func.func @transform_17(%arg0: i32, %arg1: i32) -> (i32, i32, i32) {
    %c0_i32 = arith.constant 0 : i32
    %c0_i32_0 = arith.constant 0 : i32
    %c0_i32_1 = arith.constant 0 : i32
    return %arg1, %c0_i32, %c0_i32_0 : i32, i32, i32
  }
  func.func @transform_18(%arg0: i32, %arg1: i32) -> (i32, i32, i32) {
    %c0_i32 = arith.constant 0 : i32
    %c0_i32_0 = arith.constant 0 : i32
    %c0_i32_1 = arith.constant 0 : i32
    return %arg1, %c0_i32, %c0_i32_0 : i32, i32, i32
  }
  func.func @transform_19(%arg0: i32, %arg1: i32) -> (i32, i32, i32) {
    %c0_i32 = arith.constant 0 : i32
    %c0_i32_0 = arith.constant 0 : i32
    %c0_i32_1 = arith.constant 0 : i32
    return %arg1, %c0_i32, %c0_i32_0 : i32, i32, i32
  }
  func.func @transform_20(%arg0: i32, %arg1: i32) -> (i32, i32) {
    %c0_i32 = arith.constant 0 : i32
    %c0_i32_0 = arith.constant 0 : i32
    %c0_i32_1 = arith.constant 0 : i32
    return %c0_i32, %c0_i32_0 : i32, i32
  }
  func.func @transform_21(%arg0: i32, %arg1: i32) -> (i32, i32) {
    %c0_i32 = arith.constant 0 : i32
    %c0_i32_0 = arith.constant 0 : i32
    %c0_i32_1 = arith.constant 0 : i32
    return %c0_i32, %c0_i32_0 : i32, i32
  }
  func.func @transform_22(%arg0: i32, %arg1: i32) -> (i32, i32, i32) {
    %c0_i32 = arith.constant 0 : i32
    %c0_i32_0 = arith.constant 0 : i32
    %c0_i32_1 = arith.constant 0 : i32
    return %arg0, %c0_i32, %c0_i32_0 : i32, i32, i32
  }
}

</mosaic_0001>

<llo_original>
// kernel: forward.4
$region0: #{forward.4}
  #allocation0 [shape = 'u32[]', space=smem, size = 0x4, offset = 0x4, fixed_abs, tag = 'smem constant byte address 0x4 - core index']
  #allocation1 [shape = 'u32[72,128]{1,0:T(1,128)}', space=vmem, size = 0x9000, scoped, tag = 'internal scratch']
  %s0 = inlined_call_operand.vmem [shape: bf16[128,27], index: 0, kind: input, shape index: {}]
  %s1 = inlined_call_operand.vmem [shape: bf16[27,16], index: 1, kind: input, shape index: {}]
  %s2 = inlined_call_operand.vmem [shape: f32[1,16], index: 2, kind: input, shape index: {}]
  %s3 = inlined_call_operand.vmem [shape: bf16[128,16], index: 3, kind: output, shape index: {}]
  %s4 = sld [smem:[#allocation0]]
  $region22: #{forward.4} parent=0
    _
  %s6 = ssub.s32 1, %s4
  %s7 = scalar_select 0, %s6, %s4
  // Predicated region
  $region2: #{forward.4} parent=0 // pred_check
    _
  $region3: #{forward.4} parent=0 // pred_check_branch
    %9 = sbr.rel (0) target = $region5
  $region4: #{forward.4} parent=0 // pred_region
    _
  $region5: #{forward.4} parent=0 // pred_fallthru
    _
  // Predicated region
  $region6: #{forward.4} parent=0 // pred_check
    _
  $region7: #{forward.4} parent=0 // pred_check_branch
    %11 = sbr.rel (0) target = $region9
  $region8: #{forward.4} parent=0 // pred_region
    _
  $region9: #{forward.4} parent=0 // pred_fallthru
    _
  // Predicated region
  $region10: #{forward.4} parent=0 // pred_check
    _
  $region11: #{forward.4} parent=0 // pred_check_branch
    %13 = sbr.rel (0) target = $region13
  $region12: #{forward.4} parent=0 // pred_region
    _
  $region13: #{forward.4} parent=0 // pred_fallthru
    _
  %v15 = vld [vmem:[%s0] sm:$0xf]
  %v16 = vld [vmem:[%s0 + $0x4] sm:$0xf]
  %v17 = vld [vmem:[%s0 + $0x8] sm:$0xf]
  %v18 = vld [vmem:[%s0 + $0xc] sm:$0xf]
  %v19 = vld [vmem:[%s0 + $0x10] sm:$0xf]
  %v20 = vld [vmem:[%s0 + $0x14] sm:$0xf]
  %v21 = vld [vmem:[%s0 + $0x18] sm:$0xf]
  %v22 = vld [vmem:[%s0 + $0x1c] sm:$0xf]
  %v23 = vld [vmem:[%s0 + $0x20] sm:$0xf]
  %v24 = vld [vmem:[%s0 + $0x24] sm:$0xf]
  %v25 = vld [vmem:[%s0 + $0x28] sm:$0xf]
  %v26 = vld [vmem:[%s0 + $0x2c] sm:$0xf]
  %v27 = vld [vmem:[%s0 + $0x30] sm:$0xf]
  %v28 = vld [vmem:[%s0 + $0x34] sm:$0xf]
  %v29 = vld [vmem:[%s0 + $0x38] sm:$0xf]
  %v30 = vld [vmem:[%s0 + $0x3c] sm:$0xf]
  %v31 = vld [vmem:[%s1] sm:$0xf]
  %v32 = vld [vmem:[%s1 + $0x4] sm:$0xf]
  %v33 = vld [vmem:[%s1 + $0x8] sm:$0xf]
  %v34 = vld [vmem:[%s1 + $0xc] sm:$0x3]
  %v35 = vld [vmem:[%s2] sm:$0x1]
  %v37 = vperm.slane %v35, 0
  %v55 = vunpack.c.l.b16 %v15
  %v56 = vunpack.c.l.b16 %v16
  %v57 = vunpack.c.l.b16 %v17
  %v58 = vunpack.c.l.b16 %v18
  %v59 = vunpack.c.l.b16 %v19
  %v60 = vunpack.c.l.b16 %v20
  %v61 = vunpack.c.l.b16 %v21
  %v62 = vunpack.c.l.b16 %v22
  %v63 = vunpack.c.l.b16 %v23
  %v64 = vunpack.c.l.b16 %v24
  %v65 = vunpack.c.l.b16 %v25
  %v66 = vunpack.c.l.b16 %v26
  %v67 = vunpack.c.l.b16 %v27
  %v68 = vunpack.c.l.b16 %v28
  %v69 = vunpack.c.l.b16 %v29
  %v70 = vunpack.c.l.b16 %v30
  %v71 = vpack.c.b16 %v56, %v55
  %v72 = vpack.c.b16 %v58, %v57
  %v73 = vpack.c.b16 %v60, %v59
  %v74 = vpack.c.b16 %v62, %v61
  %v75 = vpack.c.b16 %v64, %v63
  %v76 = vpack.c.b16 %v66, %v65
  %v77 = vpack.c.b16 %v68, %v67
  %v78 = vpack.c.b16 %v70, %v69
  %v83 = vunpack.c.l.b16 %v31
  %v84 = vunpack.c.l.b16 %v32
  %v85 = vunpack.c.l.b16 %v33
  %v86 = vunpack.c.l.b16 %v34
  %v87 = vpack.c.b16 %v84, %v83
  %v88 = vpack.c.b16 %v86, %v85
  %vm90 = vcmask 220160
  %v92 = vsel %vm90, %v71, 0
  %v95 = vsel %vm90, %v72, 0
  %v98 = vsel %vm90, %v73, 0
  %v101 = vsel %vm90, %v74, 0
  %v104 = vsel %vm90, %v75, 0
  %v107 = vsel %vm90, %v76, 0
  %v110 = vsel %vm90, %v77, 0
  %v113 = vsel %vm90, %v78, 0
  %vm115 = vcmask 1044480
  %vm116 = vcmask 1045504
  %v117 = vsel %vm115, 4294967295, 65535
  %v118 = vsel %vm116, %v117, 0
  %v120 = vand.u32 %v88, %v118
  %122 = vmatpush.bf16.msra.mxu0 0
  %123 = vmatpush.bf16.msra.mxu0 0
  %124 = vmatpush.bf16.msra.mxu0 0
  %125 = vmatpush.bf16.msra.mxu0 0
  %126 = vmatpush.bf16.msra.mxu0 0
  %127 = vmatpush.bf16.msra.mxu0 0
  %128 = vmatpush.bf16.msra.mxu0 %v120
  %129 = vmatpush.bf16.msra.mxu0 %v87
  %130 = vmatmul.bf16.gmra.mxu0 %v92
  %v131 = vpop.f32.mrf.mxu0
  %v132 = vadd.f32 %v37, %v131
  %v133 = vpop.f32.mrf.mxu0
  %v134 = vadd.f32 %v37, %v133
  %135 = vmatmul.bf16.gmra.mxu0 %v95
  %v136 = vpop.f32.mrf.mxu0
  %v137 = vadd.f32 %v37, %v136
  %v138 = vpop.f32.mrf.mxu0
  %v139 = vadd.f32 %v37, %v138
  %140 = vmatmul.bf16.gmra.mxu0 %v98
  %v141 = vpop.f32.mrf.mxu0
  %v142 = vadd.f32 %v37, %v141
  %v143 = vpop.f32.mrf.mxu0
  %v144 = vadd.f32 %v37, %v143
  %145 = vmatmul.bf16.gmra.mxu0 %v101
  %v146 = vpop.f32.mrf.mxu0
  %v147 = vadd.f32 %v37, %v146
  %v148 = vpop.f32.mrf.mxu0
  %v149 = vadd.f32 %v37, %v148
  %150 = vmatmul.bf16.gmra.mxu0 %v104
  %v151 = vpop.f32.mrf.mxu0
  %v152 = vadd.f32 %v37, %v151
  %v153 = vpop.f32.mrf.mxu0
  %v154 = vadd.f32 %v37, %v153
  %155 = vmatmul.bf16.gmra.mxu0 %v107
  %v156 = vpop.f32.mrf.mxu0
  %v157 = vadd.f32 %v37, %v156
  %v158 = vpop.f32.mrf.mxu0
  %v159 = vadd.f32 %v37, %v158
  %160 = vmatmul.bf16.gmra.mxu0 %v110
  %v161 = vpop.f32.mrf.mxu0
  %v162 = vadd.f32 %v37, %v161
  %v163 = vpop.f32.mrf.mxu0
  %v164 = vadd.f32 %v37, %v163
  %165 = vmatmul.bf16.gmra.mxu0 %v113
  %v166 = vpop.f32.mrf.mxu0
  %v167 = vadd.f32 %v37, %v166
  %v168 = vpop.f32.mrf.mxu0
  %v169 = vadd.f32 %v37, %v168
  %170 = vdwg.mxu0
  %v171 = vmax.f32 %v132, 0.0
  %v172 = vmax.f32 %v134, 0.0
  %v173 = vmax.f32 %v137, 0.0
  %v174 = vmax.f32 %v139, 0.0
  %v175 = vmax.f32 %v142, 0.0
  %v176 = vmax.f32 %v144, 0.0
  %v177 = vmax.f32 %v147, 0.0
  %v178 = vmax.f32 %v149, 0.0
  %v179 = vmax.f32 %v152, 0.0
  %v180 = vmax.f32 %v154, 0.0
  %v181 = vmax.f32 %v157, 0.0
  %v182 = vmax.f32 %v159, 0.0
  %v183 = vmax.f32 %v162, 0.0
  %v184 = vmax.f32 %v164, 0.0
  %v185 = vmax.f32 %v167, 0.0
  %v186 = vmax.f32 %v169, 0.0
  %v187 = vpack.c.bf16 %v171, %v171
  %v188 = vpack.c.bf16 %v172, %v172
  %v189 = vpack.c.bf16 %v173, %v173
  %v190 = vpack.c.bf16 %v174, %v174
  %v191 = vpack.c.bf16 %v175, %v175
  %v192 = vpack.c.bf16 %v176, %v176
  %v193 = vpack.c.bf16 %v177, %v177
  %v194 = vpack.c.bf16 %v178, %v178
  %v195 = vpack.c.bf16 %v179, %v179
  %v196 = vpack.c.bf16 %v180, %v180
  %v197 = vpack.c.bf16 %v181, %v181
  %v198 = vpack.c.bf16 %v182, %v182
  %v199 = vpack.c.bf16 %v183, %v183
  %v200 = vpack.c.bf16 %v184, %v184
  %v201 = vpack.c.bf16 %v185, %v185
  %v202 = vpack.c.bf16 %v186, %v186
  %vm203 = vcmask 125952
  %204 = vst.msk [vmem:[%s3] sm:$0xf] %vm203, %v187
  %205 = vst.msk [vmem:[%s3 + $0x4] sm:$0xf] %vm203, %v188
  %206 = vst.msk [vmem:[%s3 + $0x8] sm:$0xf] %vm203, %v189
  %207 = vst.msk [vmem:[%s3 + $0xc] sm:$0xf] %vm203, %v190
  %208 = vst.msk [vmem:[%s3 + $0x10] sm:$0xf] %vm203, %v191
  %209 = vst.msk [vmem:[%s3 + $0x14] sm:$0xf] %vm203, %v192
  %210 = vst.msk [vmem:[%s3 + $0x18] sm:$0xf] %vm203, %v193
  %211 = vst.msk [vmem:[%s3 + $0x1c] sm:$0xf] %vm203, %v194
  %212 = vst.msk [vmem:[%s3 + $0x20] sm:$0xf] %vm203, %v195
  %213 = vst.msk [vmem:[%s3 + $0x24] sm:$0xf] %vm203, %v196
  %214 = vst.msk [vmem:[%s3 + $0x28] sm:$0xf] %vm203, %v197
  %215 = vst.msk [vmem:[%s3 + $0x2c] sm:$0xf] %vm203, %v198
  %216 = vst.msk [vmem:[%s3 + $0x30] sm:$0xf] %vm203, %v199
  %217 = vst.msk [vmem:[%s3 + $0x34] sm:$0xf] %vm203, %v200
  %218 = vst.msk [vmem:[%s3 + $0x38] sm:$0xf] %vm203, %v201
  %219 = vst.msk [vmem:[%s3 + $0x3c] sm:$0xf] %vm203, %v202
  // Predicated region
  $region14: #{forward.4} parent=0 // pred_check
    _
  $region15: #{forward.4} parent=0 // pred_check_branch
    %221 = sbr.rel (0) target = $region17
  $region16: #{forward.4} parent=0 // pred_region
    _
  $region17: #{forward.4} parent=0 // pred_fallthru
    _
  // Predicated region
  $region18: #{forward.4} parent=0 // pred_check
    _
  $region19: #{forward.4} parent=0 // pred_check_branch
    %223 = sbr.rel (0) target = $region21
  $region20: #{forward.4} parent=0 // pred_region
    _
  $region21: #{forward.4} parent=0 // pred_fallthru
    _

// kernel: forward.5
$region0: #{forward.5}
  #allocation0 [shape = 'u32[]', space=smem, size = 0x4, offset = 0x4, fixed_abs, tag = 'smem constant byte address 0x4 - core index']
  #allocation1 [shape = 'u32[72,128]{1,0:T(1,128)}', space=vmem, size = 0x9000, scoped, tag = 'internal scratch']
  %s0 = inlined_call_operand.vmem [shape: bf16[32,144], index: 0, kind: input, shape index: {}]
  %s1 = inlined_call_operand.vmem [shape: bf16[144,32], index: 1, kind: input, shape index: {}]
  %s2 = inlined_call_operand.vmem [shape: f32[1,32], index: 2, kind: input, shape index: {}]
  %s3 = inlined_call_operand.vmem [shape: bf16[32,32], index: 3, kind: output, shape index: {}]
  %s4 = sld [smem:[#allocation0]]
  $region22: #{forward.5} parent=0
    _
  %s6 = ssub.s32 1, %s4
  %s7 = scalar_select 0, %s6, %s4
  // Predicated region
  $region2: #{forward.5} parent=0 // pred_check
    _
  $region3: #{forward.5} parent=0 // pred_check_branch
    %9 = sbr.rel (0) target = $region5
  $region4: #{forward.5} parent=0 // pred_region
    _
  $region5: #{forward.5} parent=0 // pred_fallthru
    _
  // Predicated region
  $region6: #{forward.5} parent=0 // pred_check
    _
  $region7: #{forward.5} parent=0 // pred_check_branch
    %11 = sbr.rel (0) target = $region9
  $region8: #{forward.5} parent=0 // pred_region
    _
  $region9: #{forward.5} parent=0 // pred_fallthru
    _
  // Predicated region
  $region10: #{forward.5} parent=0 // pred_check
    _
  $region11: #{forward.5} parent=0 // pred_check_branch
    %13 = sbr.rel (0) target = $region13
  $region12: #{forward.5} parent=0 // pred_region
    _
  $region13: #{forward.5} parent=0 // pred_fallthru
    _
  %v15 = vld [vmem:[%s0] sm:$0xff]
  %v16 = vld [vmem:[%s0 + $0x8] sm:$0xff]
  %v17 = vld [vmem:[%s0 + $0x10] sm:$0xff]
  %v18 = vld [vmem:[%s0 + $0x18] sm:$0xff]
  %v19 = vld [vmem:[%s1] sm:$0xf]
  %v20 = vld [vmem:[%s1 + $0x4] sm:$0xf]
  %v21 = vld [vmem:[%s1 + $0x8] sm:$0xf]
  %v22 = vld [vmem:[%s1 + $0xc] sm:$0xf]
  %v23 = vld [vmem:[%s1 + $0x10] sm:$0xf]
  %v24 = vld [vmem:[%s1 + $0x14] sm:$0xf]
  %v25 = vld [vmem:[%s1 + $0x18] sm:$0xf]
  %v26 = vld [vmem:[%s1 + $0x1c] sm:$0xf]
  %v27 = vld [vmem:[%s1 + $0x20] sm:$0xf]
  %v28 = vld [vmem:[%s1 + $0x24] sm:$0xf]
  %v29 = vld [vmem:[%s1 + $0x28] sm:$0xf]
  %v30 = vld [vmem:[%s1 + $0x2c] sm:$0xf]
  %v31 = vld [vmem:[%s1 + $0x30] sm:$0xf]
  %v32 = vld [vmem:[%s1 + $0x34] sm:$0xf]
  %v33 = vld [vmem:[%s1 + $0x38] sm:$0xf]
  %v34 = vld [vmem:[%s1 + $0x3c] sm:$0xf]
  %v35 = vld [vmem:[%s1 + $0x40] sm:$0xf]
  %v36 = vld [vmem:[%s1 + $0x44] sm:$0xf]
  %v37 = vld [vmem:[%s2] sm:$0x1]
  %v39 = vperm.slane %v37, 0
  %v45 = vunpack.c.l.b16 %v15
  %v46 = vunpack.c.h.b16 %v15
  %v47 = vunpack.c.l.b16 %v16
  %v48 = vunpack.c.h.b16 %v16
  %v49 = vunpack.c.l.b16 %v17
  %v50 = vunpack.c.h.b16 %v17
  %v51 = vunpack.c.l.b16 %v18
  %v52 = vunpack.c.h.b16 %v18
  %v53 = vpack.c.b16 %v47, %v45
  %v54 = vpack.c.b16 %v48, %v46
  %v55 = vpack.c.b16 %v51, %v49
  %v56 = vpack.c.b16 %v52, %v50
  %v77 = vunpack.c.l.b16 %v19
  %v78 = vunpack.c.l.b16 %v20
  %v79 = vunpack.c.l.b16 %v21
  %v80 = vunpack.c.l.b16 %v22
  %v81 = vunpack.c.l.b16 %v23
  %v82 = vunpack.c.l.b16 %v24
  %v83 = vunpack.c.l.b16 %v25
  %v84 = vunpack.c.l.b16 %v26
  %v85 = vunpack.c.l.b16 %v27
  %v86 = vunpack.c.l.b16 %v28
  %v87 = vunpack.c.l.b16 %v29
  %v88 = vunpack.c.l.b16 %v30
  %v89 = vunpack.c.l.b16 %v31
  %v90 = vunpack.c.l.b16 %v32
  %v91 = vunpack.c.l.b16 %v33
  %v92 = vunpack.c.l.b16 %v34
  %v93 = vunpack.c.l.b16 %v35
  %v94 = vunpack.c.l.b16 %v36
  %v95 = vpack.c.b16 %v78, %v77
  %v96 = vpack.c.b16 %v80, %v79
  %v97 = vpack.c.b16 %v82, %v81
  %v98 = vpack.c.b16 %v84, %v83
  %v99 = vpack.c.b16 %v86, %v85
  %v100 = vpack.c.b16 %v88, %v87
  %v101 = vpack.c.b16 %v90, %v89
  %v102 = vpack.c.b16 %v92, %v91
  %v103 = vpack.c.b16 %v94, %v93
  %vm113 = vcmask 130048
  %v115 = vsel %vm113, %v54, 0
  %v118 = vsel %vm113, %v56, 0
  %120 = vmatpush.bf16.msra.mxu0 %v102
  %121 = vmatpush.bf16.msra.mxu0 %v101
  %122 = vmatpush.bf16.msra.mxu0 %v100
  %123 = vmatpush.bf16.msra.mxu0 %v99
  %124 = vmatpush.bf16.msra.mxu0 %v98
  %125 = vmatpush.bf16.msra.mxu0 %v97
  %126 = vmatpush.bf16.msra.mxu0 %v96
  %127 = vmatpush.bf16.msra.mxu0 %v95
  %128 = vmatmul.bf16.gmra.mxu0 %v53
  %v129 = vpop.f32.mrf.mxu0
  %v130 = vadd.f32 %v39, %v129
  %v131 = vpop.f32.mrf.mxu0
  %v132 = vadd.f32 %v39, %v131
  %133 = vmatmul.bf16.gmra.mxu0 %v55
  %v134 = vpop.f32.mrf.mxu0
  %v135 = vadd.f32 %v39, %v134
  %v136 = vpop.f32.mrf.mxu0
  %v137 = vadd.f32 %v39, %v136
  %138 = vdwg.mxu0
  %139 = vmatpush.bf16.msra.mxu0 0
  %140 = vmatpush.bf16.msra.mxu0 0
  %141 = vmatpush.bf16.msra.mxu0 0
  %142 = vmatpush.bf16.msra.mxu0 0
  %143 = vmatpush.bf16.msra.mxu0 0
  %144 = vmatpush.bf16.msra.mxu0 0
  %145 = vmatpush.bf16.msra.mxu0 0
  %146 = vmatpush.bf16.msra.mxu0 %v103
  %147 = vmatmul.bf16.gmra.mxu0 %v115
  %v148 = vpop.f32.mrf.mxu0
  %v149 = vadd.f32 %v130, %v148
  %v150 = vpop.f32.mrf.mxu0
  %v151 = vadd.f32 %v132, %v150
  %152 = vmatmul.bf16.gmra.mxu0 %v118
  %v153 = vpop.f32.mrf.mxu0
  %v154 = vadd.f32 %v135, %v153
  %v155 = vpop.f32.mrf.mxu0
  %v156 = vadd.f32 %v137, %v155
  %157 = vdwg.mxu0
  %v158 = vmax.f32 %v149, 0.0
  %v159 = vmax.f32 %v151, 0.0
  %v160 = vmax.f32 %v154, 0.0
  %v161 = vmax.f32 %v156, 0.0
  %v162 = vpack.c.bf16 %v158, %v158
  %v163 = vpack.c.bf16 %v159, %v159
  %v164 = vpack.c.bf16 %v160, %v160
  %v165 = vpack.c.bf16 %v161, %v161
  %vm166 = vcmask 257024
  %167 = vst.msk [vmem:[%s3] sm:$0xf] %vm166, %v162
  %168 = vst.msk [vmem:[%s3 + $0x4] sm:$0xf] %vm166, %v163
  %169 = vst.msk [vmem:[%s3 + $0x8] sm:$0xf] %vm166, %v164
  %170 = vst.msk [vmem:[%s3 + $0xc] sm:$0xf] %vm166, %v165
  // Predicated region
  $region14: #{forward.5} parent=0 // pred_check
    _
  $region15: #{forward.5} parent=0 // pred_check_branch
    %172 = sbr.rel (0) target = $region17
  $region16: #{forward.5} parent=0 // pred_region
    _
  $region17: #{forward.5} parent=0 // pred_fallthru
    _
  // Predicated region
  $region18: #{forward.5} parent=0 // pred_check
    _
  $region19: #{forward.5} parent=0 // pred_check_branch
    %174 = sbr.rel (0) target = $region21
  $region20: #{forward.5} parent=0 // pred_region
    _
  $region21: #{forward.5} parent=0 // pred_fallthru
    _

// kernel: forward.6
$region0: #{forward.6}
  #allocation0 [shape = 'u32[]', space=smem, size = 0x4, offset = 0x4, fixed_abs, tag = 'smem constant byte address 0x4 - core index']
  #allocation1 [shape = 'u32[72,128]{1,0:T(1,128)}', space=vmem, size = 0x9000, scoped, tag = 'internal scratch']
  %s0 = inlined_call_operand.vmem [shape: bf16[2,16,32], index: 0, kind: input, shape index: {}]
  %s1 = inlined_call_operand.vmem [shape: bf16[32,32], index: 1, kind: input, shape index: {}]
  %s2 = inlined_call_operand.vmem [shape: f32[1,32], index: 2, kind: input, shape index: {}]
  %s3 = inlined_call_operand.vmem [shape: bf16[2,32], index: 3, kind: output, shape index: {}]
  %s4 = sld [smem:[#allocation0]]
  $region22: #{forward.6} parent=0
    _
  %s6 = ssub.s32 1, %s4
  %s7 = scalar_select 0, %s6, %s4
  // Predicated region
  $region2: #{forward.6} parent=0 // pred_check
    _
  $region3: #{forward.6} parent=0 // pred_check_branch
    %9 = sbr.rel (0) target = $region5
  $region4: #{forward.6} parent=0 // pred_region
    _
  $region5: #{forward.6} parent=0 // pred_fallthru
    _
  // Predicated region
  $region6: #{forward.6} parent=0 // pred_check
    _
  $region7: #{forward.6} parent=0 // pred_check_branch
    %11 = sbr.rel (0) target = $region9
  $region8: #{forward.6} parent=0 // pred_region
    _
  $region9: #{forward.6} parent=0 // pred_fallthru
    _
  // Predicated region
  $region10: #{forward.6} parent=0 // pred_check
    _
  $region11: #{forward.6} parent=0 // pred_check_branch
    %13 = sbr.rel (0) target = $region13
  $region12: #{forward.6} parent=0 // pred_region
    _
  $region13: #{forward.6} parent=0 // pred_fallthru
    _
  %v15 = vld [vmem:[%s0] sm:$0xf]
  %v16 = vld [vmem:[%s0 + $0x4] sm:$0xf]
  %v17 = vld [vmem:[%s0 + $0x8] sm:$0xf]
  %v18 = vld [vmem:[%s0 + $0xc] sm:$0xf]
  %v19 = vunpack.c.l.bf16 %v15
  %v20 = vunpack.c.l.bf16 %v16
  %v21 = vunpack.c.l.bf16 %v17
  %v22 = vunpack.c.l.bf16 %v18
  %vm23 = vcmask 261120
  %v24 = vsel %vm23, %v19, 0.0
  %v25 = vsel %vm23, %v20, 0.0
  %v26 = vadd.f32 %v24, %v25
  %v27 = vrot.slane %v26, 4
  %v28 = vadd.f32 %v26, %v27
  %v29 = vrot.slane %v28, 2
  %v30 = vadd.f32 %v28, %v29
  %v31 = vrot.slane %v30, 1
  %v32 = vadd.f32 %v30, %v31
  %v33 = vsel %vm23, %v21, 0.0
  %v34 = vsel %vm23, %v22, 0.0
  %v35 = vadd.f32 %v33, %v34
  %v36 = vrot.slane %v35, 4
  %v37 = vadd.f32 %v35, %v36
  %v38 = vrot.slane %v37, 2
  %v39 = vadd.f32 %v37, %v38
  %v40 = vrot.slane %v39, 1
  %v41 = vadd.f32 %v39, %v40
  %v42 = vrcp.pop 16.0
  %v43 = vmul.f32 16.0, %v42
  %v44 = vsub.f32 1.0, %v43
  %v45 = vmul.f32 %v42, %v44
  %v46 = vadd.f32 %v42, %v45
  %vm47 = vweird.f32 %v42
  %v48 = vsel %vm47, %v42, %v46
  %v49 = vmul.f32 %v32, %v48
  %v50 = vmul.f32 %v41, %v48
  %v51 = vpack.c.bf16 %v49, %v49
  %v52 = vpack.c.bf16 %v50, %v50
  %v53 = vld [vmem:[%s1] sm:$0xf]
  %v54 = vld [vmem:[%s1 + $0x4] sm:$0xf]
  %v55 = vld [vmem:[%s1 + $0x8] sm:$0xf]
  %v56 = vld [vmem:[%s1 + $0xc] sm:$0xf]
  %v57 = vld [vmem:[%s2] sm:$0x1]
  %v59 = vperm.slane %v57, 0
  %v63 = vunpack.c.l.b16 %v51
  %v64 = vunpack.c.l.b16 %v52
  %vm65 = vcmask 1041409
  %v66 = vsel %vm65, %v64, %v63
  %v67 = vpack.c.b16 %v66, %v66
  %v72 = vunpack.c.l.b16 %v53
  %v73 = vunpack.c.l.b16 %v54
  %v74 = vunpack.c.l.b16 %v55
  %v75 = vunpack.c.l.b16 %v56
  %v76 = vpack.c.b16 %v73, %v72
  %v77 = vpack.c.b16 %v75, %v74
  %v81 = vsel %vm23, %v67, 0
  %83 = vmatpush.bf16.msra.mxu0 0
  %84 = vmatpush.bf16.msra.mxu0 0
  %85 = vmatpush.bf16.msra.mxu0 0
  %86 = vmatpush.bf16.msra.mxu0 0
  %87 = vmatpush.bf16.msra.mxu0 0
  %88 = vmatpush.bf16.msra.mxu0 0
  %89 = vmatpush.bf16.msra.mxu0 %v77
  %90 = vmatpush.bf16.msra.mxu0 %v76
  %91 = vmatmul.bf16.gmra.mxu0 %v81
  %v92 = vpop.f32.mrf.mxu0
  %v93 = vadd.f32 %v59, %v92
  %v94 = vpop.f32.mrf.mxu0
  %95 = vdwg.mxu0
  %v96 = vmax.f32 %v93, 0.0
  %v97 = vpack.c.bf16 %v96, %v96
  %vm98 = vcmask 253952
  %99 = vst.msk [vmem:[%s3] sm:$0x1] %vm98, %v97
  // Predicated region
  $region14: #{forward.6} parent=0 // pred_check
    _
  $region15: #{forward.6} parent=0 // pred_check_branch
    %101 = sbr.rel (0) target = $region17
  $region16: #{forward.6} parent=0 // pred_region
    _
  $region17: #{forward.6} parent=0 // pred_fallthru
    _
  // Predicated region
  $region18: #{forward.6} parent=0 // pred_check
    _
  $region19: #{forward.6} parent=0 // pred_check_branch
    %103 = sbr.rel (0) target = $region21
  $region20: #{forward.6} parent=0 // pred_region
    _
  $region21: #{forward.6} parent=0 // pred_fallthru
    _

// kernel: forward.7
$region0: #{forward.7}
  #allocation0 [shape = 'u32[]', space=smem, size = 0x4, offset = 0x4, fixed_abs, tag = 'smem constant byte address 0x4 - core index']
  #allocation1 [shape = 'u32[72,128]{1,0:T(1,128)}', space=vmem, size = 0x9000, scoped, tag = 'internal scratch']
  #allocation2 [shape = 'f32[2,8,64]{2,1,0:T(8,128)}', space=vmem, size = 0x2000, scoped, tag = 'scratch operand']
  #allocation3 [shape = 'f32[1,1]{1,0:T(1,128)S(1)}', space=vmem, size = 0x200, scoped, tag = 'scoped memory for forward.7']
  %s0 = inlined_call_operand.vmem [shape: bf16[2,1,32], index: 0, kind: input, shape index: {}]
  %s1 = inlined_call_operand.vmem [shape: f32[2,8,1], index: 1, kind: input, shape index: {}]
  %s2 = inlined_call_operand.vmem [shape: f32[1,32], index: 2, kind: input, shape index: {}]
  %s3 = inlined_call_operand.vmem [shape: f32[1,32], index: 3, kind: input, shape index: {}]
  %s4 = inlined_call_operand.vmem [shape: bf16[2,64,64], index: 4, kind: input, shape index: {}]
  %s5 = inlined_call_operand.vmem [shape: f32[2,1,64], index: 5, kind: input, shape index: {}]
  %s6 = inlined_call_operand.vmem [shape: bf16[2,64,64], index: 6, kind: input, shape index: {}]
  %s7 = inlined_call_operand.vmem [shape: f32[2,1,64], index: 7, kind: input, shape index: {}]
  %s8 = inlined_call_operand.vmem [shape: bf16[2,64,64], index: 8, kind: input, shape index: {}]
  %s9 = inlined_call_operand.vmem [shape: f32[2,1,64], index: 9, kind: input, shape index: {}]
  %s10 = inlined_call_operand.vmem [shape: bf16[2,64,64], index: 10, kind: input, shape index: {}]
  %s11 = inlined_call_operand.vmem [shape: f32[2,1,64], index: 11, kind: input, shape index: {}]
  %s12 = inlined_call_operand.vmem [shape: f32[2,1,64], index: 12, kind: input, shape index: {}]
  %s13 = inlined_call_operand.vmem [shape: f32[2,1,64], index: 13, kind: input, shape index: {}]
  %s14 = inlined_call_operand.vmem [shape: bf16[2,64,256], index: 14, kind: input, shape index: {}]
  %s15 = inlined_call_operand.vmem [shape: f32[2,1,256], index: 15, kind: input, shape index: {}]
  %s16 = inlined_call_operand.vmem [shape: bf16[2,256,64], index: 16, kind: input, shape index: {}]
  %s17 = inlined_call_operand.vmem [shape: f32[2,1,64], index: 17, kind: input, shape index: {}]
  %s18 = inlined_call_operand.vmem [shape: f32[2,1,64], index: 18, kind: input, shape index: {}]
  %s19 = inlined_call_operand.vmem [shape: f32[2,1,64], index: 19, kind: input, shape index: {}]
  %s20 = inlined_call_operand.vmem [shape: bf16[64,1], index: 20, kind: input, shape index: {}]
  %s21 = inlined_call_operand.<no memory space> [shape: f32[1,1], index: 21, kind: input, shape index: {}]
  %s22 = inlined_call_operand.vmem [shape: f32[2,8,1], index: 22, kind: output, shape index: {}]
  %s23 = sld [smem:[#allocation0]]
  $region129: #{forward.7} parent=0
    _
  %s25 = ssub.s32 1, %s23
  %s26 = scalar_select 0, %s25, %s23
  %v27 = vstv %s21
  %28 = vst [vmem:[#allocation3] sm:$0x1] %v27
  loop: start=0, step=1, limit=4
  $region2: #{forward.7} parent=0 // loop_pre_header
    _
  $region3: #{forward.7} parent=0 // loop_header
    %s30 = sphi 0, %s34
    %p31 = scmp.ge.s32.totalorder %s30, 4
    %s37 = sphi 0, %s49
    %s38 = sphi 0, %s45
    %s39 = sphi 0, %s37
    %s40 = sphi 0, %s38
    %s41 = sphi 0, %s39
    %s42 = sphi 0, %s40
    %s52 = sphi 0, %s54
    %s55 = sphi 0, %s52
    %s56 = sphi 0, %s55
    %s72 = sphi 0, %s56
    %s78 = sphi 0, %s80
    %s81 = sphi 0, %s78
    %s82 = sphi 0, %s81
    %s98 = sphi 0, %s82
    %s102 = sphi 0, %s102
    %s104 = sphi 0, %s102
    %s105 = sphi 0, %s104
    %s119 = sphi 0, %s105
    %s123 = sphi 0, %s123
    %s125 = sphi 0, %s123
    %s126 = sphi 0, %s125
    %s140 = sphi 0, %s126
    %s146 = sphi 0, %s148
    %s149 = sphi 0, %s146
    %s150 = sphi 0, %s149
    %s166 = sphi 0, %s150
    %s172 = sphi 0, %s174
    %s175 = sphi 0, %s172
    %s176 = sphi 0, %s175
    %s192 = sphi 0, %s176
    %s198 = sphi 0, %s200
    %s201 = sphi 0, %s198
    %s202 = sphi 0, %s201
    %s218 = sphi 0, %s202
    %s224 = sphi 0, %s226
    %s227 = sphi 0, %s224
    %s228 = sphi 0, %s227
    %s244 = sphi 0, %s228
    %s250 = sphi 0, %s252
    %s253 = sphi 0, %s250
    %s254 = sphi 0, %s253
    %s270 = sphi 0, %s254
    %s276 = sphi 0, %s278
    %s279 = sphi 0, %s276
    %s280 = sphi 0, %s279
    %s296 = sphi 0, %s280
    %s302 = sphi 0, %s304
    %s305 = sphi 0, %s302
    %s306 = sphi 0, %s305
    %s322 = sphi 0, %s306
    %s328 = sphi 0, %s330
    %s331 = sphi 0, %s328
    %s332 = sphi 0, %s331
    %s348 = sphi 0, %s332
    %s354 = sphi 0, %s356
    %s357 = sphi 0, %s354
    %s358 = sphi 0, %s357
    %s374 = sphi 0, %s358
    %s380 = sphi 0, %s382
    %s383 = sphi 0, %s380
    %s384 = sphi 0, %s383
    %s400 = sphi 0, %s384
    %s406 = sphi 0, %s408
    %s409 = sphi 0, %s406
    %s410 = sphi 0, %s409
    %s426 = sphi 0, %s410
    %s432 = sphi 0, %s434
    %s435 = sphi 0, %s432
    %s436 = sphi 0, %s435
    %s452 = sphi 0, %s436
    %s458 = sphi 0, %s460
    %s461 = sphi 0, %s458
    %s462 = sphi 0, %s461
    %s478 = sphi 0, %s462
    %s484 = sphi 0, %s486
    %s487 = sphi 0, %s484
    %s488 = sphi 0, %s487
    %s504 = sphi 0, %s488
    %s510 = sphi 0, %s512
    %s513 = sphi 0, %s510
    %s514 = sphi 0, %s513
    %s530 = sphi 0, %s514
    %s536 = sphi 0, %s538
    %s539 = sphi 0, %s536
    %s540 = sphi 0, %s539
    %s556 = sphi 0, %s540
    %s560 = sphi 0, %s560
    %s562 = sphi 0, %s560
    %s563 = sphi 0, %s562
    %s577 = sphi 0, %s563
    %s581 = sphi 0, %s581
    %s583 = sphi 0, %s581
    %s584 = sphi 0, %s583
    %s598 = sphi 0, %s584
    %s604 = sphi 0, %s606
    %s607 = sphi 0, %s604
    %s608 = sphi 0, %s607
    %s624 = sphi 0, %s608
  $region4: #{forward.7} parent=0 // loop_header_branch
    %33 = sbr.rel (%p31) target = $region8
  $region5: #{forward.7} parent=0 // loop_body
    %s35 = ssub.s32 %s30, 1
    %s36 = ssub.s32 %s30, 2
    %s43 = sadd.s32 1, %s38
    %p44 = scmp.ge.s32.totalorder %s43, 2
    %s45 = scalar_select %p44, 0, %s43
    %s46 = sadd.s32 1, %s37
    %s47 = scalar_select %p44, %s46, %s37
    %p48 = scmp.ge.s32.totalorder %s47, 1
    %s49 = scalar_select %p48, 0, %s47
    %s50 = ssub.s32 %s37, %s49
    %p51 = scmp.eq.s32.totalorder %s50, 0
    %s53 = sadd.s32 %s52, 1
    %s54 = scalar_select %p51, %s52, %s53
    %p57 = pneg %p51
    %p58 = scmp.eq.s32.totalorder %s30, 1
    %p59 = por %p57, %p58
    %p60 = scmp.ne.s32.totalorder %s52, %s55
    %p61 = scmp.eq.s32.totalorder %s30, 0
    %p62 = por %p60, %p61
    %p63 = scmp.ne.s32.totalorder %s52, %s55
    %p64 = scmp.eq.s32.totalorder %s35, 1
    %p65 = por %p63, %p64
    %p66 = scmp.ne.s32.totalorder %s55, %s56
    %p67 = scmp.eq.s32.totalorder %s35, 0
    %p68 = por %p66, %p67
    %p69 = scmp.ne.s32.totalorder %s55, %s56
    %p70 = scmp.eq.s32.totalorder %s36, 1
    %p71 = por %p69, %p70
    %p73 = scmp.ne.s32.totalorder %s56, %s72
    %p74 = scmp.eq.s32.totalorder %s36, 0
    %p75 = por %p73, %p74
    %s76 = ssub.s32 %s37, %s49
    %p77 = scmp.eq.s32.totalorder %s76, 0
    %s79 = sadd.s32 %s78, 1
    %s80 = scalar_select %p77, %s78, %s79
    %p83 = pneg %p77
    %p84 = scmp.eq.s32.totalorder %s30, 1
    %p85 = por %p83, %p84
    %p86 = scmp.ne.s32.totalorder %s78, %s81
    %p87 = scmp.eq.s32.totalorder %s30, 0
    %p88 = por %p86, %p87
    %p89 = scmp.ne.s32.totalorder %s78, %s81
    %p90 = scmp.eq.s32.totalorder %s35, 1
    %p91 = por %p89, %p90
    %p92 = scmp.ne.s32.totalorder %s81, %s82
    %p93 = scmp.eq.s32.totalorder %s35, 0
    %p94 = por %p92, %p93
    %p95 = scmp.ne.s32.totalorder %s81, %s82
    %p96 = scmp.eq.s32.totalorder %s36, 1
    %p97 = por %p95, %p96
    %p99 = scmp.ne.s32.totalorder %s82, %s98
    %p100 = scmp.eq.s32.totalorder %s36, 0
    %p101 = por %p99, %p100
    %s103 = sadd.s32 %s102, 1
    %p106 = scmp.eq.s32.totalorder %s30, 1
    %p107 = scmp.ne.s32.totalorder %s102, %s104
    %p108 = scmp.eq.s32.totalorder %s30, 0
    %p109 = por %p107, %p108
    %p110 = scmp.ne.s32.totalorder %s102, %s104
    %p111 = scmp.eq.s32.totalorder %s35, 1
    %p112 = por %p110, %p111
    %p113 = scmp.ne.s32.totalorder %s104, %s105
    %p114 = scmp.eq.s32.totalorder %s35, 0
    %p115 = por %p113, %p114
    %p116 = scmp.ne.s32.totalorder %s104, %s105
    %p117 = scmp.eq.s32.totalorder %s36, 1
    %p118 = por %p116, %p117
    %p120 = scmp.ne.s32.totalorder %s105, %s119
    %p121 = scmp.eq.s32.totalorder %s36, 0
    %p122 = por %p120, %p121
    %s124 = sadd.s32 %s123, 1
    %p127 = scmp.eq.s32.totalorder %s30, 1
    %p128 = scmp.ne.s32.totalorder %s123, %s125
    %p129 = scmp.eq.s32.totalorder %s30, 0
    %p130 = por %p128, %p129
    %p131 = scmp.ne.s32.totalorder %s123, %s125
    %p132 = scmp.eq.s32.totalorder %s35, 1
    %p133 = por %p131, %p132
    %p134 = scmp.ne.s32.totalorder %s125, %s126
    %p135 = scmp.eq.s32.totalorder %s35, 0
    %p136 = por %p134, %p135
    %p137 = scmp.ne.s32.totalorder %s125, %s126
    %p138 = scmp.eq.s32.totalorder %s36, 1
    %p139 = por %p137, %p138
    %p141 = scmp.ne.s32.totalorder %s126, %s140
    %p142 = scmp.eq.s32.totalorder %s36, 0
    %p143 = por %p141, %p142
    %s144 = ssub.s32 %s38, %s45
    %p145 = scmp.eq.s32.totalorder %s144, 0
    %s147 = sadd.s32 %s146, 1
    %s148 = scalar_select %p145, %s146, %s147
    %p151 = pneg %p145
    %p152 = scmp.eq.s32.totalorder %s30, 1
    %p153 = por %p151, %p152
    %p154 = scmp.ne.s32.totalorder %s146, %s149
    %p155 = scmp.eq.s32.totalorder %s30, 0
    %p156 = por %p154, %p155
    %p157 = scmp.ne.s32.totalorder %s146, %s149
    %p158 = scmp.eq.s32.totalorder %s35, 1
    %p159 = por %p157, %p158
    %p160 = scmp.ne.s32.totalorder %s149, %s150
    %p161 = scmp.eq.s32.totalorder %s35, 0
    %p162 = por %p160, %p161
    %p163 = scmp.ne.s32.totalorder %s149, %s150
    %p164 = scmp.eq.s32.totalorder %s36, 1
    %p165 = por %p163, %p164
    %p167 = scmp.ne.s32.totalorder %s150, %s166
    %p168 = scmp.eq.s32.totalorder %s36, 0
    %p169 = por %p167, %p168
    %s170 = ssub.s32 %s38, %s45
    %p171 = scmp.eq.s32.totalorder %s170, 0
    %s173 = sadd.s32 %s172, 1
    %s174 = scalar_select %p171, %s172, %s173
    %p177 = pneg %p171
    %p178 = scmp.eq.s32.totalorder %s30, 1
    %p179 = por %p177, %p178
    %p180 = scmp.ne.s32.totalorder %s172, %s175
    %p181 = scmp.eq.s32.totalorder %s30, 0
    %p182 = por %p180, %p181
    %p183 = scmp.ne.s32.totalorder %s172, %s175
    %p184 = scmp.eq.s32.totalorder %s35, 1
    %p185 = por %p183, %p184
    %p186 = scmp.ne.s32.totalorder %s175, %s176
    %p187 = scmp.eq.s32.totalorder %s35, 0
    %p188 = por %p186, %p187
    %p189 = scmp.ne.s32.totalorder %s175, %s176
    %p190 = scmp.eq.s32.totalorder %s36, 1
    %p191 = por %p189, %p190
    %p193 = scmp.ne.s32.totalorder %s176, %s192
    %p194 = scmp.eq.s32.totalorder %s36, 0
    %p195 = por %p193, %p194
    %s196 = ssub.s32 %s38, %s45
    %p197 = scmp.eq.s32.totalorder %s196, 0
    %s199 = sadd.s32 %s198, 1
    %s200 = scalar_select %p197, %s198, %s199
    %p203 = pneg %p197
    %p204 = scmp.eq.s32.totalorder %s30, 1
    %p205 = por %p203, %p204
    %p206 = scmp.ne.s32.totalorder %s198, %s201
    %p207 = scmp.eq.s32.totalorder %s30, 0
    %p208 = por %p206, %p207
    %p209 = scmp.ne.s32.totalorder %s198, %s201
    %p210 = scmp.eq.s32.totalorder %s35, 1
    %p211 = por %p209, %p210
    %p212 = scmp.ne.s32.totalorder %s201, %s202
    %p213 = scmp.eq.s32.totalorder %s35, 0
    %p214 = por %p212, %p213
    %p215 = scmp.ne.s32.totalorder %s201, %s202
    %p216 = scmp.eq.s32.totalorder %s36, 1
    %p217 = por %p215, %p216
    %p219 = scmp.ne.s32.totalorder %s202, %s218
    %p220 = scmp.eq.s32.totalorder %s36, 0
    %p221 = por %p219, %p220
    %s222 = ssub.s32 %s38, %s45
    %p223 = scmp.eq.s32.totalorder %s222, 0
    %s225 = sadd.s32 %s224, 1
    %s226 = scalar_select %p223, %s224, %s225
    %p229 = pneg %p223
    %p230 = scmp.eq.s32.totalorder %s30, 1
    %p231 = por %p229, %p230
    %p232 = scmp.ne.s32.totalorder %s224, %s227
    %p233 = scmp.eq.s32.totalorder %s30, 0
    %p234 = por %p232, %p233
    %p235 = scmp.ne.s32.totalorder %s224, %s227
    %p236 = scmp.eq.s32.totalorder %s35, 1
    %p237 = por %p235, %p236
    %p238 = scmp.ne.s32.totalorder %s227, %s228
    %p239 = scmp.eq.s32.totalorder %s35, 0
    %p240 = por %p238, %p239
    %p241 = scmp.ne.s32.totalorder %s227, %s228
    %p242 = scmp.eq.s32.totalorder %s36, 1
    %p243 = por %p241, %p242
    %p245 = scmp.ne.s32.totalorder %s228, %s244
    %p246 = scmp.eq.s32.totalorder %s36, 0
    %p247 = por %p245, %p246
    %s248 = ssub.s32 %s38, %s45
    %p249 = scmp.eq.s32.totalorder %s248, 0
    %s251 = sadd.s32 %s250, 1
    %s252 = scalar_select %p249, %s250, %s251
    %p255 = pneg %p249
    %p256 = scmp.eq.s32.totalorder %s30, 1
    %p257 = por %p255, %p256
    %p258 = scmp.ne.s32.totalorder %s250, %s253
    %p259 = scmp.eq.s32.totalorder %s30, 0
    %p260 = por %p258, %p259
    %p261 = scmp.ne.s32.totalorder %s250, %s253
    %p262 = scmp.eq.s32.totalorder %s35, 1
    %p263 = por %p261, %p262
    %p264 = scmp.ne.s32.totalorder %s253, %s254
    %p265 = scmp.eq.s32.totalorder %s35, 0
    %p266 = por %p264, %p265
    %p267 = scmp.ne.s32.totalorder %s253, %s254
    %p268 = scmp.eq.s32.totalorder %s36, 1
    %p269 = por %p267, %p268
    %p271 = scmp.ne.s32.totalorder %s254, %s270
    %p272 = scmp.eq.s32.totalorder %s36, 0
    %p273 = por %p271, %p272
    %s274 = ssub.s32 %s38, %s45
    %p275 = scmp.eq.s32.totalorder %s274, 0
    %s277 = sadd.s32 %s276, 1
    %s278 = scalar_select %p275, %s276, %s277
    %p281 = pneg %p275
    %p282 = scmp.eq.s32.totalorder %s30, 1
    %p283 = por %p281, %p282
    %p284 = scmp.ne.s32.totalorder %s276, %s279
    %p285 = scmp.eq.s32.totalorder %s30, 0
    %p286 = por %p284, %p285
    %p287 = scmp.ne.s32.totalorder %s276, %s279
    %p288 = scmp.eq.s32.totalorder %s35, 1
    %p289 = por %p287, %p288
    %p290 = scmp.ne.s32.totalorder %s279, %s280
    %p291 = scmp.eq.s32.totalorder %s35, 0
    %p292 = por %p290, %p291
    %p293 = scmp.ne.s32.totalorder %s279, %s280
    %p294 = scmp.eq.s32.totalorder %s36, 1
    %p295 = por %p293, %p294
    %p297 = scmp.ne.s32.totalorder %s280, %s296
    %p298 = scmp.eq.s32.totalorder %s36, 0
    %p299 = por %p297, %p298
    %s300 = ssub.s32 %s38, %s45
    %p301 = scmp.eq.s32.totalorder %s300, 0
    %s303 = sadd.s32 %s302, 1
    %s304 = scalar_select %p301, %s302, %s303
    %p307 = pneg %p301
    %p308 = scmp.eq.s32.totalorder %s30, 1
    %p309 = por %p307, %p308
    %p310 = scmp.ne.s32.totalorder %s302, %s305
    %p311 = scmp.eq.s32.totalorder %s30, 0
    %p312 = por %p310, %p311
    %p313 = scmp.ne.s32.totalorder %s302, %s305
    %p314 = scmp.eq.s32.totalorder %s35, 1
    %p315 = por %p313, %p314
    %p316 = scmp.ne.s32.totalorder %s305, %s306
    %p317 = scmp.eq.s32.totalorder %s35, 0
    %p318 = por %p316, %p317
    %p319 = scmp.ne.s32.totalorder %s305, %s306
    %p320 = scmp.eq.s32.totalorder %s36, 1
    %p321 = por %p319, %p320
    %p323 = scmp.ne.s32.totalorder %s306, %s322
    %p324 = scmp.eq.s32.totalorder %s36, 0
    %p325 = por %p323, %p324
    %s326 = ssub.s32 %s38, %s45
    %p327 = scmp.eq.s32.totalorder %s326, 0
    %s329 = sadd.s32 %s328, 1
    %s330 = scalar_select %p327, %s328, %s329
    %p333 = pneg %p327
    %p334 = scmp.eq.s32.totalorder %s30, 1
    %p335 = por %p333, %p334
    %p336 = scmp.ne.s32.totalorder %s328, %s331
    %p337 = scmp.eq.s32.totalorder %s30, 0
    %p338 = por %p336, %p337
    %p339 = scmp.ne.s32.totalorder %s328, %s331
    %p340 = scmp.eq.s32.totalorder %s35, 1
    %p341 = por %p339, %p340
    %p342 = scmp.ne.s32.totalorder %s331, %s332
    %p343 = scmp.eq.s32.totalorder %s35, 0
    %p344 = por %p342, %p343
    %p345 = scmp.ne.s32.totalorder %s331, %s332
    %p346 = scmp.eq.s32.totalorder %s36, 1
    %p347 = por %p345, %p346
    %p349 = scmp.ne.s32.totalorder %s332, %s348
    %p350 = scmp.eq.s32.totalorder %s36, 0
    %p351 = por %p349, %p350
    %s352 = ssub.s32 %s38, %s45
    %p353 = scmp.eq.s32.totalorder %s352, 0
    %s355 = sadd.s32 %s354, 1
    %s356 = scalar_select %p353, %s354, %s355
    %p359 = pneg %p353
    %p360 = scmp.eq.s32.totalorder %s30, 1
    %p361 = por %p359, %p360
    %p362 = scmp.ne.s32.totalorder %s354, %s357
    %p363 = scmp.eq.s32.totalorder %s30, 0
    %p364 = por %p362, %p363
    %p365 = scmp.ne.s32.totalorder %s354, %s357
    %p366 = scmp.eq.s32.totalorder %s35, 1
    %p367 = por %p365, %p366
    %p368 = scmp.ne.s32.totalorder %s357, %s358
    %p369 = scmp.eq.s32.totalorder %s35, 0
    %p370 = por %p368, %p369
    %p371 = scmp.ne.s32.totalorder %s357, %s358
    %p372 = scmp.eq.s32.totalorder %s36, 1
    %p373 = por %p371, %p372
    %p375 = scmp.ne.s32.totalorder %s358, %s374
    %p376 = scmp.eq.s32.totalorder %s36, 0
    %p377 = por %p375, %p376
    %s378 = ssub.s32 %s38, %s45
    %p379 = scmp.eq.s32.totalorder %s378, 0
    %s381 = sadd.s32 %s380, 1
    %s382 = scalar_select %p379, %s380, %s381
    %p385 = pneg %p379
    %p386 = scmp.eq.s32.totalorder %s30, 1
    %p387 = por %p385, %p386
    %p388 = scmp.ne.s32.totalorder %s380, %s383
    %p389 = scmp.eq.s32.totalorder %s30, 0
    %p390 = por %p388, %p389
    %p391 = scmp.ne.s32.totalorder %s380, %s383
    %p392 = scmp.eq.s32.totalorder %s35, 1
    %p393 = por %p391, %p392
    %p394 = scmp.ne.s32.totalorder %s383, %s384
    %p395 = scmp.eq.s32.totalorder %s35, 0
    %p396 = por %p394, %p395
    %p397 = scmp.ne.s32.totalorder %s383, %s384
    %p398 = scmp.eq.s32.totalorder %s36, 1
    %p399 = por %p397, %p398
    %p401 = scmp.ne.s32.totalorder %s384, %s400
    %p402 = scmp.eq.s32.totalorder %s36, 0
    %p403 = por %p401, %p402
    %s404 = ssub.s32 %s38, %s45
    %p405 = scmp.eq.s32.totalorder %s404, 0
    %s407 = sadd.s32 %s406, 1
    %s408 = scalar_select %p405, %s406, %s407
    %p411 = pneg %p405
    %p412 = scmp.eq.s32.totalorder %s30, 1
    %p413 = por %p411, %p412
    %p414 = scmp.ne.s32.totalorder %s406, %s409
    %p415 = scmp.eq.s32.totalorder %s30, 0
    %p416 = por %p414, %p415
    %p417 = scmp.ne.s32.totalorder %s406, %s409
    %p418 = scmp.eq.s32.totalorder %s35, 1
    %p419 = por %p417, %p418
    %p420 = scmp.ne.s32.totalorder %s409, %s410
    %p421 = scmp.eq.s32.totalorder %s35, 0
    %p422 = por %p420, %p421
    %p423 = scmp.ne.s32.totalorder %s409, %s410
    %p424 = scmp.eq.s32.totalorder %s36, 1
    %p425 = por %p423, %p424
    %p427 = scmp.ne.s32.totalorder %s410, %s426
    %p428 = scmp.eq.s32.totalorder %s36, 0
    %p429 = por %p427, %p428
    %s430 = ssub.s32 %s38, %s45
    %p431 = scmp.eq.s32.totalorder %s430, 0
    %s433 = sadd.s32 %s432, 1
    %s434 = scalar_select %p431, %s432, %s433
    %p437 = pneg %p431
    %p438 = scmp.eq.s32.totalorder %s30, 1
    %p439 = por %p437, %p438
    %p440 = scmp.ne.s32.totalorder %s432, %s435
    %p441 = scmp.eq.s32.totalorder %s30, 0
    %p442 = por %p440, %p441
    %p443 = scmp.ne.s32.totalorder %s432, %s435
    %p444 = scmp.eq.s32.totalorder %s35, 1
    %p445 = por %p443, %p444
    %p446 = scmp.ne.s32.totalorder %s435, %s436
    %p447 = scmp.eq.s32.totalorder %s35, 0
    %p448 = por %p446, %p447
    %p449 = scmp.ne.s32.totalorder %s435, %s436
    %p450 = scmp.eq.s32.totalorder %s36, 1
    %p451 = por %p449, %p450
    %p453 = scmp.ne.s32.totalorder %s436, %s452
    %p454 = scmp.eq.s32.totalorder %s36, 0
    %p455 = por %p453, %p454
    %s456 = ssub.s32 %s38, %s45
    %p457 = scmp.eq.s32.totalorder %s456, 0
    %s459 = sadd.s32 %s458, 1
    %s460 = scalar_select %p457, %s458, %s459
    %p463 = pneg %p457
    %p464 = scmp.eq.s32.totalorder %s30, 1
    %p465 = por %p463, %p464
    %p466 = scmp.ne.s32.totalorder %s458, %s461
    %p467 = scmp.eq.s32.totalorder %s30, 0
    %p468 = por %p466, %p467
    %p469 = scmp.ne.s32.totalorder %s458, %s461
    %p470 = scmp.eq.s32.totalorder %s35, 1
    %p471 = por %p469, %p470
    %p472 = scmp.ne.s32.totalorder %s461, %s462
    %p473 = scmp.eq.s32.totalorder %s35, 0
    %p474 = por %p472, %p473
    %p475 = scmp.ne.s32.totalorder %s461, %s462
    %p476 = scmp.eq.s32.totalorder %s36, 1
    %p477 = por %p475, %p476
    %p479 = scmp.ne.s32.totalorder %s462, %s478
    %p480 = scmp.eq.s32.totalorder %s36, 0
    %p481 = por %p479, %p480
    %s482 = ssub.s32 %s38, %s45
    %p483 = scmp.eq.s32.totalorder %s482, 0
    %s485 = sadd.s32 %s484, 1
    %s486 = scalar_select %p483, %s484, %s485
    %p489 = pneg %p483
    %p490 = scmp.eq.s32.totalorder %s30, 1
    %p491 = por %p489, %p490
    %p492 = scmp.ne.s32.totalorder %s484, %s487
    %p493 = scmp.eq.s32.totalorder %s30, 0
    %p494 = por %p492, %p493
    %p495 = scmp.ne.s32.totalorder %s484, %s487
    %p496 = scmp.eq.s32.totalorder %s35, 1
    %p497 = por %p495, %p496
    %p498 = scmp.ne.s32.totalorder %s487, %s488
    %p499 = scmp.eq.s32.totalorder %s35, 0
    %p500 = por %p498, %p499
    %p501 = scmp.ne.s32.totalorder %s487, %s488
    %p502 = scmp.eq.s32.totalorder %s36, 1
    %p503 = por %p501, %p502
    %p505 = scmp.ne.s32.totalorder %s488, %s504
    %p506 = scmp.eq.s32.totalorder %s36, 0
    %p507 = por %p505, %p506
    %s508 = ssub.s32 %s38, %s45
    %p509 = scmp.eq.s32.totalorder %s508, 0
    %s511 = sadd.s32 %s510, 1
    %s512 = scalar_select %p509, %s510, %s511
    %p515 = pneg %p509
    %p516 = scmp.eq.s32.totalorder %s30, 1
    %p517 = por %p515, %p516
    %p518 = scmp.ne.s32.totalorder %s510, %s513
    %p519 = scmp.eq.s32.totalorder %s30, 0
    %p520 = por %p518, %p519
    %p521 = scmp.ne.s32.totalorder %s510, %s513
    %p522 = scmp.eq.s32.totalorder %s35, 1
    %p523 = por %p521, %p522
    %p524 = scmp.ne.s32.totalorder %s513, %s514
    %p525 = scmp.eq.s32.totalorder %s35, 0
    %p526 = por %p524, %p525
    %p527 = scmp.ne.s32.totalorder %s513, %s514
    %p528 = scmp.eq.s32.totalorder %s36, 1
    %p529 = por %p527, %p528
    %p531 = scmp.ne.s32.totalorder %s514, %s530
    %p532 = scmp.eq.s32.totalorder %s36, 0
    %p533 = por %p531, %p532
    %s534 = ssub.s32 %s38, %s45
    %p535 = scmp.eq.s32.totalorder %s534, 0
    %s537 = sadd.s32 %s536, 1
    %s538 = scalar_select %p535, %s536, %s537
    %p541 = pneg %p535
    %p542 = scmp.eq.s32.totalorder %s30, 1
    %p543 = por %p541, %p542
    %p544 = scmp.ne.s32.totalorder %s536, %s539
    %p545 = scmp.eq.s32.totalorder %s30, 0
    %p546 = por %p544, %p545
    %p547 = scmp.ne.s32.totalorder %s536, %s539
    %p548 = scmp.eq.s32.totalorder %s35, 1
    %p549 = por %p547, %p548
    %p550 = scmp.ne.s32.totalorder %s539, %s540
    %p551 = scmp.eq.s32.totalorder %s35, 0
    %p552 = por %p550, %p551
    %p553 = scmp.ne.s32.totalorder %s539, %s540
    %p554 = scmp.eq.s32.totalorder %s36, 1
    %p555 = por %p553, %p554
    %p557 = scmp.ne.s32.totalorder %s540, %s556
    %p558 = scmp.eq.s32.totalorder %s36, 0
    %p559 = por %p557, %p558
    %s561 = sadd.s32 %s560, 1
    %p564 = scmp.eq.s32.totalorder %s30, 1
    %p565 = scmp.ne.s32.totalorder %s560, %s562
    %p566 = scmp.eq.s32.totalorder %s30, 0
    %p567 = por %p565, %p566
    %p568 = scmp.ne.s32.totalorder %s560, %s562
    %p569 = scmp.eq.s32.totalorder %s35, 1
    %p570 = por %p568, %p569
    %p571 = scmp.ne.s32.totalorder %s562, %s563
    %p572 = scmp.eq.s32.totalorder %s35, 0
    %p573 = por %p571, %p572
    %p574 = scmp.ne.s32.totalorder %s562, %s563
    %p575 = scmp.eq.s32.totalorder %s36, 1
    %p576 = por %p574, %p575
    %p578 = scmp.ne.s32.totalorder %s563, %s577
    %p579 = scmp.eq.s32.totalorder %s36, 0
    %p580 = por %p578, %p579
    %s582 = sadd.s32 %s581, 1
    %p585 = scmp.eq.s32.totalorder %s30, 1
    %p586 = scmp.ne.s32.totalorder %s581, %s583
    %p587 = scmp.eq.s32.totalorder %s30, 0
    %p588 = por %p586, %p587
    %p589 = scmp.ne.s32.totalorder %s581, %s583
    %p590 = scmp.eq.s32.totalorder %s35, 1
    %p591 = por %p589, %p590
    %p592 = scmp.ne.s32.totalorder %s583, %s584
    %p593 = scmp.eq.s32.totalorder %s35, 0
    %p594 = por %p592, %p593
    %p595 = scmp.ne.s32.totalorder %s583, %s584
    %p596 = scmp.eq.s32.totalorder %s36, 1
    %p597 = por %p595, %p596
    %p599 = scmp.ne.s32.totalorder %s584, %s598
    %p600 = scmp.eq.s32.totalorder %s36, 0
    %p601 = por %p599, %p600
    %s602 = ssub.s32 %s37, %s49
    %p603 = scmp.eq.s32.totalorder %s602, 0
    %s605 = sadd.s32 %s604, 1
    %s606 = scalar_select %p603, %s604, %s605
    %p609 = pneg %p603
    %p610 = scmp.eq.s32.totalorder %s30, 1
    %p611 = por %p609, %p610
    %p612 = scmp.ne.s32.totalorder %s604, %s607
    %p613 = scmp.eq.s32.totalorder %s30, 0
    %p614 = por %p612, %p613
    %p615 = scmp.ne.s32.totalorder %s604, %s607
    %p616 = scmp.eq.s32.totalorder %s35, 1
    %p617 = por %p615, %p616
    %p618 = scmp.ne.s32.totalorder %s607, %s608
    %p619 = scmp.eq.s32.totalorder %s35, 0
    %p620 = por %p618, %p619
    %p621 = scmp.ne.s32.totalorder %s607, %s608
    %p622 = scmp.eq.s32.totalorder %s36, 1
    %p623 = por %p621, %p622
    %p625 = scmp.ne.s32.totalorder %s608, %s624
    %p626 = scmp.eq.s32.totalorder %s36, 0
    %p627 = por %p625, %p626
    %p628 = scmp.le.s32.totalorder 1, %s30
    %p629 = scmp.lt.s32.totalorder %s30, 3
    %p630 = pnand %p628, %p629
    %p631 = pneg %p630
    // Predicated region
    $region9: #{forward.7} parent=5 // pred_check
      _
    $region10: #{forward.7} parent=5 // pred_check_branch
      %633 = sbr.rel (%p630) target = $region12
    $region11: #{forward.7} parent=5 // pred_region
      %s634 = ssub.s32 %s30, 1
      // Predicated region
      $region13: #{forward.7} parent=11 // pred_check
        %p635 = pneg %p68
      $region14: #{forward.7} parent=11 // pred_check_branch
        %637 = sbr.rel (%p635) target = $region16
      $region15: #{forward.7} parent=11 // pred_region
        %s638 = smul.u32 2, %s39
        %p639 = scmp.lt.s32.totalorder %s638, 1
        %s640 = scalar_select %p639, %s638, 1
        %s641 = scalar_lea.vmem %s0, %s640
        %s642 = smul.u32 2, %s39
      $region16: #{forward.7} parent=11 // pred_fallthru
        _
      // Predicated region
      $region17: #{forward.7} parent=11 // pred_check
        %p643 = pneg %p94
      $region18: #{forward.7} parent=11 // pred_check_branch
        %645 = sbr.rel (%p643) target = $region20
      $region19: #{forward.7} parent=11 // pred_region
        %s646 = smul.u32 2, %s39
        %p647 = scmp.lt.s32.totalorder %s646, 1
        %s648 = scalar_select %p647, %s646, 1
        %s649 = smul.addr %s648, 8
        %s650 = scalar_lea.vmem %s1, %s649
        %s651 = smul.u32 2, %s39
      $region20: #{forward.7} parent=11 // pred_fallthru
        _
      // Predicated region
      $region21: #{forward.7} parent=11 // pred_check
        %p652 = pneg %p115
      $region22: #{forward.7} parent=11 // pred_check_branch
        %654 = sbr.rel (%p652) target = $region24
      $region23: #{forward.7} parent=11 // pred_region
        _
      $region24: #{forward.7} parent=11 // pred_fallthru
        _
      // Predicated region
      $region25: #{forward.7} parent=11 // pred_check
        %p655 = pneg %p136
      $region26: #{forward.7} parent=11 // pred_check_branch
        %657 = sbr.rel (%p655) target = $region28
      $region27: #{forward.7} parent=11 // pred_region
        _
      $region28: #{forward.7} parent=11 // pred_fallthru
        _
      // Predicated region
      $region29: #{forward.7} parent=11 // pred_check
        %p658 = pneg %p573
      $region30: #{forward.7} parent=11 // pred_check_branch
        %660 = sbr.rel (%p658) target = $region32
      $region31: #{forward.7} parent=11 // pred_region
        _
      $region32: #{forward.7} parent=11 // pred_fallthru
        _
      // Predicated region
      $region33: #{forward.7} parent=11 // pred_check
        %p661 = pneg %p594
      $region34: #{forward.7} parent=11 // pred_check_branch
        %663 = sbr.rel (%p661) target = $region36
      $region35: #{forward.7} parent=11 // pred_region
        _
      $region36: #{forward.7} parent=11 // pred_fallthru
        _
    $region12: #{forward.7} parent=5 // pred_fallthru
      _
    %p664 = scmp.lt.s32.totalorder %s30, 2
    // Predicated region
    $region37: #{forward.7} parent=5 // pred_check
      %p665 = pneg %p664
    $region38: #{forward.7} parent=5 // pred_check_branch
      %667 = sbr.rel (%p665) target = $region40
    $region39: #{forward.7} parent=5 // pred_region
      // Predicated region
      $region41: #{forward.7} parent=39 // pred_check
        %p668 = pneg %p156
      $region42: #{forward.7} parent=39 // pred_check_branch
        %670 = sbr.rel (%p668) target = $region44
      $region43: #{forward.7} parent=39 // pred_region
        %p671 = scmp.lt.s32.totalorder %s38, 1
        %s672 = scalar_select %p671, %s38, 1
        %s673 = smul.addr %s672, 8
        %s674 = smul.addr %s673, 4
        %s675 = scalar_lea.vmem %s4, %s674
      $region44: #{forward.7} parent=39 // pred_fallthru
        _
      // Predicated region
      $region45: #{forward.7} parent=39 // pred_check
        %p676 = pneg %p182
      $region46: #{forward.7} parent=39 // pred_check_branch
        %678 = sbr.rel (%p676) target = $region48
      $region47: #{forward.7} parent=39 // pred_region
        %p679 = scmp.lt.s32.totalorder %s38, 1
        %s680 = scalar_select %p679, %s38, 1
        %s681 = scalar_lea.vmem %s5, %s680
      $region48: #{forward.7} parent=39 // pred_fallthru
        _
      // Predicated region
      $region49: #{forward.7} parent=39 // pred_check
        %p682 = pneg %p208
      $region50: #{forward.7} parent=39 // pred_check_branch
        %684 = sbr.rel (%p682) target = $region52
      $region51: #{forward.7} parent=39 // pred_region
        %p685 = scmp.lt.s32.totalorder %s38, 1
        %s686 = scalar_select %p685, %s38, 1
        %s687 = smul.addr %s686, 8
        %s688 = smul.addr %s687, 4
        %s689 = scalar_lea.vmem %s6, %s688
      $region52: #{forward.7} parent=39 // pred_fallthru
        _
      // Predicated region
      $region53: #{forward.7} parent=39 // pred_check
        %p690 = pneg %p234
      $region54: #{forward.7} parent=39 // pred_check_branch
        %692 = sbr.rel (%p690) target = $region56
      $region55: #{forward.7} parent=39 // pred_region
        %p693 = scmp.lt.s32.totalorder %s38, 1
        %s694 = scalar_select %p693, %s38, 1
        %s695 = scalar_lea.vmem %s7, %s694
      $region56: #{forward.7} parent=39 // pred_fallthru
        _
      // Predicated region
      $region57: #{forward.7} parent=39 // pred_check
        %p696 = pneg %p260
      $region58: #{forward.7} parent=39 // pred_check_branch
        %698 = sbr.rel (%p696) target = $region60
      $region59: #{forward.7} parent=39 // pred_region
        %p699 = scmp.lt.s32.totalorder %s38, 1
        %s700 = scalar_select %p699, %s38, 1
        %s701 = smul.addr %s700, 8
        %s702 = smul.addr %s701, 4
        %s703 = scalar_lea.vmem %s8, %s702
      $region60: #{forward.7} parent=39 // pred_fallthru
        _
      // Predicated region
      $region61: #{forward.7} parent=39 // pred_check
        %p704 = pneg %p286
      $region62: #{forward.7} parent=39 // pred_check_branch
        %706 = sbr.rel (%p704) target = $region64
      $region63: #{forward.7} parent=39 // pred_region
        %p707 = scmp.lt.s32.totalorder %s38, 1
        %s708 = scalar_select %p707, %s38, 1
        %s709 = scalar_lea.vmem %s9, %s708
      $region64: #{forward.7} parent=39 // pred_fallthru
        _
      // Predicated region
      $region65: #{forward.7} parent=39 // pred_check
        %p710 = pneg %p312
      $region66: #{forward.7} parent=39 // pred_check_branch
        %712 = sbr.rel (%p710) target = $region68
      $region67: #{forward.7} parent=39 // pred_region
        %p713 = scmp.lt.s32.totalorder %s38, 1
        %s714 = scalar_select %p713, %s38, 1
        %s715 = smul.addr %s714, 8
        %s716 = smul.addr %s715, 4
        %s717 = scalar_lea.vmem %s10, %s716
      $region68: #{forward.7} parent=39 // pred_fallthru
        _
      // Predicated region
      $region69: #{forward.7} parent=39 // pred_check
        %p718 = pneg %p338
      $region70: #{forward.7} parent=39 // pred_check_branch
        %720 = sbr.rel (%p718) target = $region72
      $region71: #{forward.7} parent=39 // pred_region
        %p721 = scmp.lt.s32.totalorder %s38, 1
        %s722 = scalar_select %p721, %s38, 1
        %s723 = scalar_lea.vmem %s11, %s722
      $region72: #{forward.7} parent=39 // pred_fallthru
        _
      // Predicated region
      $region73: #{forward.7} parent=39 // pred_check
        %p724 = pneg %p364
      $region74: #{forward.7} parent=39 // pred_check_branch
        %726 = sbr.rel (%p724) target = $region76
      $region75: #{forward.7} parent=39 // pred_region
        %p727 = scmp.lt.s32.totalorder %s38, 1
        %s728 = scalar_select %p727, %s38, 1
        %s729 = scalar_lea.vmem %s12, %s728
      $region76: #{forward.7} parent=39 // pred_fallthru
        _
      // Predicated region
      $region77: #{forward.7} parent=39 // pred_check
        %p730 = pneg %p390
      $region78: #{forward.7} parent=39 // pred_check_branch
        %732 = sbr.rel (%p730) target = $region80
      $region79: #{forward.7} parent=39 // pred_region
        %p733 = scmp.lt.s32.totalorder %s38, 1
        %s734 = scalar_select %p733, %s38, 1
        %s735 = scalar_lea.vmem %s13, %s734
      $region80: #{forward.7} parent=39 // pred_fallthru
        _
      // Predicated region
      $region81: #{forward.7} parent=39 // pred_check
        %p736 = pneg %p416
      $region82: #{forward.7} parent=39 // pred_check_branch
        %738 = sbr.rel (%p736) target = $region84
      $region83: #{forward.7} parent=39 // pred_region
        %p739 = scmp.lt.s32.totalorder %s38, 1
        %s740 = scalar_select %p739, %s38, 1
        %s741 = smul.addr %s740, 16
        %s742 = smul.addr %s741, 4
        %s743 = scalar_lea.vmem %s14, %s742
      $region84: #{forward.7} parent=39 // pred_fallthru
        _
      // Predicated region
      $region85: #{forward.7} parent=39 // pred_check
        %p744 = pneg %p442
      $region86: #{forward.7} parent=39 // pred_check_branch
        %746 = sbr.rel (%p744) target = $region88
      $region87: #{forward.7} parent=39 // pred_region
        %p747 = scmp.lt.s32.totalorder %s38, 1
        %s748 = scalar_select %p747, %s38, 1
        %s749 = smul.addr %s748, 2
        %s750 = scalar_lea.vmem %s15, %s749
      $region88: #{forward.7} parent=39 // pred_fallthru
        _
      // Predicated region
      $region89: #{forward.7} parent=39 // pred_check
        %p751 = pneg %p468
      $region90: #{forward.7} parent=39 // pred_check_branch
        %753 = sbr.rel (%p751) target = $region92
      $region91: #{forward.7} parent=39 // pred_region
        %p754 = scmp.lt.s32.totalorder %s38, 1
        %s755 = scalar_select %p754, %s38, 1
        %s756 = smul.addr %s755, 32
        %s757 = smul.addr %s756, 4
        %s758 = scalar_lea.vmem %s16, %s757
      $region92: #{forward.7} parent=39 // pred_fallthru
        _
      // Predicated region
      $region93: #{forward.7} parent=39 // pred_check
        %p759 = pneg %p494
      $region94: #{forward.7} parent=39 // pred_check_branch
        %761 = sbr.rel (%p759) target = $region96
      $region95: #{forward.7} parent=39 // pred_region
        %p762 = scmp.lt.s32.totalorder %s38, 1
        %s763 = scalar_select %p762, %s38, 1
        %s764 = scalar_lea.vmem %s17, %s763
      $region96: #{forward.7} parent=39 // pred_fallthru
        _
      // Predicated region
      $region97: #{forward.7} parent=39 // pred_check
        %p765 = pneg %p520
      $region98: #{forward.7} parent=39 // pred_check_branch
        %767 = sbr.rel (%p765) target = $region100
      $region99: #{forward.7} parent=39 // pred_region
        %p768 = scmp.lt.s32.totalorder %s38, 1
        %s769 = scalar_select %p768, %s38, 1
        %s770 = scalar_lea.vmem %s18, %s769
      $region100: #{forward.7} parent=39 // pred_fallthru
        _
      // Predicated region
      $region101: #{forward.7} parent=39 // pred_check
        %p771 = pneg %p546
      $region102: #{forward.7} parent=39 // pred_check_branch
        %773 = sbr.rel (%p771) target = $region104
      $region103: #{forward.7} parent=39 // pred_region
        %p774 = scmp.lt.s32.totalorder %s38, 1
        %s775 = scalar_select %p774, %s38, 1
        %s776 = scalar_lea.vmem %s19, %s775
      $region104: #{forward.7} parent=39 // pred_fallthru
        _
    $region40: #{forward.7} parent=5 // pred_fallthru
      _
    %p777 = scmp.le.s32.totalorder 1, %s30
    %p778 = scmp.lt.s32.totalorder %s30, 3
    %p779 = pnand %p777, %p778
    %p780 = pneg %p779
    // Predicated region
    $region105: #{forward.7} parent=5 // pred_check
      _
    $region106: #{forward.7} parent=5 // pred_check_branch
      %782 = sbr.rel (%p779) target = $region108
    $region107: #{forward.7} parent=5 // pred_region
      %s783 = ssub.s32 %s30, 1
      %s784 = smul.u32 2, %s39
      %p785 = scmp.lt.s32.totalorder %s784, 1
      %s786 = scalar_select %p785, %s784, 1
      %s787 = scalar_lea.vmem %s0, %s786
      %p788 = pneg %p68
      %p789 = pneg %p65
      %s790 = smul.u32 2, %s39
      %p791 = scmp.lt.s32.totalorder %s790, 1
      %s792 = scalar_select %p791, %s790, 1
      %s793 = smul.addr %s792, 8
      %s794 = scalar_lea.vmem %s1, %s793
      %p795 = pneg %p94
      %p796 = pneg %p91
      %p797 = pneg %p115
      %p798 = pneg %p112
      %p799 = pneg %p136
      %p800 = pneg %p133
      %p801 = scmp.lt.s32.totalorder %s40, 1
      %s802 = scalar_select %p801, %s40, 1
      %s803 = smul.addr %s802, 8
      %s804 = smul.addr %s803, 4
      %s805 = scalar_lea.vmem %s4, %s804
      %p806 = pneg %p162
      %p807 = pneg %p159
      %p808 = scmp.lt.s32.totalorder %s40, 1
      %s809 = scalar_select %p808, %s40, 1
      %s810 = scalar_lea.vmem %s5, %s809
      %p811 = pneg %p188
      %p812 = pneg %p185
      %p813 = scmp.lt.s32.totalorder %s40, 1
      %s814 = scalar_select %p813, %s40, 1
      %s815 = smul.addr %s814, 8
      %s816 = smul.addr %s815, 4
      %s817 = scalar_lea.vmem %s6, %s816
      %p818 = pneg %p214
      %p819 = pneg %p211
      %p820 = scmp.lt.s32.totalorder %s40, 1
      %s821 = scalar_select %p820, %s40, 1
      %s822 = scalar_lea.vmem %s7, %s821
      %p823 = pneg %p240
      %p824 = pneg %p237
      %p825 = scmp.lt.s32.totalorder %s40, 1
      %s826 = scalar_select %p825, %s40, 1
      %s827 = smul.addr %s826, 8
      %s828 = smul.addr %s827, 4
      %s829 = scalar_lea.vmem %s8, %s828
      %p830 = pneg %p266
      %p831 = pneg %p263
      %p832 = scmp.lt.s32.totalorder %s40, 1
      %s833 = scalar_select %p832, %s40, 1
      %s834 = scalar_lea.vmem %s9, %s833
      %p835 = pneg %p292
      %p836 = pneg %p289
      %p837 = scmp.lt.s32.totalorder %s40, 1
      %s838 = scalar_select %p837, %s40, 1
      %s839 = smul.addr %s838, 8
      %s840 = smul.addr %s839, 4
      %s841 = scalar_lea.vmem %s10, %s840
      %p842 = pneg %p318
      %p843 = pneg %p315
      %p844 = scmp.lt.s32.totalorder %s40, 1
      %s845 = scalar_select %p844, %s40, 1
      %s846 = scalar_lea.vmem %s11, %s845
      %p847 = pneg %p344
      %p848 = pneg %p341
      %p849 = scmp.lt.s32.totalorder %s40, 1
      %s850 = scalar_select %p849, %s40, 1
      %s851 = scalar_lea.vmem %s12, %s850
      %p852 = pneg %p370
      %p853 = pneg %p367
      %p854 = scmp.lt.s32.totalorder %s40, 1
      %s855 = scalar_select %p854, %s40, 1
      %s856 = scalar_lea.vmem %s13, %s855
      %p857 = pneg %p396
      %p858 = pneg %p393
      %p859 = scmp.lt.s32.totalorder %s40, 1
      %s860 = scalar_select %p859, %s40, 1
      %s861 = smul.addr %s860, 16
      %s862 = smul.addr %s861, 4
      %s863 = scalar_lea.vmem %s14, %s862
      %p864 = pneg %p422
      %p865 = pneg %p419
      %p866 = scmp.lt.s32.totalorder %s40, 1
      %s867 = scalar_select %p866, %s40, 1
      %s868 = smul.addr %s867, 2
      %s869 = scalar_lea.vmem %s15, %s868
      %p870 = pneg %p448
      %p871 = pneg %p445
      %p872 = scmp.lt.s32.totalorder %s40, 1
      %s873 = scalar_select %p872, %s40, 1
      %s874 = smul.addr %s873, 32
      %s875 = smul.addr %s874, 4
      %s876 = scalar_lea.vmem %s16, %s875
      %p877 = pneg %p474
      %p878 = pneg %p471
      %p879 = scmp.lt.s32.totalorder %s40, 1
      %s880 = scalar_select %p879, %s40, 1
      %s881 = scalar_lea.vmem %s17, %s880
      %p882 = pneg %p500
      %p883 = pneg %p497
      %p884 = scmp.lt.s32.totalorder %s40, 1
      %s885 = scalar_select %p884, %s40, 1
      %s886 = scalar_lea.vmem %s18, %s885
      %p887 = pneg %p526
      %p888 = pneg %p523
      %p889 = scmp.lt.s32.totalorder %s40, 1
      %s890 = scalar_select %p889, %s40, 1
      %s891 = scalar_lea.vmem %s19, %s890
      %p892 = pneg %p552
      %p893 = pneg %p549
      %p894 = pneg %p573
      %p895 = pneg %p570
      %p896 = pneg %p594
      %p897 = pneg %p591
      %p898 = pneg %p620
      %p899 = pneg %p617
      %s900 = smul.u32 2, %s39
      %p901 = scmp.lt.s32.totalorder %s900, 1
      %s902 = scalar_select %p901, %s900, 1
      %s903 = smul.addr %s902, 8
      %s904 = scalar_lea.vmem %s22, %s903
      %s905 = smul.u32 2, %s39
      %p906 = scmp.lt.s32.totalorder %s905, 1
      %s907 = scalar_select %p906, %s905, 1
      %s908 = scalar_lea.vmem %s0, %s907
      %s909 = smul.u32 2, %s39
      %s910 = smul.u32 2, %s39
      %p911 = scmp.lt.s32.totalorder %s910, 1
      %s912 = scalar_select %p911, %s910, 1
      %s913 = smul.addr %s912, 8
      %s914 = scalar_lea.vmem %s1, %s913
      %s915 = smul.u32 2, %s39
      %p916 = scmp.lt.s32.totalorder %s40, 1
      %s917 = scalar_select %p916, %s40, 1
      %s918 = smul.addr %s917, 8
      %s919 = smul.addr %s918, 4
      %s920 = scalar_lea.vmem %s4, %s919
      %p921 = scmp.lt.s32.totalorder %s40, 1
      %s922 = scalar_select %p921, %s40, 1
      %s923 = scalar_lea.vmem %s5, %s922
      %p924 = scmp.lt.s32.totalorder %s40, 1
      %s925 = scalar_select %p924, %s40, 1
      %s926 = smul.addr %s925, 8
      %s927 = smul.addr %s926, 4
      %s928 = scalar_lea.vmem %s6, %s927
      %p929 = scmp.lt.s32.totalorder %s40, 1
      %s930 = scalar_select %p929, %s40, 1
      %s931 = scalar_lea.vmem %s7, %s930
      %p932 = scmp.lt.s32.totalorder %s40, 1
      %s933 = scalar_select %p932, %s40, 1
      %s934 = smul.addr %s933, 8
      %s935 = smul.addr %s934, 4
      %s936 = scalar_lea.vmem %s8, %s935
      %p937 = scmp.lt.s32.totalorder %s40, 1
      %s938 = scalar_select %p937, %s40, 1
      %s939 = scalar_lea.vmem %s9, %s938
      %p940 = scmp.lt.s32.totalorder %s40, 1
      %s941 = scalar_select %p940, %s40, 1
      %s942 = smul.addr %s941, 8
      %s943 = smul.addr %s942, 4
      %s944 = scalar_lea.vmem %s10, %s943
      %p945 = scmp.lt.s32.totalorder %s40, 1
      %s946 = scalar_select %p945, %s40, 1
      %s947 = scalar_lea.vmem %s11, %s946
      %p948 = scmp.lt.s32.totalorder %s40, 1
      %s949 = scalar_select %p948, %s40, 1
      %s950 = scalar_lea.vmem %s12, %s949
      %p951 = scmp.lt.s32.totalorder %s40, 1
      %s952 = scalar_select %p951, %s40, 1
      %s953 = scalar_lea.vmem %s13, %s952
      %p954 = scmp.lt.s32.totalorder %s40, 1
      %s955 = scalar_select %p954, %s40, 1
      %s956 = smul.addr %s955, 16
      %s957 = smul.addr %s956, 4
      %s958 = scalar_lea.vmem %s14, %s957
      %p959 = scmp.lt.s32.totalorder %s40, 1
      %s960 = scalar_select %p959, %s40, 1
      %s961 = smul.addr %s960, 2
      %s962 = scalar_lea.vmem %s15, %s961
      %p963 = scmp.lt.s32.totalorder %s40, 1
      %s964 = scalar_select %p963, %s40, 1
      %s965 = smul.addr %s964, 32
      %s966 = smul.addr %s965, 4
      %s967 = scalar_lea.vmem %s16, %s966
      %p968 = scmp.lt.s32.totalorder %s40, 1
      %s969 = scalar_select %p968, %s40, 1
      %s970 = scalar_lea.vmem %s17, %s969
      %p971 = scmp.lt.s32.totalorder %s40, 1
      %s972 = scalar_select %p971, %s40, 1
      %s973 = scalar_lea.vmem %s18, %s972
      %p974 = scmp.lt.s32.totalorder %s40, 1
      %s975 = scalar_select %p974, %s40, 1
      %s976 = scalar_lea.vmem %s19, %s975
      %s977 = smul.u32 2, %s39
      %p978 = scmp.lt.s32.totalorder %s977, 1
      %s979 = scalar_select %p978, %s977, 1
      %s980 = smul.addr %s979, 8
      %s981 = scalar_lea.vmem %s22, %s980
      %s982 = smul.u32 2, %s39
      %p984 = scmp.eq.s32.totalorder %s40, 0
      // Predicated region
      $region109: #{forward.7} parent=107 // pred_check
        %p985 = pneg %p984
      $region110: #{forward.7} parent=107 // pred_check_branch
        %987 = sbr.rel (%p985) target = $region112
      $region111: #{forward.7} parent=107 // pred_region
        %v988 = vld [vmem:[%s908] sm:$0x1]
        %v989 = vld [vmem:[%s908 + $0x1] sm:$0x1]
        %v990 = vunpack.c.l.bf16 %v988
        %v991 = vunpack.c.l.bf16 %v989
        %v992 = vperm.slane %v990, 0
        %v993 = vperm.slane %v991, 0
        %v994 = vld [vmem:[%s914] sm:$0xff]
        %v995 = vld [vmem:[%s914 + $0x8] sm:$0xff]
        %997 = vset.pattern.permute.xlu0 0
        %998 = vperm.xlu0 %997, %v994
        %v999 = vpop.permute.xlu0 %998
        %1002 = vset.pattern.permute.xlu0 0
        %1003 = vperm.xlu0 %1002, %v995
        %v1004 = vpop.permute.xlu0 %1003
        %v1006 = vld [vmem:[%s2] sm:$0x1]
        %v1008 = vperm.slane %v1006, 0
        %v1010 = vld [vmem:[%s3] sm:$0x1]
        %v1012 = vperm.slane %v1010, 0
        %v1014 = vmul.f32 %v999, %v1008
        %v1015 = vmul.f32 %v1004, %v1008
        %v1016 = vadd.f32 %v1014, %v1012
        %v1017 = vadd.f32 %v1015, %v1012
        %v1018 = vmax.f32 %v1016, 0.0
        %v1019 = vmax.f32 %v1017, 0.0
        %1022 = vrot.lane.b32.xlu0 %v1018, 32
        %v1023 = vpop.permute.xlu0 %1022
        %1024 = vrot.lane.b32.xlu0 %v1019, 32
        %v1025 = vpop.permute.xlu0 %1024
        %vm1028 = vcmask 261120
        %v1029 = vsel %vm1028, %v992, %v1023
        %v1030 = vsel %vm1028, %v993, %v1025
        %vm1031 = vcmask 523264
        %1032 = vst.msk [vmem:[#allocation2] sm:$0xff] %vm1031, %v1029
        %1033 = vst.msk [vmem:[#allocation2 + $0x8] sm:$0xff] %vm1031, %v1030
      $region112: #{forward.7} parent=107 // pred_fallthru
        _
      %v1034 = vld [vmem:[#allocation2] sm:$0xff]
      %v1035 = vld [vmem:[#allocation2 + $0x8] sm:$0xff]
      %v1036 = vpack.c.bf16 %v1035, %v1034
      %v1037 = vld [vmem:[%s920] sm:$0xf]
      %v1038 = vld [vmem:[%s920 + $0x4] sm:$0xf]
      %v1039 = vld [vmem:[%s920 + $0x8] sm:$0xf]
      %v1040 = vld [vmem:[%s920 + $0xc] sm:$0xf]
      %v1041 = vld [vmem:[%s920 + $0x10] sm:$0xf]
      %v1042 = vld [vmem:[%s920 + $0x14] sm:$0xf]
      %v1043 = vld [vmem:[%s920 + $0x18] sm:$0xf]
      %v1044 = vld [vmem:[%s920 + $0x1c] sm:$0xf]
      %v1045 = vld [vmem:[%s923] sm:$0x1]
      %v1047 = vperm.slane %v1045, 0
      %v1057 = vunpack.c.l.b16 %v1037
      %v1058 = vunpack.c.l.b16 %v1038
      %v1059 = vunpack.c.l.b16 %v1039
      %v1060 = vunpack.c.l.b16 %v1040
      %v1061 = vunpack.c.l.b16 %v1041
      %v1062 = vunpack.c.l.b16 %v1042
      %v1063 = vunpack.c.l.b16 %v1043
      %v1064 = vunpack.c.l.b16 %v1044
      %v1065 = vpack.c.b16 %v1058, %v1057
      %v1066 = vpack.c.b16 %v1060, %v1059
      %v1067 = vpack.c.b16 %v1062, %v1061
      %v1068 = vpack.c.b16 %v1064, %v1063
      %vm1073 = vcmask 523264
      %v1075 = vsel %vm1073, %v1036, 0
      %1077 = vmatpush.bf16.msra.mxu0 0
      %1078 = vmatpush.bf16.msra.mxu0 0
      %1079 = vmatpush.bf16.msra.mxu0 0
      %1080 = vmatpush.bf16.msra.mxu0 0
      %1081 = vmatpush.bf16.msra.mxu0 %v1068
      %1082 = vmatpush.bf16.msra.mxu0 %v1067
      %1083 = vmatpush.bf16.msra.mxu0 %v1066
      %1084 = vmatpush.bf16.msra.mxu0 %v1065
      %1085 = vmatmul.bf16.gmra.mxu0 %v1075
      %v1086 = vpop.f32.mrf.mxu0
      %v1087 = vadd.f32 %v1047, %v1086
      %v1088 = vpop.f32.mrf.mxu0
      %v1089 = vadd.f32 %v1047, %v1088
      %1090 = vdwg.mxu0
      %v1091 = vld [vmem:[%s928] sm:$0xf]
      %v1092 = vld [vmem:[%s928 + $0x4] sm:$0xf]
      %v1093 = vld [vmem:[%s928 + $0x8] sm:$0xf]
      %v1094 = vld [vmem:[%s928 + $0xc] sm:$0xf]
      %v1095 = vld [vmem:[%s928 + $0x10] sm:$0xf]
      %v1096 = vld [vmem:[%s928 + $0x14] sm:$0xf]
      %v1097 = vld [vmem:[%s928 + $0x18] sm:$0xf]
      %v1098 = vld [vmem:[%s928 + $0x1c] sm:$0xf]
      %v1099 = vld [vmem:[%s931] sm:$0x1]
      %v1101 = vperm.slane %v1099, 0
      %v1111 = vunpack.c.l.b16 %v1091
      %v1112 = vunpack.c.l.b16 %v1092
      %v1113 = vunpack.c.l.b16 %v1093
      %v1114 = vunpack.c.l.b16 %v1094
      %v1115 = vunpack.c.l.b16 %v1095
      %v1116 = vunpack.c.l.b16 %v1096
      %v1117 = vunpack.c.l.b16 %v1097
      %v1118 = vunpack.c.l.b16 %v1098
      %v1119 = vpack.c.b16 %v1112, %v1111
      %v1120 = vpack.c.b16 %v1114, %v1113
      %v1121 = vpack.c.b16 %v1116, %v1115
      %v1122 = vpack.c.b16 %v1118, %v1117
      %1127 = vmatpush.bf16.msra.mxu0 0
      %1128 = vmatpush.bf16.msra.mxu0 0
      %1129 = vmatpush.bf16.msra.mxu0 0
      %1130 = vmatpush.bf16.msra.mxu0 0
      %1131 = vmatpush.bf16.msra.mxu0 %v1122
      %1132 = vmatpush.bf16.msra.mxu0 %v1121
      %1133 = vmatpush.bf16.msra.mxu0 %v1120
      %1134 = vmatpush.bf16.msra.mxu0 %v1119
      %1135 = vmatmul.bf16.gmra.mxu0 %v1075
      %v1136 = vpop.f32.mrf.mxu0
      %v1137 = vadd.f32 %v1101, %v1136
      %v1138 = vpop.f32.mrf.mxu0
      %v1139 = vadd.f32 %v1101, %v1138
      %1140 = vdwg.mxu0
      %v1141 = vld [vmem:[%s936] sm:$0xf]
      %v1142 = vld [vmem:[%s936 + $0x4] sm:$0xf]
      %v1143 = vld [vmem:[%s936 + $0x8] sm:$0xf]
      %v1144 = vld [vmem:[%s936 + $0xc] sm:$0xf]
      %v1145 = vld [vmem:[%s936 + $0x10] sm:$0xf]
      %v1146 = vld [vmem:[%s936 + $0x14] sm:$0xf]
      %v1147 = vld [vmem:[%s936 + $0x18] sm:$0xf]
      %v1148 = vld [vmem:[%s936 + $0x1c] sm:$0xf]
      %v1149 = vld [vmem:[%s939] sm:$0x1]
      %v1151 = vperm.slane %v1149, 0
      %v1161 = vunpack.c.l.b16 %v1141
      %v1162 = vunpack.c.l.b16 %v1142
      %v1163 = vunpack.c.l.b16 %v1143
      %v1164 = vunpack.c.l.b16 %v1144
      %v1165 = vunpack.c.l.b16 %v1145
      %v1166 = vunpack.c.l.b16 %v1146
      %v1167 = vunpack.c.l.b16 %v1147
      %v1168 = vunpack.c.l.b16 %v1148
      %v1169 = vpack.c.b16 %v1162, %v1161
      %v1170 = vpack.c.b16 %v1164, %v1163
      %v1171 = vpack.c.b16 %v1166, %v1165
      %v1172 = vpack.c.b16 %v1168, %v1167
      %1177 = vmatpush.bf16.msra.mxu0 0
      %1178 = vmatpush.bf16.msra.mxu0 0
      %1179 = vmatpush.bf16.msra.mxu0 0
      %1180 = vmatpush.bf16.msra.mxu0 0
      %1181 = vmatpush.bf16.msra.mxu0 %v1172
      %1182 = vmatpush.bf16.msra.mxu0 %v1171
      %1183 = vmatpush.bf16.msra.mxu0 %v1170
      %1184 = vmatpush.bf16.msra.mxu0 %v1169
      %1185 = vmatmul.bf16.gmra.mxu0 %v1075
      %v1186 = vpop.f32.mrf.mxu0
      %v1187 = vadd.f32 %v1151, %v1186
      %v1188 = vpop.f32.mrf.mxu0
      %v1189 = vadd.f32 %v1151, %v1188
      %1190 = vdwg.mxu0
      %v1191 = vpack.c.bf16 %v1087, %v1087
      %v1192 = vpack.c.bf16 %v1089, %v1089
      %v1193 = vpack.c.bf16 %v1137, %v1137
      %v1194 = vpack.c.bf16 %v1139, %v1139
      %v1195 = vpack.c.bf16 %v1187, %v1187
      %v1196 = vpack.c.bf16 %v1189, %v1189
      %vm1197 = vcmask 130048
      %v1199 = vsel %vm1197, %v1191, 0
      %v1202 = vsel %vm1197, %v1193, 0
      %1204 = vmatpush.bf16.xpose.msra.mxu0 0
      %1205 = vmatpush.bf16.xpose.msra.mxu0 0
      %1206 = vmatpush.bf16.xpose.msra.mxu0 0
      %1207 = vmatpush.bf16.xpose.msra.mxu0 0
      %1208 = vmatpush.bf16.xpose.msra.mxu0 0
      %1209 = vmatpush.bf16.xpose.msra.mxu0 0
      %1210 = vmatpush.bf16.xpose.msra.mxu0 0
      %1211 = vmatpush.bf16.xpose.msra.mxu0 %v1202
      %1212 = vmatmul.bf16.gmra.mxu0 %v1199
      %v1213 = vpop.f32.mrf.mxu0
      %v1214 = vadd.f32 0.0, %v1213
      %v1215 = vpop.f32.mrf.mxu0
      %1216 = vdwg.mxu0
      %v1218 = vsel %vm1197, %v1192, 0
      %v1221 = vsel %vm1197, %v1194, 0
      %1223 = vmatpush.bf16.xpose.msra.mxu0 0
      %1224 = vmatpush.bf16.xpose.msra.mxu0 0
      %1225 = vmatpush.bf16.xpose.msra.mxu0 0
      %1226 = vmatpush.bf16.xpose.msra.mxu0 0
      %1227 = vmatpush.bf16.xpose.msra.mxu0 0
      %1228 = vmatpush.bf16.xpose.msra.mxu0 0
      %1229 = vmatpush.bf16.xpose.msra.mxu0 0
      %1230 = vmatpush.bf16.xpose.msra.mxu0 %v1221
      %1231 = vmatmul.bf16.gmra.mxu0 %v1218
      %v1232 = vpop.f32.mrf.mxu0
      %v1233 = vadd.f32 0.0, %v1232
      %v1234 = vpop.f32.mrf.mxu0
      %1235 = vdwg.mxu0
      %vm1236 = vcmask 64512
      %v1237 = vsel %vm1236, %v1214, -inf
      %1238 = vmax.xlane.f32.xlu0 %v1237
      %v1239 = vpop.xlane.xlu0 %1238
      %v1240 = vsel %vm1236, %v1233, -inf
      %1241 = vmax.xlane.f32.xlu0 %v1240
      %v1242 = vpop.xlane.xlu0 %1241
      %v1243 = vsub.f32 %v1214, %v1239
      %v1244 = vsub.f32 %v1233, %v1242
      %v1245 = vmul.f32 %v1243, 1.442695
      %v1246 = vpow.pop %v1245
      %v1247 = vmul.f32 %v1244, 1.442695
      %v1248 = vpow.pop %v1247
      %v1249 = vsel %vm1236, %v1246, 0.0
      %1250 = vadd.xlane.f32.xlu0 %v1249
      %v1251 = vpop.xlane.xlu0 %1250
      %v1252 = vsel %vm1236, %v1248, 0.0
      %1253 = vadd.xlane.f32.xlu0 %v1252
      %v1254 = vpop.xlane.xlu0 %1253
      %v1255 = vrcp.pop %v1251
      %v1256 = vrcp.pop %v1254
      %v1257 = vmul.f32 %v1246, %v1255
      %v1258 = vmul.f32 %v1248, %v1256
      %v1259 = vpack.c.bf16 %v1257, %v1257
      %v1260 = vpack.c.bf16 %v1258, %v1258
      %v1262 = vsel %vm1236, %v1259, 0
      %vm1264 = vcmask 1043456
      %v1266 = vsel %vm1264, %v1195, 0
      %1268 = vmatpush.bf16.msra.mxu0 0
      %1269 = vmatpush.bf16.msra.mxu0 0
      %1270 = vmatpush.bf16.msra.mxu0 0
      %1271 = vmatpush.bf16.msra.mxu0 0
      %1272 = vmatpush.bf16.msra.mxu0 0
      %1273 = vmatpush.bf16.msra.mxu0 0
      %1274 = vmatpush.bf16.msra.mxu0 0
      %1275 = vmatpush.bf16.msra.mxu0 %v1266
      %1276 = vmatmul.bf16.gmra.mxu0 %v1262
      %v1277 = vpop.f32.mrf.mxu0
      %v1278 = vadd.f32 0.0, %v1277
      %v1279 = vpop.f32.mrf.mxu0
      %1280 = vdwg.mxu0
      %v1282 = vsel %vm1236, %v1260, 0
      %v1285 = vsel %vm1264, %v1196, 0
      %1287 = vmatpush.bf16.msra.mxu0 0
      %1288 = vmatpush.bf16.msra.mxu0 0
      %1289 = vmatpush.bf16.msra.mxu0 0
      %1290 = vmatpush.bf16.msra.mxu0 0
      %1291 = vmatpush.bf16.msra.mxu0 0
      %1292 = vmatpush.bf16.msra.mxu0 0
      %1293 = vmatpush.bf16.msra.mxu0 0
      %1294 = vmatpush.bf16.msra.mxu0 %v1285
      %1295 = vmatmul.bf16.gmra.mxu0 %v1282
      %v1296 = vpop.f32.mrf.mxu0
      %v1297 = vadd.f32 0.0, %v1296
      %v1298 = vpop.f32.mrf.mxu0
      %1299 = vdwg.mxu0
      %v1301 = vunpack.c.l.b16 %v1191
      %v1302 = vpack.c.b16 %v1301, %v1301
      %1303 = vrot.lane.b32.xlu0 %v1302, 112
      %v1304 = vpop.permute.xlu0 %1303
      %v1306 = vunpack.c.l.b16 %v1193
      %v1307 = vpack.c.b16 %v1306, %v1306
      %1308 = vrot.lane.b32.xlu0 %v1307, 112
      %v1309 = vpop.permute.xlu0 %1308
      %v1311 = vsel %vm1197, %v1304, 0
      %v1314 = vsel %vm1197, %v1309, 0
      %1316 = vmatpush.bf16.xpose.msra.mxu0 0
      %1317 = vmatpush.bf16.xpose.msra.mxu0 0
      %1318 = vmatpush.bf16.xpose.msra.mxu0 0
      %1319 = vmatpush.bf16.xpose.msra.mxu0 0
      %1320 = vmatpush.bf16.xpose.msra.mxu0 0
      %1321 = vmatpush.bf16.xpose.msra.mxu0 0
      %1322 = vmatpush.bf16.xpose.msra.mxu0 0
      %1323 = vmatpush.bf16.xpose.msra.mxu0 %v1314
      %1324 = vmatmul.bf16.gmra.mxu0 %v1311
      %v1325 = vpop.f32.mrf.mxu0
      %v1326 = vadd.f32 0.0, %v1325
      %v1327 = vpop.f32.mrf.mxu0
      %1328 = vdwg.mxu0
      %v1330 = vunpack.c.l.b16 %v1192
      %v1331 = vpack.c.b16 %v1330, %v1330
      %1332 = vrot.lane.b32.xlu0 %v1331, 112
      %v1333 = vpop.permute.xlu0 %1332
      %v1335 = vunpack.c.l.b16 %v1194
      %v1336 = vpack.c.b16 %v1335, %v1335
      %1337 = vrot.lane.b32.xlu0 %v1336, 112
      %v1338 = vpop.permute.xlu0 %1337
      %v1340 = vsel %vm1197, %v1333, 0
      %v1343 = vsel %vm1197, %v1338, 0
      %1345 = vmatpush.bf16.xpose.msra.mxu0 0
      %1346 = vmatpush.bf16.xpose.msra.mxu0 0
      %1347 = vmatpush.bf16.xpose.msra.mxu0 0
      %1348 = vmatpush.bf16.xpose.msra.mxu0 0
      %1349 = vmatpush.bf16.xpose.msra.mxu0 0
      %1350 = vmatpush.bf16.xpose.msra.mxu0 0
      %1351 = vmatpush.bf16.xpose.msra.mxu0 0
      %1352 = vmatpush.bf16.xpose.msra.mxu0 %v1343
      %1353 = vmatmul.bf16.gmra.mxu0 %v1340
      %v1354 = vpop.f32.mrf.mxu0
      %v1355 = vadd.f32 0.0, %v1354
      %v1356 = vpop.f32.mrf.mxu0
      %1357 = vdwg.mxu0
      %v1358 = vsel %vm1236, %v1326, -inf
      %1359 = vmax.xlane.f32.xlu0 %v1358
      %v1360 = vpop.xlane.xlu0 %1359
      %v1361 = vsel %vm1236, %v1355, -inf
      %1362 = vmax.xlane.f32.xlu0 %v1361
      %v1363 = vpop.xlane.xlu0 %1362
      %v1364 = vsub.f32 %v1326, %v1360
      %v1365 = vsub.f32 %v1355, %v1363
      %v1366 = vmul.f32 %v1364, 1.442695
      %v1367 = vpow.pop %v1366
      %v1368 = vmul.f32 %v1365, 1.442695
      %v1369 = vpow.pop %v1368
      %v1370 = vsel %vm1236, %v1367, 0.0
      %1371 = vadd.xlane.f32.xlu0 %v1370
      %v1372 = vpop.xlane.xlu0 %1371
      %v1373 = vsel %vm1236, %v1369, 0.0
      %1374 = vadd.xlane.f32.xlu0 %v1373
      %v1375 = vpop.xlane.xlu0 %1374
      %v1376 = vrcp.pop %v1372
      %v1377 = vrcp.pop %v1375
      %v1378 = vmul.f32 %v1367, %v1376
      %v1379 = vmul.f32 %v1369, %v1377
      %v1380 = vpack.c.bf16 %v1378, %v1378
      %v1381 = vpack.c.bf16 %v1379, %v1379
      %v1383 = vunpack.c.l.b16 %v1195
      %v1384 = vpack.c.b16 %v1383, %v1383
      %1385 = vrot.lane.b32.xlu0 %v1384, 112
      %v1386 = vpop.permute.xlu0 %1385
      %v1388 = vsel %vm1236, %v1380, 0
      %v1391 = vsel %vm1264, %v1386, 0
      %1393 = vmatpush.bf16.msra.mxu0 0
      %1394 = vmatpush.bf16.msra.mxu0 0
      %1395 = vmatpush.bf16.msra.mxu0 0
      %1396 = vmatpush.bf16.msra.mxu0 0
      %1397 = vmatpush.bf16.msra.mxu0 0
      %1398 = vmatpush.bf16.msra.mxu0 0
      %1399 = vmatpush.bf16.msra.mxu0 0
      %1400 = vmatpush.bf16.msra.mxu0 %v1391
      %1401 = vmatmul.bf16.gmra.mxu0 %v1388
      %v1402 = vpop.f32.mrf.mxu0
      %v1403 = vadd.f32 0.0, %v1402
      %v1404 = vpop.f32.mrf.mxu0
      %1405 = vdwg.mxu0
      %v1407 = vunpack.c.l.b16 %v1196
      %v1408 = vpack.c.b16 %v1407, %v1407
      %1409 = vrot.lane.b32.xlu0 %v1408, 112
      %v1410 = vpop.permute.xlu0 %1409
      %v1412 = vsel %vm1236, %v1381, 0
      %v1415 = vsel %vm1264, %v1410, 0
      %1417 = vmatpush.bf16.msra.mxu0 0
      %1418 = vmatpush.bf16.msra.mxu0 0
      %1419 = vmatpush.bf16.msra.mxu0 0
      %1420 = vmatpush.bf16.msra.mxu0 0
      %1421 = vmatpush.bf16.msra.mxu0 0
      %1422 = vmatpush.bf16.msra.mxu0 0
      %1423 = vmatpush.bf16.msra.mxu0 0
      %1424 = vmatpush.bf16.msra.mxu0 %v1415
      %1425 = vmatmul.bf16.gmra.mxu0 %v1412
      %v1426 = vpop.f32.mrf.mxu0
      %v1427 = vadd.f32 0.0, %v1426
      %v1428 = vpop.f32.mrf.mxu0
      %1429 = vdwg.mxu0
      %1430 = vrot.lane.b32.xlu0 %v1302, 96
      %v1431 = vpop.permute.xlu0 %1430
      %1432 = vrot.lane.b32.xlu0 %v1307, 96
      %v1433 = vpop.permute.xlu0 %1432
      %v1435 = vsel %vm1197, %v1431, 0
      %v1438 = vsel %vm1197, %v1433, 0
      %1440 = vmatpush.bf16.xpose.msra.mxu0 0
      %1441 = vmatpush.bf16.xpose.msra.mxu0 0
      %1442 = vmatpush.bf16.xpose.msra.mxu0 0
      %1443 = vmatpush.bf16.xpose.msra.mxu0 0
      %1444 = vmatpush.bf16.xpose.msra.mxu0 0
      %1445 = vmatpush.bf16.xpose.msra.mxu0 0
      %1446 = vmatpush.bf16.xpose.msra.mxu0 0
      %1447 = vmatpush.bf16.xpose.msra.mxu0 %v1438
      %1448 = vmatmul.bf16.gmra.mxu0 %v1435
      %v1449 = vpop.f32.mrf.mxu0
      %v1450 = vadd.f32 0.0, %v1449
      %v1451 = vpop.f32.mrf.mxu0
      %1452 = vdwg.mxu0
      %1453 = vrot.lane.b32.xlu0 %v1331, 96
      %v1454 = vpop.permute.xlu0 %1453
      %1455 = vrot.lane.b32.xlu0 %v1336, 96
      %v1456 = vpop.permute.xlu0 %1455
      %v1458 = vsel %vm1197, %v1454, 0
      %v1461 = vsel %vm1197, %v1456, 0
      %1463 = vmatpush.bf16.xpose.msra.mxu0 0
      %1464 = vmatpush.bf16.xpose.msra.mxu0 0
      %1465 = vmatpush.bf16.xpose.msra.mxu0 0
      %1466 = vmatpush.bf16.xpose.msra.mxu0 0
      %1467 = vmatpush.bf16.xpose.msra.mxu0 0
      %1468 = vmatpush.bf16.xpose.msra.mxu0 0
      %1469 = vmatpush.bf16.xpose.msra.mxu0 0
      %1470 = vmatpush.bf16.xpose.msra.mxu0 %v1461
      %1471 = vmatmul.bf16.gmra.mxu0 %v1458
      %v1472 = vpop.f32.mrf.mxu0
      %v1473 = vadd.f32 0.0, %v1472
      %v1474 = vpop.f32.mrf.mxu0
      %1475 = vdwg.mxu0
      %v1476 = vsel %vm1236, %v1450, -inf
      %1477 = vmax.xlane.f32.xlu0 %v1476
      %v1478 = vpop.xlane.xlu0 %1477
      %v1479 = vsel %vm1236, %v1473, -inf
      %1480 = vmax.xlane.f32.xlu0 %v1479
      %v1481 = vpop.xlane.xlu0 %1480
      %v1482 = vsub.f32 %v1450, %v1478
      %v1483 = vsub.f32 %v1473, %v1481
      %v1484 = vmul.f32 %v1482, 1.442695
      %v1485 = vpow.pop %v1484
      %v1486 = vmul.f32 %v1483, 1.442695
      %v1487 = vpow.pop %v1486
      %v1488 = vsel %vm1236, %v1485, 0.0
      %1489 = vadd.xlane.f32.xlu0 %v1488
      %v1490 = vpop.xlane.xlu0 %1489
      %v1491 = vsel %vm1236, %v1487, 0.0
      %1492 = vadd.xlane.f32.xlu0 %v1491
      %v1493 = vpop.xlane.xlu0 %1492
      %v1494 = vrcp.pop %v1490
      %v1495 = vrcp.pop %v1493
      %v1496 = vmul.f32 %v1485, %v1494
      %v1497 = vmul.f32 %v1487, %v1495
      %v1498 = vpack.c.bf16 %v1496, %v1496
      %v1499 = vpack.c.bf16 %v1497, %v1497
      %1500 = vrot.lane.b32.xlu0 %v1384, 96
      %v1501 = vpop.permute.xlu0 %1500
      %v1503 = vsel %vm1236, %v1498, 0
      %v1506 = vsel %vm1264, %v1501, 0
      %1508 = vmatpush.bf16.msra.mxu0 0
      %1509 = vmatpush.bf16.msra.mxu0 0
      %1510 = vmatpush.bf16.msra.mxu0 0
      %1511 = vmatpush.bf16.msra.mxu0 0
      %1512 = vmatpush.bf16.msra.mxu0 0
      %1513 = vmatpush.bf16.msra.mxu0 0
      %1514 = vmatpush.bf16.msra.mxu0 0
      %1515 = vmatpush.bf16.msra.mxu0 %v1506
      %1516 = vmatmul.bf16.gmra.mxu0 %v1503
      %v1517 = vpop.f32.mrf.mxu0
      %v1518 = vadd.f32 0.0, %v1517
      %v1519 = vpop.f32.mrf.mxu0
      %1520 = vdwg.mxu0
      %1521 = vrot.lane.b32.xlu0 %v1408, 96
      %v1522 = vpop.permute.xlu0 %1521
      %v1524 = vsel %vm1236, %v1499, 0
      %v1527 = vsel %vm1264, %v1522, 0
      %1529 = vmatpush.bf16.msra.mxu0 0
      %1530 = vmatpush.bf16.msra.mxu0 0
      %1531 = vmatpush.bf16.msra.mxu0 0
      %1532 = vmatpush.bf16.msra.mxu0 0
      %1533 = vmatpush.bf16.msra.mxu0 0
      %1534 = vmatpush.bf16.msra.mxu0 0
      %1535 = vmatpush.bf16.msra.mxu0 0
      %1536 = vmatpush.bf16.msra.mxu0 %v1527
      %1537 = vmatmul.bf16.gmra.mxu0 %v1524
      %v1538 = vpop.f32.mrf.mxu0
      %v1539 = vadd.f32 0.0, %v1538
      %v1540 = vpop.f32.mrf.mxu0
      %1541 = vdwg.mxu0
      %1542 = vrot.lane.b32.xlu0 %v1302, 80
      %v1543 = vpop.permute.xlu0 %1542
      %1544 = vrot.lane.b32.xlu0 %v1307, 80
      %v1545 = vpop.permute.xlu0 %1544
      %v1547 = vsel %vm1197, %v1543, 0
      %v1550 = vsel %vm1197, %v1545, 0
      %1552 = vmatpush.bf16.xpose.msra.mxu0 0
      %1553 = vmatpush.bf16.xpose.msra.mxu0 0
      %1554 = vmatpush.bf16.xpose.msra.mxu0 0
      %1555 = vmatpush.bf16.xpose.msra.mxu0 0
      %1556 = vmatpush.bf16.xpose.msra.mxu0 0
      %1557 = vmatpush.bf16.xpose.msra.mxu0 0
      %1558 = vmatpush.bf16.xpose.msra.mxu0 0
      %1559 = vmatpush.bf16.xpose.msra.mxu0 %v1550
      %1560 = vmatmul.bf16.gmra.mxu0 %v1547
      %v1561 = vpop.f32.mrf.mxu0
      %v1562 = vadd.f32 0.0, %v1561
      %v1563 = vpop.f32.mrf.mxu0
      %1564 = vdwg.mxu0
      %1565 = vrot.lane.b32.xlu0 %v1331, 80
      %v1566 = vpop.permute.xlu0 %1565
      %1567 = vrot.lane.b32.xlu0 %v1336, 80
      %v1568 = vpop.permute.xlu0 %1567
      %v1570 = vsel %vm1197, %v1566, 0
      %v1573 = vsel %vm1197, %v1568, 0
      %1575 = vmatpush.bf16.xpose.msra.mxu0 0
      %1576 = vmatpush.bf16.xpose.msra.mxu0 0
      %1577 = vmatpush.bf16.xpose.msra.mxu0 0
      %1578 = vmatpush.bf16.xpose.msra.mxu0 0
      %1579 = vmatpush.bf16.xpose.msra.mxu0 0
      %1580 = vmatpush.bf16.xpose.msra.mxu0 0
      %1581 = vmatpush.bf16.xpose.msra.mxu0 0
      %1582 = vmatpush.bf16.xpose.msra.mxu0 %v1573
      %1583 = vmatmul.bf16.gmra.mxu0 %v1570
      %v1584 = vpop.f32.mrf.mxu0
      %v1585 = vadd.f32 0.0, %v1584
      %v1586 = vpop.f32.mrf.mxu0
      %1587 = vdwg.mxu0
      %v1588 = vsel %vm1236, %v1562, -inf
      %1589 = vmax.xlane.f32.xlu0 %v1588
      %v1590 = vpop.xlane.xlu0 %1589
      %v1591 = vsel %vm1236, %v1585, -inf
      %1592 = vmax.xlane.f32.xlu0 %v1591
      %v1593 = vpop.xlane.xlu0 %1592
      %v1594 = vsub.f32 %v1562, %v1590
      %v1595 = vsub.f32 %v1585, %v1593
      %v1596 = vmul.f32 %v1594, 1.442695
      %v1597 = vpow.pop %v1596
      %v1598 = vmul.f32 %v1595, 1.442695
      %v1599 = vpow.pop %v1598
      %v1600 = vsel %vm1236, %v1597, 0.0
      %1601 = vadd.xlane.f32.xlu0 %v1600
      %v1602 = vpop.xlane.xlu0 %1601
      %v1603 = vsel %vm1236, %v1599, 0.0
      %1604 = vadd.xlane.f32.xlu0 %v1603
      %v1605 = vpop.xlane.xlu0 %1604
      %v1606 = vrcp.pop %v1602
      %v1607 = vrcp.pop %v1605
      %v1608 = vmul.f32 %v1597, %v1606
      %v1609 = vmul.f32 %v1599, %v1607
      %v1610 = vpack.c.bf16 %v1608, %v1608
      %v1611 = vpack.c.bf16 %v1609, %v1609
      %1612 = vrot.lane.b32.xlu0 %v1384, 80
      %v1613 = vpop.permute.xlu0 %1612
      %v1615 = vsel %vm1236, %v1610, 0
      %v1618 = vsel %vm1264, %v1613, 0
      %1620 = vmatpush.bf16.msra.mxu0 0
      %1621 = vmatpush.bf16.msra.mxu0 0
      %1622 = vmatpush.bf16.msra.mxu0 0
      %1623 = vmatpush.bf16.msra.mxu0 0
      %1624 = vmatpush.bf16.msra.mxu0 0
      %1625 = vmatpush.bf16.msra.mxu0 0
      %1626 = vmatpush.bf16.msra.mxu0 0
      %1627 = vmatpush.bf16.msra.mxu0 %v1618
      %1628 = vmatmul.bf16.gmra.mxu0 %v1615
      %v1629 = vpop.f32.mrf.mxu0
      %v1630 = vadd.f32 0.0, %v1629
      %v1631 = vpop.f32.mrf.mxu0
      %1632 = vdwg.mxu0
      %1633 = vrot.lane.b32.xlu0 %v1408, 80
      %v1634 = vpop.permute.xlu0 %1633
      %v1636 = vsel %vm1236, %v1611, 0
      %v1639 = vsel %vm1264, %v1634, 0
      %1641 = vmatpush.bf16.msra.mxu0 0
      %1642 = vmatpush.bf16.msra.mxu0 0
      %1643 = vmatpush.bf16.msra.mxu0 0
      %1644 = vmatpush.bf16.msra.mxu0 0
      %1645 = vmatpush.bf16.msra.mxu0 0
      %1646 = vmatpush.bf16.msra.mxu0 0
      %1647 = vmatpush.bf16.msra.mxu0 0
      %1648 = vmatpush.bf16.msra.mxu0 %v1639
      %1649 = vmatmul.bf16.gmra.mxu0 %v1636
      %v1650 = vpop.f32.mrf.mxu0
      %v1651 = vadd.f32 0.0, %v1650
      %v1652 = vpop.f32.mrf.mxu0
      %1653 = vdwg.mxu0
      %1656 = vrot.lane.b32.xlu0 %v1403, 16
      %v1657 = vpop.permute.xlu0 %1656
      %1658 = vrot.lane.b32.xlu0 %v1427, 16
      %v1659 = vpop.permute.xlu0 %1658
      %1664 = vrot.lane.b32.xlu0 %v1518, 32
      %v1665 = vpop.permute.xlu0 %1664
      %1666 = vrot.lane.b32.xlu0 %v1539, 32
      %v1667 = vpop.permute.xlu0 %1666
      %1672 = vrot.lane.b32.xlu0 %v1630, 48
      %v1673 = vpop.permute.xlu0 %1672
      %1674 = vrot.lane.b32.xlu0 %v1651, 48
      %v1675 = vpop.permute.xlu0 %1674
      %v1678 = vsel %vm1197, %v1278, %v1657
      %v1679 = vsel %vm1197, %v1297, %v1659
      %vm1680 = vcmask 261120
      %v1681 = vsel %vm1680, %v1678, %v1665
      %v1682 = vsel %vm1680, %v1679, %v1667
      %vm1683 = vcmask 392192
      %v1684 = vsel %vm1683, %v1681, %v1673
      %v1685 = vsel %vm1683, %v1682, %v1675
      %v1686 = vpack.c.bf16 %v1685, %v1684
      %v1687 = vld [vmem:[%s944] sm:$0xf]
      %v1688 = vld [vmem:[%s944 + $0x4] sm:$0xf]
      %v1689 = vld [vmem:[%s944 + $0x8] sm:$0xf]
      %v1690 = vld [vmem:[%s944 + $0xc] sm:$0xf]
      %v1691 = vld [vmem:[%s944 + $0x10] sm:$0xf]
      %v1692 = vld [vmem:[%s944 + $0x14] sm:$0xf]
      %v1693 = vld [vmem:[%s944 + $0x18] sm:$0xf]
      %v1694 = vld [vmem:[%s944 + $0x1c] sm:$0xf]
      %v1695 = vld [vmem:[%s947] sm:$0x1]
      %v1697 = vperm.slane %v1695, 0
      %v1707 = vunpack.c.l.b16 %v1687
      %v1708 = vunpack.c.l.b16 %v1688
      %v1709 = vunpack.c.l.b16 %v1689
      %v1710 = vunpack.c.l.b16 %v1690
      %v1711 = vunpack.c.l.b16 %v1691
      %v1712 = vunpack.c.l.b16 %v1692
      %v1713 = vunpack.c.l.b16 %v1693
      %v1714 = vunpack.c.l.b16 %v1694
      %v1715 = vpack.c.b16 %v1708, %v1707
      %v1716 = vpack.c.b16 %v1710, %v1709
      %v1717 = vpack.c.b16 %v1712, %v1711
      %v1718 = vpack.c.b16 %v1714, %v1713
      %v1724 = vsel %vm1073, %v1686, 0
      %1726 = vmatpush.bf16.msra.mxu0 0
      %1727 = vmatpush.bf16.msra.mxu0 0
      %1728 = vmatpush.bf16.msra.mxu0 0
      %1729 = vmatpush.bf16.msra.mxu0 0
      %1730 = vmatpush.bf16.msra.mxu0 %v1718
      %1731 = vmatpush.bf16.msra.mxu0 %v1717
      %1732 = vmatpush.bf16.msra.mxu0 %v1716
      %1733 = vmatpush.bf16.msra.mxu0 %v1715
      %1734 = vmatmul.bf16.gmra.mxu0 %v1724
      %v1735 = vpop.f32.mrf.mxu0
      %v1736 = vadd.f32 %v1697, %v1735
      %v1737 = vpop.f32.mrf.mxu0
      %v1738 = vadd.f32 %v1697, %v1737
      %1739 = vdwg.mxu0
      %v1740 = vadd.f32 %v1034, %v1736
      %v1741 = vadd.f32 %v1035, %v1738
      %v1742 = vsel %vm1073, %v1740, 0.0
      %1743 = vadd.xlane.f32.xlu0 %v1742
      %v1744 = vpop.xlane.xlu0 %1743
      %v1745 = vsel %vm1073, %v1741, 0.0
      %1746 = vadd.xlane.f32.xlu0 %v1745
      %v1747 = vpop.xlane.xlu0 %1746
      %v1748 = vrcp.pop 64.0
      %v1749 = vmul.f32 64.0, %v1748
      %v1750 = vsub.f32 1.0, %v1749
      %v1751 = vmul.f32 %v1748, %v1750
      %v1752 = vadd.f32 %v1748, %v1751
      %vm1753 = vweird.f32 %v1748
      %v1754 = vsel %vm1753, %v1748, %v1752
      %v1755 = vmul.f32 %v1744, %v1754
      %v1756 = vmul.f32 %v1747, %v1754
      %v1757 = vsub.f32 %v1740, %v1755
      %v1758 = vsub.f32 %v1741, %v1756
      %v1759 = vmul.f32 %v1757, %v1757
      %v1760 = vmul.f32 %v1758, %v1758
      %v1761 = vsel %vm1073, %v1759, 0.0
      %1762 = vadd.xlane.f32.xlu0 %v1761
      %v1763 = vpop.xlane.xlu0 %1762
      %v1764 = vsel %vm1073, %v1760, 0.0
      %1765 = vadd.xlane.f32.xlu0 %v1764
      %v1766 = vpop.xlane.xlu0 %1765
      %v1767 = vmul.f32 %v1763, %v1754
      %v1768 = vmul.f32 %v1766, %v1754
      %v1769 = vadd.f32 %v1767, 1e-05
      %v1770 = vadd.f32 %v1768, 1e-05
      %v1771 = vrsqrt.pop %v1769
      %v1772 = vmul.f32 %v1771, %v1769
      %v1773 = vmul.f32 %v1772, %v1771
      %v1774 = vmul.f32 0.5, %v1773
      %v1775 = vsub.f32 1.5, %v1774
      %v1776 = vmul.f32 %v1771, %v1775
      %vm1777 = vweird.f32 %v1769
      %vm1778 = vweird.f32 %v1771
      %vm1779 = vmor %vm1777, %vm1778
      %v1780 = vsel %vm1779, %v1771, %v1776
      %v1781 = vrsqrt.pop %v1770
      %v1782 = vmul.f32 %v1781, %v1770
      %v1783 = vmul.f32 %v1782, %v1781
      %v1784 = vmul.f32 0.5, %v1783
      %v1785 = vsub.f32 1.5, %v1784
      %v1786 = vmul.f32 %v1781, %v1785
      %vm1787 = vweird.f32 %v1770
      %vm1788 = vweird.f32 %v1781
      %vm1789 = vmor %vm1787, %vm1788
      %v1790 = vsel %vm1789, %v1781, %v1786
      %v1791 = vmul.f32 %v1757, %v1780
      %v1792 = vmul.f32 %v1758, %v1790
      %v1793 = vld [vmem:[%s950] sm:$0x1]
      %v1795 = vperm.slane %v1793, 0
      %v1797 = vmul.f32 %v1791, %v1795
      %v1798 = vmul.f32 %v1792, %v1795
      %v1799 = vld [vmem:[%s953] sm:$0x1]
      %v1801 = vperm.slane %v1799, 0
      %v1803 = vadd.f32 %v1797, %v1801
      %v1804 = vadd.f32 %v1798, %v1801
      %v1805 = vpack.c.bf16 %v1804, %v1803
      %v1806 = vld [vmem:[%s958] sm:$0xff]
      %v1807 = vld [vmem:[%s958 + $0x8] sm:$0xff]
      %v1808 = vld [vmem:[%s958 + $0x10] sm:$0xff]
      %v1809 = vld [vmem:[%s958 + $0x18] sm:$0xff]
      %v1810 = vld [vmem:[%s958 + $0x20] sm:$0xff]
      %v1811 = vld [vmem:[%s958 + $0x28] sm:$0xff]
      %v1812 = vld [vmem:[%s958 + $0x30] sm:$0xff]
      %v1813 = vld [vmem:[%s958 + $0x38] sm:$0xff]
      %v1814 = vld [vmem:[%s962] sm:$0x3]
      %v1816 = vperm.slane %v1814, 0
      %v1817 = vperm.slane %v1814, 1
      %v1828 = vunpack.c.l.b16 %v1806
      %v1829 = vunpack.c.h.b16 %v1806
      %v1830 = vunpack.c.l.b16 %v1807
      %v1831 = vunpack.c.h.b16 %v1807
      %v1832 = vunpack.c.l.b16 %v1808
      %v1833 = vunpack.c.h.b16 %v1808
      %v1834 = vunpack.c.l.b16 %v1809
      %v1835 = vunpack.c.h.b16 %v1809
      %v1836 = vunpack.c.l.b16 %v1810
      %v1837 = vunpack.c.h.b16 %v1810
      %v1838 = vunpack.c.l.b16 %v1811
      %v1839 = vunpack.c.h.b16 %v1811
      %v1840 = vunpack.c.l.b16 %v1812
      %v1841 = vunpack.c.h.b16 %v1812
      %v1842 = vunpack.c.l.b16 %v1813
      %v1843 = vunpack.c.h.b16 %v1813
      %v1844 = vpack.c.b16 %v1830, %v1828
      %v1845 = vpack.c.b16 %v1831, %v1829
      %v1846 = vpack.c.b16 %v1834, %v1832
      %v1847 = vpack.c.b16 %v1835, %v1833
      %v1848 = vpack.c.b16 %v1838, %v1836
      %v1849 = vpack.c.b16 %v1839, %v1837
      %v1850 = vpack.c.b16 %v1842, %v1840
      %v1851 = vpack.c.b16 %v1843, %v1841
      %v1861 = vsel %vm1073, %v1805, 0
      %1863 = vmatpush.bf16.msra.mxu0 0
      %1864 = vmatpush.bf16.msra.mxu0 0
      %1865 = vmatpush.bf16.msra.mxu0 0
      %1866 = vmatpush.bf16.msra.mxu0 0
      %1867 = vmatpush.bf16.msra.mxu0 %v1850
      %1868 = vmatpush.bf16.msra.mxu0 %v1848
      %1869 = vmatpush.bf16.msra.mxu0 %v1846
      %1870 = vmatpush.bf16.msra.mxu0 %v1844
      %1871 = vmatmul.bf16.gmra.mxu0 %v1861
      %v1872 = vpop.f32.mrf.mxu0
      %v1873 = vadd.f32 %v1816, %v1872
      %v1874 = vpop.f32.mrf.mxu0
      %v1875 = vadd.f32 %v1816, %v1874
      %1876 = vdwg.mxu0
      %1877 = vmatpush.bf16.msra.mxu0 0
      %1878 = vmatpush.bf16.msra.mxu0 0
      %1879 = vmatpush.bf16.msra.mxu0 0
      %1880 = vmatpush.bf16.msra.mxu0 0
      %1881 = vmatpush.bf16.msra.mxu0 %v1851
      %1882 = vmatpush.bf16.msra.mxu0 %v1849
      %1883 = vmatpush.bf16.msra.mxu0 %v1847
      %1884 = vmatpush.bf16.msra.mxu0 %v1845
      %1885 = vmatmul.bf16.gmra.mxu0 %v1861
      %v1886 = vpop.f32.mrf.mxu0
      %v1887 = vadd.f32 %v1817, %v1886
      %v1888 = vpop.f32.mrf.mxu0
      %v1889 = vadd.f32 %v1817, %v1888
      %1890 = vdwg.mxu0
      %v1891 = vmax.f32 %v1873, 0.0
      %v1892 = vmax.f32 %v1887, 0.0
      %v1893 = vmax.f32 %v1875, 0.0
      %v1894 = vmax.f32 %v1889, 0.0
      %v1895 = vpack.c.bf16 %v1893, %v1891
      %v1896 = vpack.c.bf16 %v1894, %v1892
      %v1897 = vld [vmem:[%s967] sm:$0xf]
      %v1898 = vld [vmem:[%s967 + $0x4] sm:$0xf]
      %v1899 = vld [vmem:[%s967 + $0x8] sm:$0xf]
      %v1900 = vld [vmem:[%s967 + $0xc] sm:$0xf]
      %v1901 = vld [vmem:[%s967 + $0x10] sm:$0xf]
      %v1902 = vld [vmem:[%s967 + $0x14] sm:$0xf]
      %v1903 = vld [vmem:[%s967 + $0x18] sm:$0xf]
      %v1904 = vld [vmem:[%s967 + $0x1c] sm:$0xf]
      %v1905 = vld [vmem:[%s967 + $0x20] sm:$0xf]
      %v1906 = vld [vmem:[%s967 + $0x24] sm:$0xf]
      %v1907 = vld [vmem:[%s967 + $0x28] sm:$0xf]
      %v1908 = vld [vmem:[%s967 + $0x2c] sm:$0xf]
      %v1909 = vld [vmem:[%s967 + $0x30] sm:$0xf]
      %v1910 = vld [vmem:[%s967 + $0x34] sm:$0xf]
      %v1911 = vld [vmem:[%s967 + $0x38] sm:$0xf]
      %v1912 = vld [vmem:[%s967 + $0x3c] sm:$0xf]
      %v1913 = vld [vmem:[%s967 + $0x40] sm:$0xf]
      %v1914 = vld [vmem:[%s967 + $0x44] sm:$0xf]
      %v1915 = vld [vmem:[%s967 + $0x48] sm:$0xf]
      %v1916 = vld [vmem:[%s967 + $0x4c] sm:$0xf]
      %v1917 = vld [vmem:[%s967 + $0x50] sm:$0xf]
      %v1918 = vld [vmem:[%s967 + $0x54] sm:$0xf]
      %v1919 = vld [vmem:[%s967 + $0x58] sm:$0xf]
      %v1920 = vld [vmem:[%s967 + $0x5c] sm:$0xf]
      %v1921 = vld [vmem:[%s967 + $0x60] sm:$0xf]
      %v1922 = vld [vmem:[%s967 + $0x64] sm:$0xf]
      %v1923 = vld [vmem:[%s967 + $0x68] sm:$0xf]
      %v1924 = vld [vmem:[%s967 + $0x6c] sm:$0xf]
      %v1925 = vld [vmem:[%s967 + $0x70] sm:$0xf]
      %v1926 = vld [vmem:[%s967 + $0x74] sm:$0xf]
      %v1927 = vld [vmem:[%s967 + $0x78] sm:$0xf]
      %v1928 = vld [vmem:[%s967 + $0x7c] sm:$0xf]
      %v1929 = vld [vmem:[%s970] sm:$0x1]
      %v1931 = vperm.slane %v1929, 0
      %v1965 = vunpack.c.l.b16 %v1897
      %v1966 = vunpack.c.l.b16 %v1898
      %v1967 = vunpack.c.l.b16 %v1899
      %v1968 = vunpack.c.l.b16 %v1900
      %v1969 = vunpack.c.l.b16 %v1901
      %v1970 = vunpack.c.l.b16 %v1902
      %v1971 = vunpack.c.l.b16 %v1903
      %v1972 = vunpack.c.l.b16 %v1904
      %v1973 = vunpack.c.l.b16 %v1905
      %v1974 = vunpack.c.l.b16 %v1906
      %v1975 = vunpack.c.l.b16 %v1907
      %v1976 = vunpack.c.l.b16 %v1908
      %v1977 = vunpack.c.l.b16 %v1909
      %v1978 = vunpack.c.l.b16 %v1910
      %v1979 = vunpack.c.l.b16 %v1911
      %v1980 = vunpack.c.l.b16 %v1912
      %v1981 = vunpack.c.l.b16 %v1913
      %v1982 = vunpack.c.l.b16 %v1914
      %v1983 = vunpack.c.l.b16 %v1915
      %v1984 = vunpack.c.l.b16 %v1916
      %v1985 = vunpack.c.l.b16 %v1917
      %v1986 = vunpack.c.l.b16 %v1918
      %v1987 = vunpack.c.l.b16 %v1919
      %v1988 = vunpack.c.l.b16 %v1920
      %v1989 = vunpack.c.l.b16 %v1921
      %v1990 = vunpack.c.l.b16 %v1922
      %v1991 = vunpack.c.l.b16 %v1923
      %v1992 = vunpack.c.l.b16 %v1924
      %v1993 = vunpack.c.l.b16 %v1925
      %v1994 = vunpack.c.l.b16 %v1926
      %v1995 = vunpack.c.l.b16 %v1927
      %v1996 = vunpack.c.l.b16 %v1928
      %v1997 = vpack.c.b16 %v1966, %v1965
      %v1998 = vpack.c.b16 %v1968, %v1967
      %v1999 = vpack.c.b16 %v1970, %v1969
      %v2000 = vpack.c.b16 %v1972, %v1971
      %v2001 = vpack.c.b16 %v1974, %v1973
      %v2002 = vpack.c.b16 %v1976, %v1975
      %v2003 = vpack.c.b16 %v1978, %v1977
      %v2004 = vpack.c.b16 %v1980, %v1979
      %v2005 = vpack.c.b16 %v1982, %v1981
      %v2006 = vpack.c.b16 %v1984, %v1983
      %v2007 = vpack.c.b16 %v1986, %v1985
      %v2008 = vpack.c.b16 %v1988, %v1987
      %v2009 = vpack.c.b16 %v1990, %v1989
      %v2010 = vpack.c.b16 %v1992, %v1991
      %v2011 = vpack.c.b16 %v1994, %v1993
      %v2012 = vpack.c.b16 %v1996, %v1995
      %2029 = vmatpush.bf16.msra.mxu0 %v2004
      %2030 = vmatpush.bf16.msra.mxu0 %v2003
      %2031 = vmatpush.bf16.msra.mxu0 %v2002
      %2032 = vmatpush.bf16.msra.mxu0 %v2001
      %2033 = vmatpush.bf16.msra.mxu0 %v2000
      %2034 = vmatpush.bf16.msra.mxu0 %v1999
      %2035 = vmatpush.bf16.msra.mxu0 %v1998
      %2036 = vmatpush.bf16.msra.mxu0 %v1997
      %2037 = vmatmul.bf16.gmra.mxu0 %v1895
      %v2038 = vpop.f32.mrf.mxu0
      %v2039 = vadd.f32 %v1931, %v2038
      %v2040 = vpop.f32.mrf.mxu0
      %v2041 = vadd.f32 %v1931, %v2040
      %2042 = vdwg.mxu0
      %2043 = vmatpush.bf16.msra.mxu0 %v2012
      %2044 = vmatpush.bf16.msra.mxu0 %v2011
      %2045 = vmatpush.bf16.msra.mxu0 %v2010
      %2046 = vmatpush.bf16.msra.mxu0 %v2009
      %2047 = vmatpush.bf16.msra.mxu0 %v2008
      %2048 = vmatpush.bf16.msra.mxu0 %v2007
      %2049 = vmatpush.bf16.msra.mxu0 %v2006
      %2050 = vmatpush.bf16.msra.mxu0 %v2005
      %2051 = vmatmul.bf16.gmra.mxu0 %v1896
      %v2052 = vpop.f32.mrf.mxu0
      %v2053 = vadd.f32 %v2039, %v2052
      %v2054 = vpop.f32.mrf.mxu0
      %v2055 = vadd.f32 %v2041, %v2054
      %2056 = vdwg.mxu0
      %v2057 = vadd.f32 %v1803, %v2053
      %v2058 = vadd.f32 %v1804, %v2055
      %v2059 = vsel %vm1073, %v2057, 0.0
      %2060 = vadd.xlane.f32.xlu0 %v2059
      %v2061 = vpop.xlane.xlu0 %2060
      %v2062 = vsel %vm1073, %v2058, 0.0
      %2063 = vadd.xlane.f32.xlu0 %v2062
      %v2064 = vpop.xlane.xlu0 %2063
      %v2065 = vmul.f32 %v2061, %v1754
      %v2066 = vmul.f32 %v2064, %v1754
      %v2067 = vsub.f32 %v2057, %v2065
      %v2068 = vsub.f32 %v2058, %v2066
      %v2069 = vmul.f32 %v2067, %v2067
      %v2070 = vmul.f32 %v2068, %v2068
      %v2071 = vsel %vm1073, %v2069, 0.0
      %2072 = vadd.xlane.f32.xlu0 %v2071
      %v2073 = vpop.xlane.xlu0 %2072
      %v2074 = vsel %vm1073, %v2070, 0.0
      %2075 = vadd.xlane.f32.xlu0 %v2074
      %v2076 = vpop.xlane.xlu0 %2075
      %v2077 = vmul.f32 %v2073, %v1754
      %v2078 = vmul.f32 %v2076, %v1754
      %v2079 = vadd.f32 %v2077, 1e-05
      %v2080 = vadd.f32 %v2078, 1e-05
      %v2081 = vrsqrt.pop %v2079
      %v2082 = vmul.f32 %v2081, %v2079
      %v2083 = vmul.f32 %v2082, %v2081
      %v2084 = vmul.f32 0.5, %v2083
      %v2085 = vsub.f32 1.5, %v2084
      %v2086 = vmul.f32 %v2081, %v2085
      %vm2087 = vweird.f32 %v2079
      %vm2088 = vweird.f32 %v2081
      %vm2089 = vmor %vm2087, %vm2088
      %v2090 = vsel %vm2089, %v2081, %v2086
      %v2091 = vrsqrt.pop %v2080
      %v2092 = vmul.f32 %v2091, %v2080
      %v2093 = vmul.f32 %v2092, %v2091
      %v2094 = vmul.f32 0.5, %v2093
      %v2095 = vsub.f32 1.5, %v2094
      %v2096 = vmul.f32 %v2091, %v2095
      %vm2097 = vweird.f32 %v2080
      %vm2098 = vweird.f32 %v2091
      %vm2099 = vmor %vm2097, %vm2098
      %v2100 = vsel %vm2099, %v2091, %v2096
      %v2101 = vmul.f32 %v2067, %v2090
      %v2102 = vmul.f32 %v2068, %v2100
      %v2103 = vld [vmem:[%s973] sm:$0x1]
      %v2105 = vperm.slane %v2103, 0
      %v2107 = vmul.f32 %v2101, %v2105
      %v2108 = vmul.f32 %v2102, %v2105
      %v2109 = vld [vmem:[%s976] sm:$0x1]
      %v2111 = vperm.slane %v2109, 0
      %v2113 = vadd.f32 %v2107, %v2111
      %v2114 = vadd.f32 %v2108, %v2111
      %2115 = vst.msk [vmem:[#allocation2] sm:$0xff] %vm1073, %v2113
      %2116 = vst.msk [vmem:[#allocation2 + $0x8] sm:$0xff] %vm1073, %v2114
      %p2117 = scmp.eq.s32.totalorder %s40, 1
      // Predicated region
      $region113: #{forward.7} parent=107 // pred_check
        %p2118 = pneg %p2117
      $region114: #{forward.7} parent=107 // pred_check_branch
        %2120 = sbr.rel (%p2118) target = $region116
      $region115: #{forward.7} parent=107 // pred_region
        %v2121 = vpack.c.bf16 %v2114, %v2113
        %v2122 = vld [vmem:[%s20] sm:$0xf]
        %v2123 = vld [vmem:[%s20 + $0x4] sm:$0xf]
        %v2124 = vld [vmem:[%s20 + $0x8] sm:$0xf]
        %v2125 = vld [vmem:[%s20 + $0xc] sm:$0xf]
        %v2126 = vld [vmem:[%s20 + $0x10] sm:$0xf]
        %v2127 = vld [vmem:[%s20 + $0x14] sm:$0xf]
        %v2128 = vld [vmem:[%s20 + $0x18] sm:$0xf]
        %v2129 = vld [vmem:[%s20 + $0x1c] sm:$0xf]
        %v2130 = vld [vmem:[#allocation3] sm:$0x1]
        %v2132 = vperm.slane %v2130, 0
        %v2142 = vunpack.c.l.b16 %v2122
        %v2143 = vunpack.c.l.b16 %v2123
        %v2144 = vunpack.c.l.b16 %v2124
        %v2145 = vunpack.c.l.b16 %v2125
        %v2146 = vunpack.c.l.b16 %v2126
        %v2147 = vunpack.c.l.b16 %v2127
        %v2148 = vunpack.c.l.b16 %v2128
        %v2149 = vunpack.c.l.b16 %v2129
        %v2150 = vpack.c.b16 %v2143, %v2142
        %v2151 = vpack.c.b16 %v2145, %v2144
        %v2152 = vpack.c.b16 %v2147, %v2146
        %v2153 = vpack.c.b16 %v2149, %v2148
        %v2159 = vsel %vm1073, %v2121, 0
        %2161 = vmatpush.bf16.msra.mxu0 0
        %2162 = vmatpush.bf16.msra.mxu0 0
        %2163 = vmatpush.bf16.msra.mxu0 0
        %2164 = vmatpush.bf16.msra.mxu0 0
        %2165 = vmatpush.bf16.msra.mxu0 %v2153
        %2166 = vmatpush.bf16.msra.mxu0 %v2152
        %2167 = vmatpush.bf16.msra.mxu0 %v2151
        %2168 = vmatpush.bf16.msra.mxu0 %v2150
        %2169 = vmatmul.bf16.gmra.mxu0 %v2159
        %v2170 = vpop.f32.mrf.mxu0
        %v2171 = vadd.f32 %v2132, %v2170
        %v2172 = vpop.f32.mrf.mxu0
        %v2173 = vadd.f32 %v2132, %v2172
        %2174 = vdwg.mxu0
        %vm2175 = vcmask 7168
        %2176 = vst.msk [vmem:[%s981] sm:$0xff] %vm2175, %v2171
        %2177 = vst.msk [vmem:[%s981 + $0x8] sm:$0xff] %vm2175, %v2173
      $region116: #{forward.7} parent=107 // pred_fallthru
        _
      %s2178 = smul.u32 2, %s39
      %p2179 = scmp.lt.s32.totalorder %s2178, 1
      %s2180 = scalar_select %p2179, %s2178, 1
      %s2181 = smul.addr %s2180, 8
      %s2182 = scalar_lea.vmem %s22, %s2181
      // Predicated region
      $region117: #{forward.7} parent=107 // pred_check
        %p2183 = pneg %p617
      $region118: #{forward.7} parent=107 // pred_check_branch
        %2185 = sbr.rel (%p2183) target = $region120
      $region119: #{forward.7} parent=107 // pred_region
        %s2186 = smul.u32 2, %s39
      $region120: #{forward.7} parent=107 // pred_fallthru
        _
      // Predicated region
      $region121: #{forward.7} parent=107 // pred_check
        %p2187 = pneg %p617
      $region122: #{forward.7} parent=107 // pred_check_branch
        %2189 = sbr.rel (%p2187) target = $region124
      $region123: #{forward.7} parent=107 // pred_region
        %s2190 = smul.u32 2, %s39
        %p2191 = scmp.lt.s32.totalorder %s2190, 1
        %s2192 = scalar_select %p2191, %s2190, 1
        %s2193 = smul.addr %s2192, 8
        %s2194 = scalar_lea.vmem %s22, %s2193
      $region124: #{forward.7} parent=107 // pred_fallthru
        _
    $region108: #{forward.7} parent=5 // pred_fallthru
      _
    %p2195 = scmp.le.s32.totalorder 2, %s30
    // Predicated region
    $region125: #{forward.7} parent=5 // pred_check
      %p2196 = pneg %p2195
    $region126: #{forward.7} parent=5 // pred_check_branch
      %2198 = sbr.rel (%p2196) target = $region128
    $region127: #{forward.7} parent=5 // pred_region
      %s2199 = ssub.s32 %s30, 2
    $region128: #{forward.7} parent=5 // pred_fallthru
      _
  $region6: #{forward.7} parent=0 // loop_footer
    %s34 = sadd.s32 1, %s30
  $region7: #{forward.7} parent=0 // loop_footer_branch
    %29 = sbr.rel target = $region3
  $region8: #{forward.7} parent=0 // loop_exit
    _

</llo_original>
